<compile_context>
chip_gen: v7x
topology: tpu7x:2x2x1
jax: 0.10.0
libtpu: 0.0.40
codegen_flags: <defaults>
</compile_context>

<pallas_src>
import functools
import math

import jax
import jax.numpy as jnp
from jax.experimental import pallas as pl
from jax.experimental.pallas import tpu as pltpu


def _round_up(x, m):
    return (x + m - 1) // m * m


def _layernorm(x, w, b, eps=1e-5):
    mu = jnp.mean(x, axis=-1, keepdims=True)
    var = jnp.mean(jnp.square(x - mu), axis=-1, keepdims=True)
    return (x - mu) * jax.lax.rsqrt(var + eps) * w + b


def _mm(a, b):
    # bf16 MXU operands, f32 accumulation.
    return jnp.dot(a.astype(jnp.bfloat16), b.astype(jnp.bfloat16),
                   preferred_element_type=jnp.float32)


# --------------------------------------------------------------------------------------
# Fused kernel: one grid step = one encoder layer of one batch tile.
#   step (bt, 0)      : also runs embed + cls/pos init into the VMEM activation scratch
#   step (bt, NL-1)   : also runs the classifier head and writes the output block
# --------------------------------------------------------------------------------------
def vit_kernel(x_ref,
               eln1w, eln1b, ew, eb, eln2w, eln2b,
               cls_ref, pos_ref,
               wqkv_r, bqkv_r, wo_r, bo_r, ln1w_r, ln1b_r,
               w1_r, b1_r, w2_r, b2_r, ln2w_r, ln2b_r,
               cw, cb,
               o_ref,
               act_ref, q_s, k_s, v_s,
               *, num_heads, n_patch, seq_len):
    # NOTE: the layer axis (grid axis 1) MUST remain innermost and "arbitrary":
    # the activation scratch is initialized only at layer == 0 and is carried
    # across the layer steps of the same batch tile.
    layer = pl.program_id(1)
    num_layers = pl.num_programs(1)
    BT, Lp, D = act_ref.shape
    H = num_heads
    hd = D // H
    N = n_patch                       # number of patch tokens
    L = seq_len                       # real sequence length (N + 1) <= Lp
    scale = 1.0 / math.sqrt(hd)
    act_dt = act_ref.dtype

    # ---------------- layer 0: embed (LN -> Linear -> LN) + cls + pos ----------------
    @pl.when(layer == 0)
    def _():
        # Rows [N:] of the padded sequence: row N is the cls token (appended LAST,
        # matching torch.concat([x, cls], dim=1)); rows > N are padding (masked in
        # attention and sliced off by the wrapper).  Hoisted out of the batch loop.
        tail = (jnp.broadcast_to(cls_ref[...], (Lp - N, D))
                + pos_ref[N:, :]).astype(act_dt)

        @pl.loop(0, BT)
        def _(b):
            xe = x_ref[b].astype(jnp.float32)                      # (N, V)
            h = _layernorm(xe, eln1w[...], eln1b[...])
            h = _mm(h, ew[...]) + eb[...]
            h = _layernorm(h, eln2w[...], eln2b[...])              # (N, D)
            act_ref[b, :N, :] = (h + pos_ref[:N, :]).astype(act_dt)
            act_ref[b, N:, :] = tail

    # ---------------- one post-norm TransformerEncoderLayer (MHA + ReLU FFN) ---------
    # TODO(synk): dropout inside the encoder layer / classifier is identity (eval mode).
    @pl.loop(0, BT)
    def _(b):
        x2 = act_ref[b].astype(jnp.float32)                        # (Lp, D)

        # --- QKV projections (full-width MXU), then head-major split into scratch ---
        q2 = (_mm(x2, wqkv_r[0, 0]) + bqkv_r[0, 0]) * scale        # (Lp, D)
        k2 = _mm(x2, wqkv_r[0, 1]) + bqkv_r[0, 1]
        v2 = _mm(x2, wqkv_r[0, 2]) + bqkv_r[0, 2]
        for h_i in range(H):          # slice + store only; nothing stays live per head
            sl = slice(h_i * hd, (h_i + 1) * hd)
            q_s[h_i] = q2[:, sl].astype(jnp.bfloat16)
            k_s[h_i] = k2[:, sl].astype(jnp.bfloat16)
            v_s[h_i] = v2[:, sl].astype(jnp.bfloat16)

        # --- head-batched attention: single MXU stream over all heads ---------------
        s = jnp.einsum('hld,hmd->hlm', q_s[...], k_s[...],
                       preferred_element_type=jnp.float32)         # (H, Lp, Lp)
        if Lp > L:  # mask padded key positions (static condition)
            key_idx = jax.lax.broadcasted_iota(jnp.int32, (H, Lp, Lp), 2)
            s = jnp.where(key_idx >= L, -1e30, s)
        s = s - jnp.max(s, axis=-1, keepdims=True)
        e = jnp.exp(s)
        p = e / jnp.sum(e, axis=-1, keepdims=True)                 # exact (parity)
        ctx = jnp.einsum('hlm,hmd->hld', p.astype(jnp.bfloat16), v_s[...],
                         preferred_element_type=jnp.float32)       # (H, Lp, hd)

        # --- output projection without a concat: batched matmul + sum over heads ----
        attn = jnp.einsum('hld,hde->hle', ctx.astype(jnp.bfloat16), wo_r[0],
                          preferred_element_type=jnp.float32)      # (H, Lp, D)
        attn = jnp.sum(attn, axis=0) + bo_r[0]                     # (Lp, D)

        x2 = _layernorm(x2 + attn, ln1w_r[0], ln1b_r[0])
        hff = jnp.maximum(_mm(x2, w1_r[0]) + b1_r[0], 0.0)
        ff = _mm(hff, w2_r[0]) + b2_r[0]
        x2 = _layernorm(x2 + ff, ln2w_r[0], ln2b_r[0])
        act_ref[b] = x2.astype(act_dt)

        # ------------- last layer: classifier head Linear -> Sigmoid (all tokens) ---
        @pl.when(layer == num_layers - 1)
        def _():
            y = _mm(x2, cw[...]) + cb[...]                         # (Lp, Cp)
            o_ref[b] = (1.0 / (1.0 + jnp.exp(-y))).astype(o_ref.dtype)  # exact sigmoid


# --------------------------------------------------------------------------------------
# Wrapper: single pallas_call for the whole forward, per-chip VMEM budgeting.
# --------------------------------------------------------------------------------------
def _vmem_limit_bytes():
    cap = 128 * 1024 * 1024
    try:
        info = pltpu.get_tpu_info()
        cap = int(getattr(info, "vmem_capacity_bytes", cap)) or cap
    except Exception:
        pass
    # Headroom for Mosaic internal scratch: ~54 MiB on v7x (64 MiB physical),
    # ~100 MiB on the 128-MiB parts (v5e / v6e).
    return min(int(cap * 0.85), 100 * 1024 * 1024)


def _pick_batch_tile(B, N, V, Lp, D, FF, Cp, H,
                     layer_param_bytes, const_param_bytes, vmem_limit):
    budget = int(vmem_limit * 0.8)
    hd = D // H
    fixed = 2 * layer_param_bytes + 2 * const_param_bytes      # double-buffered streams
    fixed += 3 * H * Lp * hd * 2                               # q/k/v head-major scratch
    # per-batch-element in-kernel f32 temporaries, rough upper bound:
    fixed += 4 * (2 * H * Lp * Lp + 2 * H * Lp * D + 2 * Lp * FF + 6 * Lp * D)
    per_bt = Lp * D * 2                                        # resident activation (bf16)
    per_bt += 2 * N * V * 2                                    # x block (bf16, 2 buffers)
    per_bt += 2 * Lp * Cp * 4                                  # output block (f32, 2 buffers)
    avail = max(budget - fixed, per_bt)
    bt_cap = max(1, avail // per_bt)
    bt = 1
    for cand in range(1, B + 1):
        if B % cand == 0 and cand <= bt_cap:
            bt = cand
    return int(bt)


def vit_forward(x, params, *, num_heads, batch_tile=None):
    B, N, V = x.shape
    D = params["ew"].shape[1]
    C = params["cw"].shape[1]
    NL = params["wqkv"].shape[0]
    FF = params["w1"].shape[2]
    assert D % num_heads == 0
    H = num_heads
    hd = D // H
    L = N + 1
    Lp = _round_up(L, 8)          # sublane-friendly padded sequence length
    Cp = _round_up(C, 128)        # lane-dense classifier / output width

    vmem_limit = _vmem_limit_bytes()

    # padded positional encoding / classifier (padding sliced off after the call)
    pos_p = jnp.zeros((Lp, D), params["pos"].dtype).at[:L].set(params["pos"])
    cw_p = jnp.zeros((D, Cp), params["cw"].dtype).at[:, :C].set(params["cw"])
    cb_p = jnp.zeros((1, Cp), params["cb"].dtype).at[:, :C].set(params["cb"])
    # head-major output-projection weight: (NL, D, D) -> (NL, H, hd, D)
    wo_p = params["wo"].reshape(NL, H, hd, D)
    x_in = x.astype(jnp.bfloat16)           # only read at layer 0; halve its residency

    emb_names = ("eln1w", "eln1b", "ew", "eb", "eln2w", "eln2b")
    lyr_names = ("wqkv", "bqkv", "wo", "bo", "ln1w", "ln1b",
                 "w1", "b1", "w2", "b2", "ln2w", "ln2b")
    layer_arrays = {k: params[k] for k in lyr_names}
    layer_arrays["wo"] = wo_p

    def nbytes(a):
        return a.size * a.dtype.itemsize

    const_arrays = ([params[k] for k in emb_names]
                    + [params["cls"], pos_p, cw_p, cb_p])
    const_param_bytes = sum(nbytes(a) for a in const_arrays)
    layer_param_bytes = sum(nbytes(layer_arrays[k]) // NL for k in lyr_names)

    if batch_tile is None:
        BT = _pick_batch_tile(B, N, V, Lp, D, FF, Cp, H,
                              layer_param_bytes, const_param_bytes, vmem_limit)
    else:
        BT = int(batch_tile)
    assert B % BT == 0

    def const_spec(a):
        nd = a.ndim
        return pl.BlockSpec(a.shape, lambda bt, l, _nd=nd: (0,) * _nd)

    def layer_spec(a):
        nd = a.ndim
        return pl.BlockSpec((1,) + a.shape[1:],
                            lambda bt, l, _nd=nd: (l,) + (0,) * (_nd - 1))

    in_specs = (
        [pl.BlockSpec((BT, N, V), lambda bt, l: (bt, 0, 0))]
        + [const_spec(params[k]) for k in emb_names]
        + [const_spec(params["cls"]), const_spec(pos_p)]
        + [layer_spec(layer_arrays[k]) for k in lyr_names]
        + [const_spec(cw_p), const_spec(cb_p)]
    )

    kern = functools.partial(vit_kernel, num_heads=H, n_patch=N, seq_len=L)
    out = pl.pallas_call(
        kern,
        out_shape=jax.ShapeDtypeStruct((B, Lp, Cp), jnp.float32),
        grid=(B // BT, NL),
        in_specs=in_specs,
        out_specs=pl.BlockSpec((BT, Lp, Cp), lambda bt, l: (bt, 0, 0)),
        scratch_shapes=[
            pltpu.VMEM((BT, Lp, D), jnp.bfloat16),   # resident activations (bf16)
            pltpu.VMEM((H, Lp, hd), jnp.bfloat16),   # q, head-major
            pltpu.VMEM((H, Lp, hd), jnp.bfloat16),   # k
            pltpu.VMEM((H, Lp, hd), jnp.bfloat16),   # v
        ],
        compiler_params=pltpu.CompilerParams(
            dimension_semantics=("parallel", "arbitrary"),
            vmem_limit_bytes=vmem_limit),
    )(x_in,
      *(params[k] for k in emb_names),
      params["cls"], pos_p,
      *(layer_arrays[k] for k in lyr_names),
      cw_p, cb_p)

    return out[:, :L, :C]   # strip sequence / class padding


# --------------------------------------------------------------------------------------
# Deterministic parameter init (layer weights stacked along a leading layer axis).
# Matmul weights stored bf16 (MXU operands); biases / LayerNorm params in f32.
# --------------------------------------------------------------------------------------
def init_params(key, veclen, dim, ff_dim, num_layers, num_class, n_patch):
    w_dt = jnp.bfloat16

    def linear(k, fan_in, fan_out):
        kw, kb = jax.random.split(k)
        bound = 1.0 / (fan_in ** 0.5)
        w = jax.random.uniform(kw, (fan_in, fan_out), jnp.float32, -bound, bound).astype(w_dt)
        b = jax.random.uniform(kb, (1, fan_out), jnp.float32, -bound, bound)
        return w, b

    keys = jax.random.split(key, 5 + num_layers)
    ew, eb = linear(keys[0], veclen, dim)
    cw, cb = linear(keys[1], dim, num_class)

    p = {
        "eln1w": jnp.ones((1, veclen), jnp.float32),
        "eln1b": jnp.zeros((1, veclen), jnp.float32),
        "ew": ew, "eb": eb,
        "eln2w": jnp.ones((1, dim), jnp.float32),
        "eln2b": jnp.zeros((1, dim), jnp.float32),
        "cls": jax.random.uniform(keys[2], (1, dim), jnp.float32),             # torch.rand
        "pos": jax.random.uniform(keys[3], (n_patch + 1, dim), jnp.float32),   # torch.rand
        "cw": cw, "cb": cb,
    }

    def one_layer(k):
        ks = jax.random.split(k, 6)
        wq, bq = linear(ks[0], dim, dim)
        wk, bk = linear(ks[1], dim, dim)
        wv, bv = linear(ks[2], dim, dim)
        wo, bo = linear(ks[3], dim, dim)
        w1, b1 = linear(ks[4], dim, ff_dim)
        w2, b2 = linear(ks[5], ff_dim, dim)
        return dict(wqkv=jnp.stack([wq, wk, wv], 0),     # (3, D, D)
                    bqkv=jnp.stack([bq, bk, bv], 0),     # (3, 1, D)
                    wo=wo, bo=bo,
                    ln1w=jnp.ones((1, dim), jnp.float32),
                    ln1b=jnp.zeros((1, dim), jnp.float32),
                    w1=w1, b1=b1, w2=w2, b2=b2,
                    ln2w=jnp.ones((1, dim), jnp.float32),
                    ln2b=jnp.zeros((1, dim), jnp.float32))

    layers = [one_layer(k) for k in keys[5:5 + num_layers]]
    for name in layers[0]:
        p[name] = jnp.stack([lp[name] for lp in layers], axis=0)
    return p


if __name__ == "__main__":
    # small-but-consistent hyperparameters (module defaults scaled down)
    PIC_W = PIC_H = 16
    PATCH = 8
    CHANNEL = 3
    VECLEN = PATCH * PATCH * CHANNEL                    # 192
    N_PATCH = (PIC_H // PATCH) * (PIC_W // PATCH)       # 4
    DIM = 32
    HEADS = 4                                           # (module uses 12 @ dim=768)
    FF_DIM = 64
    NUM_LAYERS = 2                                      # (module uses 6)
    NUM_CLASS = 16
    BATCH = 2

    key = jax.random.PRNGKey(0)
    kx, kp = jax.random.split(key)
    x = jax.random.normal(kx, (BATCH, N_PATCH, VECLEN), jnp.float32)
    params = init_params(kp, VECLEN, DIM, FF_DIM, NUM_LAYERS, NUM_CLASS, N_PATCH)

    fwd = jax.jit(functools.partial(vit_forward, num_heads=HEADS))
    out = fwd(x, params)
    jax.block_until_ready(out)
    assert out.shape == (BATCH, N_PATCH + 1, NUM_CLASS), out.shape
    assert bool(jnp.all(jnp.isfinite(out)))
    print("KERNEL_OK")
</pallas_src>

<mosaic_0001>
module attributes {stable_mosaic.version = 11 : i64} {
  func.func @vit_kernel(%arg0: i32, %arg1: i32, %arg2: memref<2x4x192xbf16, #tpu.memory_space<vmem>>, %arg3: memref<1x192xf32, #tpu.memory_space<vmem>>, %arg4: memref<1x192xf32, #tpu.memory_space<vmem>>, %arg5: memref<192x32xbf16, #tpu.memory_space<vmem>>, %arg6: memref<1x32xf32, #tpu.memory_space<vmem>>, %arg7: memref<1x32xf32, #tpu.memory_space<vmem>>, %arg8: memref<1x32xf32, #tpu.memory_space<vmem>>, %arg9: memref<1x32xf32, #tpu.memory_space<vmem>>, %arg10: memref<8x32xf32, #tpu.memory_space<vmem>>, %arg11: memref<1x3x32x32xbf16, #tpu.memory_space<vmem>>, %arg12: memref<1x3x1x32xf32, #tpu.memory_space<vmem>>, %arg13: memref<1x4x8x32xbf16, #tpu.memory_space<vmem>>, %arg14: memref<1x1x32xf32, #tpu.memory_space<vmem>>, %arg15: memref<1x1x32xf32, #tpu.memory_space<vmem>>, %arg16: memref<1x1x32xf32, #tpu.memory_space<vmem>>, %arg17: memref<1x32x64xbf16, #tpu.memory_space<vmem>>, %arg18: memref<1x1x64xf32, #tpu.memory_space<vmem>>, %arg19: memref<1x64x32xbf16, #tpu.memory_space<vmem>>, %arg20: memref<1x1x32xf32, #tpu.memory_space<vmem>>, %arg21: memref<1x1x32xf32, #tpu.memory_space<vmem>>, %arg22: memref<1x1x32xf32, #tpu.memory_space<vmem>>, %arg23: memref<32x128xbf16, #tpu.memory_space<vmem>>, %arg24: memref<1x128xf32, #tpu.memory_space<vmem>>, %arg25: memref<2x8x128xf32, #tpu.memory_space<vmem>>, %arg26: memref<2x8x32xbf16, #tpu.memory_space<vmem>>, %arg27: memref<4x8x8xbf16, #tpu.memory_space<vmem>>, %arg28: memref<4x8x8xbf16, #tpu.memory_space<vmem>>, %arg29: memref<4x8x8xbf16, #tpu.memory_space<vmem>>) attributes {dimension_semantics = [#tpu.dimension_semantics<parallel>, #tpu.dimension_semantics<arbitrary>], iteration_bounds = array<i64: 1, 2>, scalar_prefetch = 0 : i64, scratch_operands = 4 : i64, tpu.core_type = #tpu.core_type<tc>, window_params = [{transform_indices = @transform_0, window_bounds = array<i64: 2, 4, 192>}, {pipeline_mode = #tpu.pipeline_mode<synchronous>, transform_indices = @transform_1, window_bounds = array<i64: 1, 192>}, {pipeline_mode = #tpu.pipeline_mode<synchronous>, transform_indices = @transform_2, window_bounds = array<i64: 1, 192>}, {pipeline_mode = #tpu.pipeline_mode<synchronous>, transform_indices = @transform_3, window_bounds = array<i64: 192, 32>}, {pipeline_mode = #tpu.pipeline_mode<synchronous>, transform_indices = @transform_4, window_bounds = array<i64: 1, 32>}, {pipeline_mode = #tpu.pipeline_mode<synchronous>, transform_indices = @transform_5, window_bounds = array<i64: 1, 32>}, {pipeline_mode = #tpu.pipeline_mode<synchronous>, transform_indices = @transform_6, window_bounds = array<i64: 1, 32>}, {pipeline_mode = #tpu.pipeline_mode<synchronous>, transform_indices = @transform_7, window_bounds = array<i64: 1, 32>}, {pipeline_mode = #tpu.pipeline_mode<synchronous>, transform_indices = @transform_8, window_bounds = array<i64: 8, 32>}, {transform_indices = @transform_9, window_bounds = array<i64: 1, 3, 32, 32>}, {transform_indices = @transform_10, window_bounds = array<i64: 1, 3, 1, 32>}, {transform_indices = @transform_11, window_bounds = array<i64: 1, 4, 8, 32>}, {transform_indices = @transform_12, window_bounds = array<i64: 1, 1, 32>}, {transform_indices = @transform_13, window_bounds = array<i64: 1, 1, 32>}, {transform_indices = @transform_14, window_bounds = array<i64: 1, 1, 32>}, {transform_indices = @transform_15, window_bounds = array<i64: 1, 32, 64>}, {transform_indices = @transform_16, window_bounds = array<i64: 1, 1, 64>}, {transform_indices = @transform_17, window_bounds = array<i64: 1, 64, 32>}, {transform_indices = @transform_18, window_bounds = array<i64: 1, 1, 32>}, {transform_indices = @transform_19, window_bounds = array<i64: 1, 1, 32>}, {transform_indices = @transform_20, window_bounds = array<i64: 1, 1, 32>}, {pipeline_mode = #tpu.pipeline_mode<synchronous>, transform_indices = @transform_21, window_bounds = array<i64: 32, 128>}, {pipeline_mode = #tpu.pipeline_mode<synchronous>, transform_indices = @transform_22, window_bounds = array<i64: 1, 128>}, {transform_indices = @transform_23, window_bounds = array<i64: 2, 8, 128>}]} {
    %c0_i32 = arith.constant 0 : i32
    %0 = arith.cmpi eq, %arg1, %c0_i32 : i32
    %1 = arith.extui %0 : i1 to i32
    %c0_i32_0 = arith.constant 0 : i32
    %2 = arith.cmpi ne, %1, %c0_i32_0 : i32
    scf.if %2 {
      %c0 = arith.constant 0 : index
      %c0_3 = arith.constant 0 : index
      %4 = vector.load %arg9[%c0, %c0_3] : memref<1x32xf32, #tpu.memory_space<vmem>>, vector<1x32xf32>
      %5 = vector.shape_cast %4 : vector<1x32xf32> to vector<1x32xf32>
      %6 = vector.broadcast %5 : vector<1x32xf32> to vector<4x32xf32>
      %c4 = arith.constant 4 : index
      %c0_4 = arith.constant 0 : index
      %7 = vector.load %arg10[%c4, %c0_4] : memref<8x32xf32, #tpu.memory_space<vmem>>, vector<4x32xf32>
      %8 = arith.addf %6, %7 : vector<4x32xf32>
      %9 = arith.truncf %8 : vector<4x32xf32> to vector<4x32xbf16>
      %c0_i32_5 = arith.constant 0 : i32
      %c2_i32_6 = arith.constant 2 : i32
      %10 = arith.addi %c0_i32_5, %c2_i32_6 : i32
      %c1_i32_7 = arith.constant 1 : i32
      scf.for %arg30 = %c0_i32_5 to %10 step %c1_i32_7  : i32 {
        %c1_i32_9 = arith.constant 1 : i32
        %11 = arith.muli %arg30, %c1_i32_9 : i32
        %c0_i32_10 = arith.constant 0 : i32
        %12 = arith.addi %c0_i32_10, %11 : i32
        %13 = arith.index_cast %12 : i32 to index
        %c0_11 = arith.constant 0 : index
        %c0_12 = arith.constant 0 : index
        %14 = vector.load %arg2[%13, %c0_11, %c0_12] : memref<2x4x192xbf16, #tpu.memory_space<vmem>>, vector<1x4x192xbf16>
        %15 = vector.shape_cast %14 : vector<1x4x192xbf16> to vector<4x192xbf16>
        %16 = arith.extf %15 : vector<4x192xbf16> to vector<4x192xf32>
        %c0_13 = arith.constant 0 : index
        %c0_14 = arith.constant 0 : index
        %17 = vector.load %arg3[%c0_13, %c0_14] : memref<1x192xf32, #tpu.memory_space<vmem>>, vector<1x192xf32>
        %c0_15 = arith.constant 0 : index
        %c0_16 = arith.constant 0 : index
        %18 = vector.load %arg4[%c0_15, %c0_16] : memref<1x192xf32, #tpu.memory_space<vmem>>, vector<1x192xf32>
        %cst = arith.constant dense<0.000000e+00> : vector<4xf32>
        %19 = vector.multi_reduction <add>, %16, %cst [1] : vector<4x192xf32> to vector<4xf32>
        %20 = vector.shape_cast %19 : vector<4xf32> to vector<4x1xf32>
        %cst_17 = arith.constant 1.920000e+02 : f32
        %21 = vector.broadcast %cst_17 : f32 to vector<4x1xf32>
        %22 = arith.divf %20, %21 : vector<4x1xf32>
        %23 = vector.broadcast %22 : vector<4x1xf32> to vector<4x192xf32>
        %24 = arith.subf %16, %23 : vector<4x192xf32>
        %25 = arith.mulf %24, %24 : vector<4x192xf32>
        %cst_18 = arith.constant dense<0.000000e+00> : vector<4xf32>
        %26 = vector.multi_reduction <add>, %25, %cst_18 [1] : vector<4x192xf32> to vector<4xf32>
        %27 = vector.shape_cast %26 : vector<4xf32> to vector<4x1xf32>
        %cst_19 = arith.constant 1.920000e+02 : f32
        %28 = vector.broadcast %cst_19 : f32 to vector<4x1xf32>
        %29 = arith.divf %27, %28 : vector<4x1xf32>
        %30 = vector.broadcast %22 : vector<4x1xf32> to vector<4x192xf32>
        %31 = arith.subf %16, %30 : vector<4x192xf32>
        %cst_20 = arith.constant 9.99999974E-6 : f32
        %32 = vector.broadcast %cst_20 : f32 to vector<4x1xf32>
        %33 = arith.addf %29, %32 : vector<4x1xf32>
        %34 = math.rsqrt %33 : vector<4x1xf32>
        %35 = vector.broadcast %34 : vector<4x1xf32> to vector<4x192xf32>
        %36 = arith.mulf %31, %35 : vector<4x192xf32>
        %37 = vector.broadcast %17 : vector<1x192xf32> to vector<4x192xf32>
        %38 = arith.mulf %36, %37 : vector<4x192xf32>
        %39 = vector.broadcast %18 : vector<1x192xf32> to vector<4x192xf32>
        %40 = arith.addf %38, %39 : vector<4x192xf32>
        %c0_21 = arith.constant 0 : index
        %c0_22 = arith.constant 0 : index
        %41 = vector.load %arg5[%c0_21, %c0_22] : memref<192x32xbf16, #tpu.memory_space<vmem>>, vector<192x32xbf16>
        %42 = arith.truncf %40 : vector<4x192xf32> to vector<4x192xbf16>
        %cst_23 = arith.constant dense<0.000000e+00> : vector<4x32xf32>
        %43 = tpu.matmul %42, %41, %cst_23 {dimension_numbers = #tpu.dot_dimension_numbers<[1], [0], [0], [1], [0, 0, 1, 1], [], []>} : vector<4x192xbf16>, vector<192x32xbf16>, vector<4x32xf32> -> vector<4x32xf32>
        %c0_24 = arith.constant 0 : index
        %c0_25 = arith.constant 0 : index
        %44 = vector.load %arg6[%c0_24, %c0_25] : memref<1x32xf32, #tpu.memory_space<vmem>>, vector<1x32xf32>
        %45 = vector.broadcast %44 : vector<1x32xf32> to vector<4x32xf32>
        %46 = arith.addf %43, %45 : vector<4x32xf32>
        %c0_26 = arith.constant 0 : index
        %c0_27 = arith.constant 0 : index
        %47 = vector.load %arg7[%c0_26, %c0_27] : memref<1x32xf32, #tpu.memory_space<vmem>>, vector<1x32xf32>
        %c0_28 = arith.constant 0 : index
        %c0_29 = arith.constant 0 : index
        %48 = vector.load %arg8[%c0_28, %c0_29] : memref<1x32xf32, #tpu.memory_space<vmem>>, vector<1x32xf32>
        %cst_30 = arith.constant dense<0.000000e+00> : vector<4xf32>
        %49 = vector.multi_reduction <add>, %46, %cst_30 [1] : vector<4x32xf32> to vector<4xf32>
        %50 = vector.shape_cast %49 : vector<4xf32> to vector<4x1xf32>
        %cst_31 = arith.constant 3.200000e+01 : f32
        %51 = vector.broadcast %cst_31 : f32 to vector<4x1xf32>
        %52 = arith.divf %50, %51 : vector<4x1xf32>
        %53 = vector.broadcast %52 : vector<4x1xf32> to vector<4x32xf32>
        %54 = arith.subf %46, %53 : vector<4x32xf32>
        %55 = arith.mulf %54, %54 : vector<4x32xf32>
        %cst_32 = arith.constant dense<0.000000e+00> : vector<4xf32>
        %56 = vector.multi_reduction <add>, %55, %cst_32 [1] : vector<4x32xf32> to vector<4xf32>
        %57 = vector.shape_cast %56 : vector<4xf32> to vector<4x1xf32>
        %cst_33 = arith.constant 3.200000e+01 : f32
        %58 = vector.broadcast %cst_33 : f32 to vector<4x1xf32>
        %59 = arith.divf %57, %58 : vector<4x1xf32>
        %60 = vector.broadcast %52 : vector<4x1xf32> to vector<4x32xf32>
        %61 = arith.subf %46, %60 : vector<4x32xf32>
        %cst_34 = arith.constant 9.99999974E-6 : f32
        %62 = vector.broadcast %cst_34 : f32 to vector<4x1xf32>
        %63 = arith.addf %59, %62 : vector<4x1xf32>
        %64 = math.rsqrt %63 : vector<4x1xf32>
        %65 = vector.broadcast %64 : vector<4x1xf32> to vector<4x32xf32>
        %66 = arith.mulf %61, %65 : vector<4x32xf32>
        %67 = vector.broadcast %47 : vector<1x32xf32> to vector<4x32xf32>
        %68 = arith.mulf %66, %67 : vector<4x32xf32>
        %69 = vector.broadcast %48 : vector<1x32xf32> to vector<4x32xf32>
        %70 = arith.addf %68, %69 : vector<4x32xf32>
        %c0_35 = arith.constant 0 : index
        %c0_36 = arith.constant 0 : index
        %71 = vector.load %arg10[%c0_35, %c0_36] : memref<8x32xf32, #tpu.memory_space<vmem>>, vector<4x32xf32>
        %72 = arith.addf %70, %71 : vector<4x32xf32>
        %73 = arith.truncf %72 : vector<4x32xf32> to vector<4x32xbf16>
        %74 = arith.index_cast %12 : i32 to index
        %c0_37 = arith.constant 0 : index
        %c0_38 = arith.constant 0 : index
        %75 = vector.load %arg26[%74, %c0_37, %c0_38] : memref<2x8x32xbf16, #tpu.memory_space<vmem>>, vector<1x4x32xbf16>
        %76 = vector.shape_cast %75 : vector<1x4x32xbf16> to vector<4x32xbf16>
        %77 = vector.shape_cast %73 : vector<4x32xbf16> to vector<1x4x32xbf16>
        tpu.vector_store %arg26[%74, %c0_37, %c0_38], %77 {strides = array<i32>} : memref<2x8x32xbf16, #tpu.memory_space<vmem>>, vector<1x4x32xbf16>,
        %78 = arith.index_cast %12 : i32 to index
        %c4_39 = arith.constant 4 : index
        %c0_40 = arith.constant 0 : index
        %79 = vector.load %arg26[%78, %c4_39, %c0_40] : memref<2x8x32xbf16, #tpu.memory_space<vmem>>, vector<1x4x32xbf16>
        %80 = vector.shape_cast %79 : vector<1x4x32xbf16> to vector<4x32xbf16>
        %81 = vector.shape_cast %9 : vector<4x32xbf16> to vector<1x4x32xbf16>
        tpu.vector_store %arg26[%78, %c4_39, %c0_40], %81 {strides = array<i32>} : memref<2x8x32xbf16, #tpu.memory_space<vmem>>, vector<1x4x32xbf16>,
      }
      %c2_i32_8 = arith.constant 2 : i32
    } else {
    }
    %c0_i32_1 = arith.constant 0 : i32
    %c2_i32 = arith.constant 2 : i32
    %3 = arith.addi %c0_i32_1, %c2_i32 : i32
    %c1_i32 = arith.constant 1 : i32
    scf.for %arg30 = %c0_i32_1 to %3 step %c1_i32  : i32 {
      %c1_i32_3 = arith.constant 1 : i32
      %4 = arith.muli %arg30, %c1_i32_3 : i32
      %c0_i32_4 = arith.constant 0 : i32
      %5 = arith.addi %c0_i32_4, %4 : i32
      %6 = arith.index_cast %5 : i32 to index
      %c0 = arith.constant 0 : index
      %c0_5 = arith.constant 0 : index
      %7 = vector.load %arg26[%6, %c0, %c0_5] : memref<2x8x32xbf16, #tpu.memory_space<vmem>>, vector<1x8x32xbf16>
      %8 = vector.shape_cast %7 : vector<1x8x32xbf16> to vector<8x32xbf16>
      %9 = arith.extf %8 : vector<8x32xbf16> to vector<8x32xf32>
      %c0_6 = arith.constant 0 : index
      %c0_7 = arith.constant 0 : index
      %c0_8 = arith.constant 0 : index
      %c0_9 = arith.constant 0 : index
      %10 = vector.load %arg11[%c0_6, %c0_7, %c0_8, %c0_9] : memref<1x3x32x32xbf16, #tpu.memory_space<vmem>>, vector<1x1x32x32xbf16>
      %11 = vector.shape_cast %10 : vector<1x1x32x32xbf16> to vector<32x32xbf16>
      %12 = arith.truncf %9 : vector<8x32xf32> to vector<8x32xbf16>
      %cst = arith.constant dense<0.000000e+00> : vector<8x32xf32>
      %13 = tpu.matmul %12, %11, %cst {dimension_numbers = #tpu.dot_dimension_numbers<[1], [0], [0], [1], [0, 0, 1, 1], [], []>} : vector<8x32xbf16>, vector<32x32xbf16>, vector<8x32xf32> -> vector<8x32xf32>
      %c0_10 = arith.constant 0 : index
      %c0_11 = arith.constant 0 : index
      %c0_12 = arith.constant 0 : index
      %c0_13 = arith.constant 0 : index
      %14 = vector.load %arg12[%c0_10, %c0_11, %c0_12, %c0_13] : memref<1x3x1x32xf32, #tpu.memory_space<vmem>>, vector<1x1x1x32xf32>
      %15 = vector.shape_cast %14 : vector<1x1x1x32xf32> to vector<1x32xf32>
      %16 = vector.broadcast %15 : vector<1x32xf32> to vector<8x32xf32>
      %17 = arith.addf %13, %16 : vector<8x32xf32>
      %cst_14 = arith.constant 0.353553385 : f32
      %18 = vector.broadcast %cst_14 : f32 to vector<8x32xf32>
      %19 = arith.mulf %17, %18 : vector<8x32xf32>
      %c0_15 = arith.constant 0 : index
      %c1 = arith.constant 1 : index
      %c0_16 = arith.constant 0 : index
      %c0_17 = arith.constant 0 : index
      %20 = vector.load %arg11[%c0_15, %c1, %c0_16, %c0_17] : memref<1x3x32x32xbf16, #tpu.memory_space<vmem>>, vector<1x1x32x32xbf16>
      %21 = vector.shape_cast %20 : vector<1x1x32x32xbf16> to vector<32x32xbf16>
      %22 = arith.truncf %9 : vector<8x32xf32> to vector<8x32xbf16>
      %cst_18 = arith.constant dense<0.000000e+00> : vector<8x32xf32>
      %23 = tpu.matmul %22, %21, %cst_18 {dimension_numbers = #tpu.dot_dimension_numbers<[1], [0], [0], [1], [0, 0, 1, 1], [], []>} : vector<8x32xbf16>, vector<32x32xbf16>, vector<8x32xf32> -> vector<8x32xf32>
      %c0_19 = arith.constant 0 : index
      %c1_20 = arith.constant 1 : index
      %c0_21 = arith.constant 0 : index
      %c0_22 = arith.constant 0 : index
      %24 = vector.load %arg12[%c0_19, %c1_20, %c0_21, %c0_22] : memref<1x3x1x32xf32, #tpu.memory_space<vmem>>, vector<1x1x1x32xf32>
      %25 = vector.shape_cast %24 : vector<1x1x1x32xf32> to vector<1x32xf32>
      %26 = vector.broadcast %25 : vector<1x32xf32> to vector<8x32xf32>
      %27 = arith.addf %23, %26 : vector<8x32xf32>
      %c0_23 = arith.constant 0 : index
      %c2 = arith.constant 2 : index
      %c0_24 = arith.constant 0 : index
      %c0_25 = arith.constant 0 : index
      %28 = vector.load %arg11[%c0_23, %c2, %c0_24, %c0_25] : memref<1x3x32x32xbf16, #tpu.memory_space<vmem>>, vector<1x1x32x32xbf16>
      %29 = vector.shape_cast %28 : vector<1x1x32x32xbf16> to vector<32x32xbf16>
      %30 = arith.truncf %9 : vector<8x32xf32> to vector<8x32xbf16>
      %cst_26 = arith.constant dense<0.000000e+00> : vector<8x32xf32>
      %31 = tpu.matmul %30, %29, %cst_26 {dimension_numbers = #tpu.dot_dimension_numbers<[1], [0], [0], [1], [0, 0, 1, 1], [], []>} : vector<8x32xbf16>, vector<32x32xbf16>, vector<8x32xf32> -> vector<8x32xf32>
      %c0_27 = arith.constant 0 : index
      %c2_28 = arith.constant 2 : index
      %c0_29 = arith.constant 0 : index
      %c0_30 = arith.constant 0 : index
      %32 = vector.load %arg12[%c0_27, %c2_28, %c0_29, %c0_30] : memref<1x3x1x32xf32, #tpu.memory_space<vmem>>, vector<1x1x1x32xf32>
      %33 = vector.shape_cast %32 : vector<1x1x1x32xf32> to vector<1x32xf32>
      %34 = vector.broadcast %33 : vector<1x32xf32> to vector<8x32xf32>
      %35 = arith.addf %31, %34 : vector<8x32xf32>
      %36 = vector.extract_strided_slice %19 {offsets = [0, 0], sizes = [8, 8], strides = [1, 1]} : vector<8x32xf32> to vector<8x8xf32>
      %37 = arith.truncf %36 : vector<8x8xf32> to vector<8x8xbf16>
      %c0_31 = arith.constant 0 : index
      %c0_32 = arith.constant 0 : index
      %c0_33 = arith.constant 0 : index
      %38 = vector.load %arg27[%c0_31, %c0_32, %c0_33] : memref<4x8x8xbf16, #tpu.memory_space<vmem>>, vector<1x8x8xbf16>
      %39 = vector.shape_cast %38 : vector<1x8x8xbf16> to vector<8x8xbf16>
      %40 = vector.shape_cast %37 : vector<8x8xbf16> to vector<1x8x8xbf16>
      tpu.vector_store %arg27[%c0_31, %c0_32, %c0_33], %40 {strides = array<i32>} : memref<4x8x8xbf16, #tpu.memory_space<vmem>>, vector<1x8x8xbf16>,
      %41 = vector.extract_strided_slice %27 {offsets = [0, 0], sizes = [8, 8], strides = [1, 1]} : vector<8x32xf32> to vector<8x8xf32>
      %42 = arith.truncf %41 : vector<8x8xf32> to vector<8x8xbf16>
      %c0_34 = arith.constant 0 : index
      %c0_35 = arith.constant 0 : index
      %c0_36 = arith.constant 0 : index
      %43 = vector.load %arg28[%c0_34, %c0_35, %c0_36] : memref<4x8x8xbf16, #tpu.memory_space<vmem>>, vector<1x8x8xbf16>
      %44 = vector.shape_cast %43 : vector<1x8x8xbf16> to vector<8x8xbf16>
      %45 = vector.shape_cast %42 : vector<8x8xbf16> to vector<1x8x8xbf16>
      tpu.vector_store %arg28[%c0_34, %c0_35, %c0_36], %45 {strides = array<i32>} : memref<4x8x8xbf16, #tpu.memory_space<vmem>>, vector<1x8x8xbf16>,
      %46 = vector.extract_strided_slice %35 {offsets = [0, 0], sizes = [8, 8], strides = [1, 1]} : vector<8x32xf32> to vector<8x8xf32>
      %47 = arith.truncf %46 : vector<8x8xf32> to vector<8x8xbf16>
      %c0_37 = arith.constant 0 : index
      %c0_38 = arith.constant 0 : index
      %c0_39 = arith.constant 0 : index
      %48 = vector.load %arg29[%c0_37, %c0_38, %c0_39] : memref<4x8x8xbf16, #tpu.memory_space<vmem>>, vector<1x8x8xbf16>
      %49 = vector.shape_cast %48 : vector<1x8x8xbf16> to vector<8x8xbf16>
      %50 = vector.shape_cast %47 : vector<8x8xbf16> to vector<1x8x8xbf16>
      tpu.vector_store %arg29[%c0_37, %c0_38, %c0_39], %50 {strides = array<i32>} : memref<4x8x8xbf16, #tpu.memory_space<vmem>>, vector<1x8x8xbf16>,
      %51 = vector.extract_strided_slice %19 {offsets = [0, 8], sizes = [8, 8], strides = [1, 1]} : vector<8x32xf32> to vector<8x8xf32>
      %52 = arith.truncf %51 : vector<8x8xf32> to vector<8x8xbf16>
      %c1_40 = arith.constant 1 : index
      %c0_41 = arith.constant 0 : index
      %c0_42 = arith.constant 0 : index
      %53 = vector.load %arg27[%c1_40, %c0_41, %c0_42] : memref<4x8x8xbf16, #tpu.memory_space<vmem>>, vector<1x8x8xbf16>
      %54 = vector.shape_cast %53 : vector<1x8x8xbf16> to vector<8x8xbf16>
      %55 = vector.shape_cast %52 : vector<8x8xbf16> to vector<1x8x8xbf16>
      tpu.vector_store %arg27[%c1_40, %c0_41, %c0_42], %55 {strides = array<i32>} : memref<4x8x8xbf16, #tpu.memory_space<vmem>>, vector<1x8x8xbf16>,
      %56 = vector.extract_strided_slice %27 {offsets = [0, 8], sizes = [8, 8], strides = [1, 1]} : vector<8x32xf32> to vector<8x8xf32>
      %57 = arith.truncf %56 : vector<8x8xf32> to vector<8x8xbf16>
      %c1_43 = arith.constant 1 : index
      %c0_44 = arith.constant 0 : index
      %c0_45 = arith.constant 0 : index
      %58 = vector.load %arg28[%c1_43, %c0_44, %c0_45] : memref<4x8x8xbf16, #tpu.memory_space<vmem>>, vector<1x8x8xbf16>
      %59 = vector.shape_cast %58 : vector<1x8x8xbf16> to vector<8x8xbf16>
      %60 = vector.shape_cast %57 : vector<8x8xbf16> to vector<1x8x8xbf16>
      tpu.vector_store %arg28[%c1_43, %c0_44, %c0_45], %60 {strides = array<i32>} : memref<4x8x8xbf16, #tpu.memory_space<vmem>>, vector<1x8x8xbf16>,
      %61 = vector.extract_strided_slice %35 {offsets = [0, 8], sizes = [8, 8], strides = [1, 1]} : vector<8x32xf32> to vector<8x8xf32>
      %62 = arith.truncf %61 : vector<8x8xf32> to vector<8x8xbf16>
      %c1_46 = arith.constant 1 : index
      %c0_47 = arith.constant 0 : index
      %c0_48 = arith.constant 0 : index
      %63 = vector.load %arg29[%c1_46, %c0_47, %c0_48] : memref<4x8x8xbf16, #tpu.memory_space<vmem>>, vector<1x8x8xbf16>
      %64 = vector.shape_cast %63 : vector<1x8x8xbf16> to vector<8x8xbf16>
      %65 = vector.shape_cast %62 : vector<8x8xbf16> to vector<1x8x8xbf16>
      tpu.vector_store %arg29[%c1_46, %c0_47, %c0_48], %65 {strides = array<i32>} : memref<4x8x8xbf16, #tpu.memory_space<vmem>>, vector<1x8x8xbf16>,
      %66 = vector.extract_strided_slice %19 {offsets = [0, 16], sizes = [8, 8], strides = [1, 1]} : vector<8x32xf32> to vector<8x8xf32>
      %67 = arith.truncf %66 : vector<8x8xf32> to vector<8x8xbf16>
      %c2_49 = arith.constant 2 : index
      %c0_50 = arith.constant 0 : index
      %c0_51 = arith.constant 0 : index
      %68 = vector.load %arg27[%c2_49, %c0_50, %c0_51] : memref<4x8x8xbf16, #tpu.memory_space<vmem>>, vector<1x8x8xbf16>
      %69 = vector.shape_cast %68 : vector<1x8x8xbf16> to vector<8x8xbf16>
      %70 = vector.shape_cast %67 : vector<8x8xbf16> to vector<1x8x8xbf16>
      tpu.vector_store %arg27[%c2_49, %c0_50, %c0_51], %70 {strides = array<i32>} : memref<4x8x8xbf16, #tpu.memory_space<vmem>>, vector<1x8x8xbf16>,
      %71 = vector.extract_strided_slice %27 {offsets = [0, 16], sizes = [8, 8], strides = [1, 1]} : vector<8x32xf32> to vector<8x8xf32>
      %72 = arith.truncf %71 : vector<8x8xf32> to vector<8x8xbf16>
      %c2_52 = arith.constant 2 : index
      %c0_53 = arith.constant 0 : index
      %c0_54 = arith.constant 0 : index
      %73 = vector.load %arg28[%c2_52, %c0_53, %c0_54] : memref<4x8x8xbf16, #tpu.memory_space<vmem>>, vector<1x8x8xbf16>
      %74 = vector.shape_cast %73 : vector<1x8x8xbf16> to vector<8x8xbf16>
      %75 = vector.shape_cast %72 : vector<8x8xbf16> to vector<1x8x8xbf16>
      tpu.vector_store %arg28[%c2_52, %c0_53, %c0_54], %75 {strides = array<i32>} : memref<4x8x8xbf16, #tpu.memory_space<vmem>>, vector<1x8x8xbf16>,
      %76 = vector.extract_strided_slice %35 {offsets = [0, 16], sizes = [8, 8], strides = [1, 1]} : vector<8x32xf32> to vector<8x8xf32>
      %77 = arith.truncf %76 : vector<8x8xf32> to vector<8x8xbf16>
      %c2_55 = arith.constant 2 : index
      %c0_56 = arith.constant 0 : index
      %c0_57 = arith.constant 0 : index
      %78 = vector.load %arg29[%c2_55, %c0_56, %c0_57] : memref<4x8x8xbf16, #tpu.memory_space<vmem>>, vector<1x8x8xbf16>
      %79 = vector.shape_cast %78 : vector<1x8x8xbf16> to vector<8x8xbf16>
      %80 = vector.shape_cast %77 : vector<8x8xbf16> to vector<1x8x8xbf16>
      tpu.vector_store %arg29[%c2_55, %c0_56, %c0_57], %80 {strides = array<i32>} : memref<4x8x8xbf16, #tpu.memory_space<vmem>>, vector<1x8x8xbf16>,
      %81 = vector.extract_strided_slice %19 {offsets = [0, 24], sizes = [8, 8], strides = [1, 1]} : vector<8x32xf32> to vector<8x8xf32>
      %82 = arith.truncf %81 : vector<8x8xf32> to vector<8x8xbf16>
      %c3 = arith.constant 3 : index
      %c0_58 = arith.constant 0 : index
      %c0_59 = arith.constant 0 : index
      %83 = vector.load %arg27[%c3, %c0_58, %c0_59] : memref<4x8x8xbf16, #tpu.memory_space<vmem>>, vector<1x8x8xbf16>
      %84 = vector.shape_cast %83 : vector<1x8x8xbf16> to vector<8x8xbf16>
      %85 = vector.shape_cast %82 : vector<8x8xbf16> to vector<1x8x8xbf16>
      tpu.vector_store %arg27[%c3, %c0_58, %c0_59], %85 {strides = array<i32>} : memref<4x8x8xbf16, #tpu.memory_space<vmem>>, vector<1x8x8xbf16>,
      %86 = vector.extract_strided_slice %27 {offsets = [0, 24], sizes = [8, 8], strides = [1, 1]} : vector<8x32xf32> to vector<8x8xf32>
      %87 = arith.truncf %86 : vector<8x8xf32> to vector<8x8xbf16>
      %c3_60 = arith.constant 3 : index
      %c0_61 = arith.constant 0 : index
      %c0_62 = arith.constant 0 : index
      %88 = vector.load %arg28[%c3_60, %c0_61, %c0_62] : memref<4x8x8xbf16, #tpu.memory_space<vmem>>, vector<1x8x8xbf16>
      %89 = vector.shape_cast %88 : vector<1x8x8xbf16> to vector<8x8xbf16>
      %90 = vector.shape_cast %87 : vector<8x8xbf16> to vector<1x8x8xbf16>
      tpu.vector_store %arg28[%c3_60, %c0_61, %c0_62], %90 {strides = array<i32>} : memref<4x8x8xbf16, #tpu.memory_space<vmem>>, vector<1x8x8xbf16>,
      %91 = vector.extract_strided_slice %35 {offsets = [0, 24], sizes = [8, 8], strides = [1, 1]} : vector<8x32xf32> to vector<8x8xf32>
      %92 = arith.truncf %91 : vector<8x8xf32> to vector<8x8xbf16>
      %c3_63 = arith.constant 3 : index
      %c0_64 = arith.constant 0 : index
      %c0_65 = arith.constant 0 : index
      %93 = vector.load %arg29[%c3_63, %c0_64, %c0_65] : memref<4x8x8xbf16, #tpu.memory_space<vmem>>, vector<1x8x8xbf16>
      %94 = vector.shape_cast %93 : vector<1x8x8xbf16> to vector<8x8xbf16>
      %95 = vector.shape_cast %92 : vector<8x8xbf16> to vector<1x8x8xbf16>
      tpu.vector_store %arg29[%c3_63, %c0_64, %c0_65], %95 {strides = array<i32>} : memref<4x8x8xbf16, #tpu.memory_space<vmem>>, vector<1x8x8xbf16>,
      %c0_66 = arith.constant 0 : index
      %c0_67 = arith.constant 0 : index
      %c0_68 = arith.constant 0 : index
      %96 = vector.load %arg27[%c0_66, %c0_67, %c0_68] : memref<4x8x8xbf16, #tpu.memory_space<vmem>>, vector<4x8x8xbf16>
      %c0_69 = arith.constant 0 : index
      %c0_70 = arith.constant 0 : index
      %c0_71 = arith.constant 0 : index
      %97 = vector.load %arg28[%c0_69, %c0_70, %c0_71] : memref<4x8x8xbf16, #tpu.memory_space<vmem>>, vector<4x8x8xbf16>
      "tpu.trace_start"() <{level = 10 : i32, message = "hld,hmd->hlm"}> : () -> ()
      %cst_72 = arith.constant dense<0.000000e+00> : vector<4x8x8xf32>
      %98 = tpu.matmul %96, %97, %cst_72 {dimension_numbers = #tpu.dot_dimension_numbers<[2], [2], [1], [1], [0, 0, 0, 1, 1, 1], [0], [0]>} : vector<4x8x8xbf16>, vector<4x8x8xbf16>, vector<4x8x8xf32> -> vector<4x8x8xf32>
      "tpu.trace_stop"() : () -> ()
      %99 = tpu.iota {dimensions = array<i32: 2>} : vector<4x8x8xi32>
      %c5_i32 = arith.constant 5 : i32
      %100 = vector.broadcast %c5_i32 : i32 to vector<4x8x8xi32>
      %101 = arith.cmpi sge, %99, %100 : vector<4x8x8xi32>
      %cst_73 = arith.constant -1.000000e+30 : f32
      %102 = vector.broadcast %cst_73 : f32 to vector<4x8x8xf32>
      %103 = arith.select %101, %102, %98 : vector<4x8x8xi1>, vector<4x8x8xf32>
      %cst_74 = arith.constant dense<0xFF800000> : vector<4x8xf32>
      %104 = vector.multi_reduction <maximumf>, %103, %cst_74 [2] : vector<4x8x8xf32> to vector<4x8xf32>
      %105 = vector.shape_cast %104 : vector<4x8xf32> to vector<4x8x1xf32>
      %106 = vector.broadcast %105 : vector<4x8x1xf32> to vector<4x8x8xf32>
      %107 = arith.subf %103, %106 : vector<4x8x8xf32>
      %108 = math.exp %107 : vector<4x8x8xf32>
      %cst_75 = arith.constant dense<0.000000e+00> : vector<4x8xf32>
      %109 = vector.multi_reduction <add>, %108, %cst_75 [2] : vector<4x8x8xf32> to vector<4x8xf32>
      %110 = vector.shape_cast %109 : vector<4x8xf32> to vector<4x8x1xf32>
      %111 = vector.broadcast %110 : vector<4x8x1xf32> to vector<4x8x8xf32>
      %112 = arith.divf %108, %111 : vector<4x8x8xf32>
      %113 = arith.truncf %112 : vector<4x8x8xf32> to vector<4x8x8xbf16>
      %c0_76 = arith.constant 0 : index
      %c0_77 = arith.constant 0 : index
      %c0_78 = arith.constant 0 : index
      %114 = vector.load %arg29[%c0_76, %c0_77, %c0_78] : memref<4x8x8xbf16, #tpu.memory_space<vmem>>, vector<4x8x8xbf16>
      "tpu.trace_start"() <{level = 10 : i32, message = "hlm,hmd->hld"}> : () -> ()
      %cst_79 = arith.constant dense<0.000000e+00> : vector<4x8x8xf32>
      %115 = tpu.matmul %113, %114, %cst_79 {dimension_numbers = #tpu.dot_dimension_numbers<[2], [1], [1], [2], [0, 0, 0, 1, 1, 2], [0], [0]>} : vector<4x8x8xbf16>, vector<4x8x8xbf16>, vector<4x8x8xf32> -> vector<4x8x8xf32>
      "tpu.trace_stop"() : () -> ()
      %116 = arith.truncf %115 : vector<4x8x8xf32> to vector<4x8x8xbf16>
      %c0_80 = arith.constant 0 : index
      %c0_81 = arith.constant 0 : index
      %c0_82 = arith.constant 0 : index
      %c0_83 = arith.constant 0 : index
      %117 = vector.load %arg13[%c0_80, %c0_81, %c0_82, %c0_83] : memref<1x4x8x32xbf16, #tpu.memory_space<vmem>>, vector<1x4x8x32xbf16>
      %118 = vector.shape_cast %117 : vector<1x4x8x32xbf16> to vector<4x8x32xbf16>
      "tpu.trace_start"() <{level = 10 : i32, message = "hld,hde->hle"}> : () -> ()
      %cst_84 = arith.constant dense<0.000000e+00> : vector<4x8x32xf32>
      %119 = tpu.matmul %116, %118, %cst_84 {dimension_numbers = #tpu.dot_dimension_numbers<[2], [1], [1], [2], [0, 0, 0, 1, 1, 2], [0], [0]>} : vector<4x8x8xbf16>, vector<4x8x32xbf16>, vector<4x8x32xf32> -> vector<4x8x32xf32>
      "tpu.trace_stop"() : () -> ()
      %cst_85 = arith.constant dense<0.000000e+00> : vector<8x32xf32>
      %120 = vector.multi_reduction <add>, %119, %cst_85 [0] : vector<4x8x32xf32> to vector<8x32xf32>
      %c0_86 = arith.constant 0 : index
      %c0_87 = arith.constant 0 : index
      %c0_88 = arith.constant 0 : index
      %121 = vector.load %arg14[%c0_86, %c0_87, %c0_88] : memref<1x1x32xf32, #tpu.memory_space<vmem>>, vector<1x1x32xf32>
      %122 = vector.shape_cast %121 : vector<1x1x32xf32> to vector<1x32xf32>
      %123 = vector.broadcast %122 : vector<1x32xf32> to vector<8x32xf32>
      %124 = arith.addf %120, %123 : vector<8x32xf32>
      %125 = arith.addf %9, %124 : vector<8x32xf32>
      %c0_89 = arith.constant 0 : index
      %c0_90 = arith.constant 0 : index
      %c0_91 = arith.constant 0 : index
      %126 = vector.load %arg15[%c0_89, %c0_90, %c0_91] : memref<1x1x32xf32, #tpu.memory_space<vmem>>, vector<1x1x32xf32>
      %127 = vector.shape_cast %126 : vector<1x1x32xf32> to vector<1x32xf32>
      %c0_92 = arith.constant 0 : index
      %c0_93 = arith.constant 0 : index
      %c0_94 = arith.constant 0 : index
      %128 = vector.load %arg16[%c0_92, %c0_93, %c0_94] : memref<1x1x32xf32, #tpu.memory_space<vmem>>, vector<1x1x32xf32>
      %129 = vector.shape_cast %128 : vector<1x1x32xf32> to vector<1x32xf32>
      %cst_95 = arith.constant dense<0.000000e+00> : vector<8xf32>
      %130 = vector.multi_reduction <add>, %125, %cst_95 [1] : vector<8x32xf32> to vector<8xf32>
      %131 = vector.shape_cast %130 : vector<8xf32> to vector<8x1xf32>
      %cst_96 = arith.constant 3.200000e+01 : f32
      %132 = vector.broadcast %cst_96 : f32 to vector<8x1xf32>
      %133 = arith.divf %131, %132 : vector<8x1xf32>
      %134 = vector.broadcast %133 : vector<8x1xf32> to vector<8x32xf32>
      %135 = arith.subf %125, %134 : vector<8x32xf32>
      %136 = arith.mulf %135, %135 : vector<8x32xf32>
      %cst_97 = arith.constant dense<0.000000e+00> : vector<8xf32>
      %137 = vector.multi_reduction <add>, %136, %cst_97 [1] : vector<8x32xf32> to vector<8xf32>
      %138 = vector.shape_cast %137 : vector<8xf32> to vector<8x1xf32>
      %cst_98 = arith.constant 3.200000e+01 : f32
      %139 = vector.broadcast %cst_98 : f32 to vector<8x1xf32>
      %140 = arith.divf %138, %139 : vector<8x1xf32>
      %141 = vector.broadcast %133 : vector<8x1xf32> to vector<8x32xf32>
      %142 = arith.subf %125, %141 : vector<8x32xf32>
      %cst_99 = arith.constant 9.99999974E-6 : f32
      %143 = vector.broadcast %cst_99 : f32 to vector<8x1xf32>
      %144 = arith.addf %140, %143 : vector<8x1xf32>
      %145 = math.rsqrt %144 : vector<8x1xf32>
      %146 = vector.broadcast %145 : vector<8x1xf32> to vector<8x32xf32>
      %147 = arith.mulf %142, %146 : vector<8x32xf32>
      %148 = vector.broadcast %127 : vector<1x32xf32> to vector<8x32xf32>
      %149 = arith.mulf %147, %148 : vector<8x32xf32>
      %150 = vector.broadcast %129 : vector<1x32xf32> to vector<8x32xf32>
      %151 = arith.addf %149, %150 : vector<8x32xf32>
      %c0_100 = arith.constant 0 : index
      %c0_101 = arith.constant 0 : index
      %c0_102 = arith.constant 0 : index
      %152 = vector.load %arg17[%c0_100, %c0_101, %c0_102] : memref<1x32x64xbf16, #tpu.memory_space<vmem>>, vector<1x32x64xbf16>
      %153 = vector.shape_cast %152 : vector<1x32x64xbf16> to vector<32x64xbf16>
      %154 = arith.truncf %151 : vector<8x32xf32> to vector<8x32xbf16>
      %cst_103 = arith.constant dense<0.000000e+00> : vector<8x64xf32>
      %155 = tpu.matmul %154, %153, %cst_103 {dimension_numbers = #tpu.dot_dimension_numbers<[1], [0], [0], [1], [0, 0, 1, 1], [], []>} : vector<8x32xbf16>, vector<32x64xbf16>, vector<8x64xf32> -> vector<8x64xf32>
      %c0_104 = arith.constant 0 : index
      %c0_105 = arith.constant 0 : index
      %c0_106 = arith.constant 0 : index
      %156 = vector.load %arg18[%c0_104, %c0_105, %c0_106] : memref<1x1x64xf32, #tpu.memory_space<vmem>>, vector<1x1x64xf32>
      %157 = vector.shape_cast %156 : vector<1x1x64xf32> to vector<1x64xf32>
      %158 = vector.broadcast %157 : vector<1x64xf32> to vector<8x64xf32>
      %159 = arith.addf %155, %158 : vector<8x64xf32>
      %cst_107 = arith.constant 0.000000e+00 : f32
      %160 = vector.broadcast %cst_107 : f32 to vector<8x64xf32>
      %161 = arith.maximumf %159, %160 : vector<8x64xf32>
      %c0_108 = arith.constant 0 : index
      %c0_109 = arith.constant 0 : index
      %c0_110 = arith.constant 0 : index
      %162 = vector.load %arg19[%c0_108, %c0_109, %c0_110] : memref<1x64x32xbf16, #tpu.memory_space<vmem>>, vector<1x64x32xbf16>
      %163 = vector.shape_cast %162 : vector<1x64x32xbf16> to vector<64x32xbf16>
      %164 = arith.truncf %161 : vector<8x64xf32> to vector<8x64xbf16>
      %cst_111 = arith.constant dense<0.000000e+00> : vector<8x32xf32>
      %165 = tpu.matmul %164, %163, %cst_111 {dimension_numbers = #tpu.dot_dimension_numbers<[1], [0], [0], [1], [0, 0, 1, 1], [], []>} : vector<8x64xbf16>, vector<64x32xbf16>, vector<8x32xf32> -> vector<8x32xf32>
      %c0_112 = arith.constant 0 : index
      %c0_113 = arith.constant 0 : index
      %c0_114 = arith.constant 0 : index
      %166 = vector.load %arg20[%c0_112, %c0_113, %c0_114] : memref<1x1x32xf32, #tpu.memory_space<vmem>>, vector<1x1x32xf32>
      %167 = vector.shape_cast %166 : vector<1x1x32xf32> to vector<1x32xf32>
      %168 = vector.broadcast %167 : vector<1x32xf32> to vector<8x32xf32>
      %169 = arith.addf %165, %168 : vector<8x32xf32>
      %170 = arith.addf %151, %169 : vector<8x32xf32>
      %c0_115 = arith.constant 0 : index
      %c0_116 = arith.constant 0 : index
      %c0_117 = arith.constant 0 : index
      %171 = vector.load %arg21[%c0_115, %c0_116, %c0_117] : memref<1x1x32xf32, #tpu.memory_space<vmem>>, vector<1x1x32xf32>
      %172 = vector.shape_cast %171 : vector<1x1x32xf32> to vector<1x32xf32>
      %c0_118 = arith.constant 0 : index
      %c0_119 = arith.constant 0 : index
      %c0_120 = arith.constant 0 : index
      %173 = vector.load %arg22[%c0_118, %c0_119, %c0_120] : memref<1x1x32xf32, #tpu.memory_space<vmem>>, vector<1x1x32xf32>
      %174 = vector.shape_cast %173 : vector<1x1x32xf32> to vector<1x32xf32>
      %cst_121 = arith.constant dense<0.000000e+00> : vector<8xf32>
      %175 = vector.multi_reduction <add>, %170, %cst_121 [1] : vector<8x32xf32> to vector<8xf32>
      %176 = vector.shape_cast %175 : vector<8xf32> to vector<8x1xf32>
      %cst_122 = arith.constant 3.200000e+01 : f32
      %177 = vector.broadcast %cst_122 : f32 to vector<8x1xf32>
      %178 = arith.divf %176, %177 : vector<8x1xf32>
      %179 = vector.broadcast %178 : vector<8x1xf32> to vector<8x32xf32>
      %180 = arith.subf %170, %179 : vector<8x32xf32>
      %181 = arith.mulf %180, %180 : vector<8x32xf32>
      %cst_123 = arith.constant dense<0.000000e+00> : vector<8xf32>
      %182 = vector.multi_reduction <add>, %181, %cst_123 [1] : vector<8x32xf32> to vector<8xf32>
      %183 = vector.shape_cast %182 : vector<8xf32> to vector<8x1xf32>
      %cst_124 = arith.constant 3.200000e+01 : f32
      %184 = vector.broadcast %cst_124 : f32 to vector<8x1xf32>
      %185 = arith.divf %183, %184 : vector<8x1xf32>
      %186 = vector.broadcast %178 : vector<8x1xf32> to vector<8x32xf32>
      %187 = arith.subf %170, %186 : vector<8x32xf32>
      %cst_125 = arith.constant 9.99999974E-6 : f32
      %188 = vector.broadcast %cst_125 : f32 to vector<8x1xf32>
      %189 = arith.addf %185, %188 : vector<8x1xf32>
      %190 = math.rsqrt %189 : vector<8x1xf32>
      %191 = vector.broadcast %190 : vector<8x1xf32> to vector<8x32xf32>
      %192 = arith.mulf %187, %191 : vector<8x32xf32>
      %193 = vector.broadcast %172 : vector<1x32xf32> to vector<8x32xf32>
      %194 = arith.mulf %192, %193 : vector<8x32xf32>
      %195 = vector.broadcast %174 : vector<1x32xf32> to vector<8x32xf32>
      %196 = arith.addf %194, %195 : vector<8x32xf32>
      %197 = arith.truncf %196 : vector<8x32xf32> to vector<8x32xbf16>
      %198 = arith.index_cast %5 : i32 to index
      %c0_126 = arith.constant 0 : index
      %c0_127 = arith.constant 0 : index
      %199 = vector.load %arg26[%198, %c0_126, %c0_127] : memref<2x8x32xbf16, #tpu.memory_space<vmem>>, vector<1x8x32xbf16>
      %200 = vector.shape_cast %199 : vector<1x8x32xbf16> to vector<8x32xbf16>
      %201 = vector.shape_cast %197 : vector<8x32xbf16> to vector<1x8x32xbf16>
      tpu.vector_store %arg26[%198, %c0_126, %c0_127], %201 {strides = array<i32>} : memref<2x8x32xbf16, #tpu.memory_space<vmem>>, vector<1x8x32xbf16>,
      %c1_i32_128 = arith.constant 1 : i32
      %202 = arith.cmpi eq, %arg1, %c1_i32_128 : i32
      %203 = arith.extui %202 : i1 to i32
      %c0_i32_129 = arith.constant 0 : i32
      %204 = arith.cmpi ne, %203, %c0_i32_129 : i32
      scf.if %204 {
        %c0_130 = arith.constant 0 : index
        %c0_131 = arith.constant 0 : index
        %205 = vector.load %arg23[%c0_130, %c0_131] : memref<32x128xbf16, #tpu.memory_space<vmem>>, vector<32x128xbf16>
        %206 = arith.truncf %196 : vector<8x32xf32> to vector<8x32xbf16>
        %cst_132 = arith.constant dense<0.000000e+00> : vector<8x128xf32>
        %207 = tpu.matmul %206, %205, %cst_132 {dimension_numbers = #tpu.dot_dimension_numbers<[1], [0], [0], [1], [0, 0, 1, 1], [], []>} : vector<8x32xbf16>, vector<32x128xbf16>, vector<8x128xf32> -> vector<8x128xf32>
        %c0_133 = arith.constant 0 : index
        %c0_134 = arith.constant 0 : index
        %208 = vector.load %arg24[%c0_133, %c0_134] : memref<1x128xf32, #tpu.memory_space<vmem>>, vector<1x128xf32>
        %209 = vector.broadcast %208 : vector<1x128xf32> to vector<8x128xf32>
        %210 = arith.addf %207, %209 : vector<8x128xf32>
        %cst_135 = arith.constant 0.000000e+00 : f32
        %211 = vector.broadcast %cst_135 : f32 to vector<8x128xf32>
        %212 = arith.subf %211, %210 : vector<8x128xf32>
        %213 = math.exp %212 : vector<8x128xf32>
        %cst_136 = arith.constant 1.000000e+00 : f32
        %214 = vector.broadcast %cst_136 : f32 to vector<8x128xf32>
        %215 = arith.addf %214, %213 : vector<8x128xf32>
        %cst_137 = arith.constant 1.000000e+00 : f32
        %216 = vector.broadcast %cst_137 : f32 to vector<8x128xf32>
        %217 = arith.divf %216, %215 : vector<8x128xf32>
        %218 = arith.index_cast %5 : i32 to index
        %c0_138 = arith.constant 0 : index
        %c0_139 = arith.constant 0 : index
        %219 = vector.load %arg25[%218, %c0_138, %c0_139] : memref<2x8x128xf32, #tpu.memory_space<vmem>>, vector<1x8x128xf32>
        %220 = vector.shape_cast %219 : vector<1x8x128xf32> to vector<8x128xf32>
        %221 = vector.shape_cast %217 : vector<8x128xf32> to vector<1x8x128xf32>
        tpu.vector_store %arg25[%218, %c0_138, %c0_139], %221 {strides = array<i32>} : memref<2x8x128xf32, #tpu.memory_space<vmem>>, vector<1x8x128xf32>,
      } else {
      }
    }
    %c2_i32_2 = arith.constant 2 : i32
    return
  }
  func.func @transform_0(%arg0: i32, %arg1: i32) -> (i32, i32, i32) {
    %c0_i32 = arith.constant 0 : i32
    %c0_i32_0 = arith.constant 0 : i32
    %c0_i32_1 = arith.constant 0 : i32
    return %arg0, %c0_i32, %c0_i32_0 : i32, i32, i32
  }
  func.func @transform_1(%arg0: i32, %arg1: i32) -> (i32, i32) {
    %c0_i32 = arith.constant 0 : i32
    %c0_i32_0 = arith.constant 0 : i32
    %c0_i32_1 = arith.constant 0 : i32
    return %c0_i32, %c0_i32_0 : i32, i32
  }
  func.func @transform_2(%arg0: i32, %arg1: i32) -> (i32, i32) {
    %c0_i32 = arith.constant 0 : i32
    %c0_i32_0 = arith.constant 0 : i32
    %c0_i32_1 = arith.constant 0 : i32
    return %c0_i32, %c0_i32_0 : i32, i32
  }
  func.func @transform_3(%arg0: i32, %arg1: i32) -> (i32, i32) {
    %c0_i32 = arith.constant 0 : i32
    %c0_i32_0 = arith.constant 0 : i32
    %c0_i32_1 = arith.constant 0 : i32
    return %c0_i32, %c0_i32_0 : i32, i32
  }
  func.func @transform_4(%arg0: i32, %arg1: i32) -> (i32, i32) {
    %c0_i32 = arith.constant 0 : i32
    %c0_i32_0 = arith.constant 0 : i32
    %c0_i32_1 = arith.constant 0 : i32
    return %c0_i32, %c0_i32_0 : i32, i32
  }
  func.func @transform_5(%arg0: i32, %arg1: i32) -> (i32, i32) {
    %c0_i32 = arith.constant 0 : i32
    %c0_i32_0 = arith.constant 0 : i32
    %c0_i32_1 = arith.constant 0 : i32
    return %c0_i32, %c0_i32_0 : i32, i32
  }
  func.func @transform_6(%arg0: i32, %arg1: i32) -> (i32, i32) {
    %c0_i32 = arith.constant 0 : i32
    %c0_i32_0 = arith.constant 0 : i32
    %c0_i32_1 = arith.constant 0 : i32
    return %c0_i32, %c0_i32_0 : i32, i32
  }
  func.func @transform_7(%arg0: i32, %arg1: i32) -> (i32, i32) {
    %c0_i32 = arith.constant 0 : i32
    %c0_i32_0 = arith.constant 0 : i32
    %c0_i32_1 = arith.constant 0 : i32
    return %c0_i32, %c0_i32_0 : i32, i32
  }
  func.func @transform_8(%arg0: i32, %arg1: i32) -> (i32, i32) {
    %c0_i32 = arith.constant 0 : i32
    %c0_i32_0 = arith.constant 0 : i32
    %c0_i32_1 = arith.constant 0 : i32
    return %c0_i32, %c0_i32_0 : i32, i32
  }
  func.func @transform_9(%arg0: i32, %arg1: i32) -> (i32, i32, i32, i32) {
    %c0_i32 = arith.constant 0 : i32
    %c0_i32_0 = arith.constant 0 : i32
    %c0_i32_1 = arith.constant 0 : i32
    %c0_i32_2 = arith.constant 0 : i32
    return %arg1, %c0_i32, %c0_i32_0, %c0_i32_1 : i32, i32, i32, i32
  }
  func.func @transform_10(%arg0: i32, %arg1: i32) -> (i32, i32, i32, i32) {
    %c0_i32 = arith.constant 0 : i32
    %c0_i32_0 = arith.constant 0 : i32
    %c0_i32_1 = arith.constant 0 : i32
    %c0_i32_2 = arith.constant 0 : i32
    return %arg1, %c0_i32, %c0_i32_0, %c0_i32_1 : i32, i32, i32, i32
  }
  func.func @transform_11(%arg0: i32, %arg1: i32) -> (i32, i32, i32, i32) {
    %c0_i32 = arith.constant 0 : i32
    %c0_i32_0 = arith.constant 0 : i32
    %c0_i32_1 = arith.constant 0 : i32
    %c0_i32_2 = arith.constant 0 : i32
    return %arg1, %c0_i32, %c0_i32_0, %c0_i32_1 : i32, i32, i32, i32
  }
  func.func @transform_12(%arg0: i32, %arg1: i32) -> (i32, i32, i32) {
    %c0_i32 = arith.constant 0 : i32
    %c0_i32_0 = arith.constant 0 : i32
    %c0_i32_1 = arith.constant 0 : i32
    return %arg1, %c0_i32, %c0_i32_0 : i32, i32, i32
  }
  func.func @transform_13(%arg0: i32, %arg1: i32) -> (i32, i32, i32) {
    %c0_i32 = arith.constant 0 : i32
    %c0_i32_0 = arith.constant 0 : i32
    %c0_i32_1 = arith.constant 0 : i32
    return %arg1, %c0_i32, %c0_i32_0 : i32, i32, i32
  }
  func.func @transform_14(%arg0: i32, %arg1: i32) -> (i32, i32, i32) {
    %c0_i32 = arith.constant 0 : i32
    %c0_i32_0 = arith.constant 0 : i32
    %c0_i32_1 = arith.constant 0 : i32
    return %arg1, %c0_i32, %c0_i32_0 : i32, i32, i32
  }
  func.func @transform_15(%arg0: i32, %arg1: i32) -> (i32, i32, i32) {
    %c0_i32 = arith.constant 0 : i32
    %c0_i32_0 = arith.constant 0 : i32
    %c0_i32_1 = arith.constant 0 : i32
    return %arg1, %c0_i32, %c0_i32_0 : i32, i32, i32
  }
  func.func @transform_16(%arg0: i32, %arg1: i32) -> (i32, i32, i32) {
    %c0_i32 = arith.constant 0 : i32
    %c0_i32_0 = arith.constant 0 : i32
    %c0_i32_1 = arith.constant 0 : i32
    return %arg1, %c0_i32, %c0_i32_0 : i32, i32, i32
  }
  func.func @transform_17(%arg0: i32, %arg1: i32) -> (i32, i32, i32) {
    %c0_i32 = arith.constant 0 : i32
    %c0_i32_0 = arith.constant 0 : i32
    %c0_i32_1 = arith.constant 0 : i32
    return %arg1, %c0_i32, %c0_i32_0 : i32, i32, i32
  }
  func.func @transform_18(%arg0: i32, %arg1: i32) -> (i32, i32, i32) {
    %c0_i32 = arith.constant 0 : i32
    %c0_i32_0 = arith.constant 0 : i32
    %c0_i32_1 = arith.constant 0 : i32
    return %arg1, %c0_i32, %c0_i32_0 : i32, i32, i32
  }
  func.func @transform_19(%arg0: i32, %arg1: i32) -> (i32, i32, i32) {
    %c0_i32 = arith.constant 0 : i32
    %c0_i32_0 = arith.constant 0 : i32
    %c0_i32_1 = arith.constant 0 : i32
    return %arg1, %c0_i32, %c0_i32_0 : i32, i32, i32
  }
  func.func @transform_20(%arg0: i32, %arg1: i32) -> (i32, i32, i32) {
    %c0_i32 = arith.constant 0 : i32
    %c0_i32_0 = arith.constant 0 : i32
    %c0_i32_1 = arith.constant 0 : i32
    return %arg1, %c0_i32, %c0_i32_0 : i32, i32, i32
  }
  func.func @transform_21(%arg0: i32, %arg1: i32) -> (i32, i32) {
    %c0_i32 = arith.constant 0 : i32
    %c0_i32_0 = arith.constant 0 : i32
    %c0_i32_1 = arith.constant 0 : i32
    return %c0_i32, %c0_i32_0 : i32, i32
  }
  func.func @transform_22(%arg0: i32, %arg1: i32) -> (i32, i32) {
    %c0_i32 = arith.constant 0 : i32
    %c0_i32_0 = arith.constant 0 : i32
    %c0_i32_1 = arith.constant 0 : i32
    return %c0_i32, %c0_i32_0 : i32, i32
  }
  func.func @transform_23(%arg0: i32, %arg1: i32) -> (i32, i32, i32) {
    %c0_i32 = arith.constant 0 : i32
    %c0_i32_0 = arith.constant 0 : i32
    %c0_i32_1 = arith.constant 0 : i32
    return %arg0, %c0_i32, %c0_i32_0 : i32, i32, i32
  }
}

</mosaic_0001>

<llo_original>
// kernel: vit_forward.1
$region0: #{vit_forward.1}
  #allocation0 [shape = 'u32[]', space=smem, size = 0x4, offset = 0x4, fixed_abs, tag = 'smem constant byte address 0x4 - core index']
  #allocation1 [shape = 'u32[144,128]{1,0:T(1,128)}', space=vmem, size = 0x12000, scoped, tag = 'internal scratch']
  #allocation2 [shape = 'bf16[2,8,32]{2,1,0:T(8,128)(2,1)}', space=vmem, size = 0x1000, scoped, tag = 'scratch operand']
  #allocation3 [shape = 'bf16[4,8,8]{2,1,0:T(8,128)(2,1)}', space=vmem, size = 0x2000, scoped, tag = 'scratch operand']
  #allocation4 [shape = 'bf16[4,8,8]{2,1,0:T(8,128)(2,1)}', space=vmem, size = 0x2000, scoped, tag = 'scratch operand']
  #allocation5 [shape = 'bf16[4,8,8]{2,1,0:T(8,128)(2,1)}', space=vmem, size = 0x2000, scoped, tag = 'scratch operand']
  %s0 = inlined_call_operand.hbm [shape: bf16[2,4,192], index: 0, kind: input, shape index: {}]
  %s1 = inlined_call_operand.hbm [shape: f32[1,192], index: 1, kind: input, shape index: {}]
  %s2 = inlined_call_operand.hbm [shape: f32[1,192], index: 2, kind: input, shape index: {}]
  %s3 = inlined_call_operand.hbm [shape: bf16[192,32], index: 3, kind: input, shape index: {}]
  %s4 = inlined_call_operand.hbm [shape: f32[1,32], index: 4, kind: input, shape index: {}]
  %s5 = inlined_call_operand.hbm [shape: f32[1,32], index: 5, kind: input, shape index: {}]
  %s6 = inlined_call_operand.hbm [shape: f32[1,32], index: 6, kind: input, shape index: {}]
  %s7 = inlined_call_operand.hbm [shape: f32[1,32], index: 7, kind: input, shape index: {}]
  %s8 = inlined_call_operand.hbm [shape: f32[8,32], index: 8, kind: input, shape index: {}]
  %s9 = inlined_call_operand.hbm [shape: bf16[2,3,32,32], index: 9, kind: input, shape index: {}]
  %s10 = inlined_call_operand.hbm [shape: f32[2,3,1,32], index: 10, kind: input, shape index: {}]
  %s11 = inlined_call_operand.hbm [shape: bf16[2,4,8,32], index: 11, kind: input, shape index: {}]
  %s12 = inlined_call_operand.hbm [shape: f32[2,1,32], index: 12, kind: input, shape index: {}]
  %s13 = inlined_call_operand.hbm [shape: f32[2,1,32], index: 13, kind: input, shape index: {}]
  %s14 = inlined_call_operand.hbm [shape: f32[2,1,32], index: 14, kind: input, shape index: {}]
  %s15 = inlined_call_operand.hbm [shape: bf16[2,32,64], index: 15, kind: input, shape index: {}]
  %s16 = inlined_call_operand.hbm [shape: f32[2,1,64], index: 16, kind: input, shape index: {}]
  %s17 = inlined_call_operand.hbm [shape: bf16[2,64,32], index: 17, kind: input, shape index: {}]
  %s18 = inlined_call_operand.hbm [shape: f32[2,1,32], index: 18, kind: input, shape index: {}]
  %s19 = inlined_call_operand.hbm [shape: f32[2,1,32], index: 19, kind: input, shape index: {}]
  %s20 = inlined_call_operand.hbm [shape: f32[2,1,32], index: 20, kind: input, shape index: {}]
  %s21 = inlined_call_operand.hbm [shape: bf16[32,128], index: 21, kind: input, shape index: {}]
  %s22 = inlined_call_operand.hbm [shape: f32[1,128], index: 22, kind: input, shape index: {}]
  %s23 = inlined_call_operand.hbm [shape: f32[2,8,128], index: 23, kind: output, shape index: {}]
  %s24 = sld [smem:[#allocation0]]
  $region239: #{vit_forward.1} parent=0
    _
  %s26 = ssub.s32 1, %s24
  %s27 = scalar_select 0, %s26, %s24
  $region1: #{vit_forward.1} parent=0
    #allocation6 [shape = 'u8[4096]{0}', space=vmem, size = 0x1000, scoped, tag = 'input window, operand 0, single buffered']
    #allocation7 [shape = 's32[2]{0}', space=sflag, size = 0x8, scoped, tag = 'scoped memory for vit_forward.1']
    #allocation8 [shape = 's32[2]{0}', space=sflag, size = 0x8, scoped, tag = 'scoped memory for vit_forward.1']
    #allocation9 [shape = 'u8[1024]{0}', space=vmem, size = 0x400, scoped, tag = 'input window, operand 1, single buffered']
    #allocation10 [shape = 's32[1]{0}', space=sflag, size = 0x4, scoped, tag = 'scoped memory for vit_forward.1']
    #allocation11 [shape = 'u8[1024]{0}', space=vmem, size = 0x400, scoped, tag = 'input window, operand 2, single buffered']
    #allocation12 [shape = 'u8[49152]{0}', space=vmem, size = 0xc000, scoped, tag = 'input window, operand 3, single buffered']
    #allocation13 [shape = 's32[1]{0}', space=sflag, size = 0x4, scoped, tag = 'scoped memory for vit_forward.1']
    #allocation14 [shape = 'u8[512]{0}', space=vmem, size = 0x400, scoped, tag = 'input window, operand 4, single buffered']
    #allocation15 [shape = 'u8[512]{0}', space=vmem, size = 0x400, scoped, tag = 'input window, operand 5, single buffered']
    #allocation16 [shape = 's32[1]{0}', space=sflag, size = 0x4, scoped, tag = 'scoped memory for vit_forward.1']
    #allocation17 [shape = 'u8[512]{0}', space=vmem, size = 0x400, scoped, tag = 'input window, operand 6, single buffered']
    #allocation18 [shape = 'u8[512]{0}', space=vmem, size = 0x400, scoped, tag = 'input window, operand 7, single buffered']
    #allocation19 [shape = 's32[1]{0}', space=sflag, size = 0x4, scoped, tag = 'scoped memory for vit_forward.1']
    #allocation20 [shape = 'u8[4096]{0}', space=vmem, size = 0x1000, scoped, tag = 'input window, operand 8, single buffered']
    #allocation21 [shape = 'u8[49152]{0}', space=vmem, size = 0xc000, scoped, tag = 'input window, operand 9']
    #allocation22 [shape = 's32[2]{0}', space=sflag, size = 0x8, scoped, tag = 'scoped memory for vit_forward.1']
    #allocation23 [shape = 'u8[3072]{0}', space=vmem, size = 0xc00, scoped, tag = 'input window, operand 10']
    #allocation24 [shape = 'u8[16384]{0}', space=vmem, size = 0x4000, scoped, tag = 'input window, operand 11']
    #allocation25 [shape = 's32[2]{0}', space=sflag, size = 0x8, scoped, tag = 'scoped memory for vit_forward.1']
    #allocation26 [shape = 'u8[1024]{0}', space=vmem, size = 0x400, scoped, tag = 'input window, operand 12']
    #allocation27 [shape = 'u8[1024]{0}', space=vmem, size = 0x400, scoped, tag = 'input window, operand 13']
    #allocation28 [shape = 's32[2]{0}', space=sflag, size = 0x8, scoped, tag = 'scoped memory for vit_forward.1']
    #allocation29 [shape = 'u8[1024]{0}', space=vmem, size = 0x400, scoped, tag = 'input window, operand 14']
    #allocation30 [shape = 'u8[16384]{0}', space=vmem, size = 0x4000, scoped, tag = 'input window, operand 15']
    #allocation31 [shape = 's32[2]{0}', space=sflag, size = 0x8, scoped, tag = 'scoped memory for vit_forward.1']
    #allocation32 [shape = 'u8[1024]{0}', space=vmem, size = 0x400, scoped, tag = 'input window, operand 16']
    #allocation33 [shape = 'u8[32768]{0}', space=vmem, size = 0x8000, scoped, tag = 'input window, operand 17']
    #allocation34 [shape = 's32[2]{0}', space=sflag, size = 0x8, scoped, tag = 'scoped memory for vit_forward.1']
    #allocation35 [shape = 'u8[1024]{0}', space=vmem, size = 0x400, scoped, tag = 'input window, operand 18']
    #allocation36 [shape = 'u8[1024]{0}', space=vmem, size = 0x400, scoped, tag = 'input window, operand 19']
    #allocation37 [shape = 's32[2]{0}', space=sflag, size = 0x8, scoped, tag = 'scoped memory for vit_forward.1']
    #allocation38 [shape = 'u8[1024]{0}', space=vmem, size = 0x400, scoped, tag = 'input window, operand 20']
    #allocation39 [shape = 'u8[8192]{0}', space=vmem, size = 0x2000, scoped, tag = 'input window, operand 21, single buffered']
    #allocation40 [shape = 's32[1]{0}', space=sflag, size = 0x4, scoped, tag = 'scoped memory for vit_forward.1']
    #allocation41 [shape = 'u8[512]{0}', space=vmem, size = 0x400, scoped, tag = 'input window, operand 22, single buffered']
    #allocation42 [shape = 'u8[8192]{0}', space=vmem, size = 0x2000, scoped, tag = 'output window, operand 0, single buffered']
    %28 = vsyncpa [#allocation7], 0
    %29 = vsyncpa [#allocation10], 0
    %30 = vsyncpa [#allocation13], 0
    %31 = vsyncpa [#allocation16], 0
    %32 = vsyncpa [#allocation19], 0
    %33 = vsyncpa [#allocation22], 0
    %s34 = scalar_lea.sflag [#allocation22], 1
    %35 = vsyncpa %s34, 0
    %36 = vsyncpa [#allocation25], 0
    %s37 = scalar_lea.sflag [#allocation25], 1
    %38 = vsyncpa %s37, 0
    %39 = vsyncpa [#allocation28], 0
    %s40 = scalar_lea.sflag [#allocation28], 1
    %41 = vsyncpa %s40, 0
    %42 = vsyncpa [#allocation31], 0
    %s43 = scalar_lea.sflag [#allocation31], 1
    %44 = vsyncpa %s43, 0
    %45 = vsyncpa [#allocation34], 0
    %s46 = scalar_lea.sflag [#allocation34], 1
    %47 = vsyncpa %s46, 0
    %48 = vsyncpa [#allocation37], 0
    %s49 = scalar_lea.sflag [#allocation37], 1
    %50 = vsyncpa %s49, 0
    %51 = vsyncpa [#allocation40], 0
    %52 = vsyncpa [#allocation8], 0
    loop: start=0, step=1, limit=4
    $region2: #{vit_forward.1} parent=1 // loop_pre_header
      _
    $region3: #{vit_forward.1} parent=1 // loop_header
      %s54 = sphi 0, %s58
      %p55 = scmp.ge.s32.totalorder %s54, 4
      %s61 = sphi 0, %s73
      %s62 = sphi 0, %s69
      %s63 = sphi 0, %s61
      %s64 = sphi 0, %s62
      %s65 = sphi 0, %s63
      %s66 = sphi 0, %s64
      %s76 = sphi 0, %s78
      %s79 = sphi 0, %s76
      %s80 = sphi 0, %s79
      %s96 = sphi 0, %s80
      %s100 = sphi 0, %s100
      %s102 = sphi 0, %s100
      %s103 = sphi 0, %s102
      %s117 = sphi 0, %s103
      %s121 = sphi 0, %s121
      %s123 = sphi 0, %s121
      %s124 = sphi 0, %s123
      %s138 = sphi 0, %s124
      %s142 = sphi 0, %s142
      %s144 = sphi 0, %s142
      %s145 = sphi 0, %s144
      %s159 = sphi 0, %s145
      %s163 = sphi 0, %s163
      %s165 = sphi 0, %s163
      %s166 = sphi 0, %s165
      %s180 = sphi 0, %s166
      %s184 = sphi 0, %s184
      %s186 = sphi 0, %s184
      %s187 = sphi 0, %s186
      %s201 = sphi 0, %s187
      %s205 = sphi 0, %s205
      %s207 = sphi 0, %s205
      %s208 = sphi 0, %s207
      %s222 = sphi 0, %s208
      %s226 = sphi 0, %s226
      %s228 = sphi 0, %s226
      %s229 = sphi 0, %s228
      %s243 = sphi 0, %s229
      %s247 = sphi 0, %s247
      %s249 = sphi 0, %s247
      %s250 = sphi 0, %s249
      %s264 = sphi 0, %s250
      %s270 = sphi 0, %s272
      %s273 = sphi 0, %s270
      %s274 = sphi 0, %s273
      %s290 = sphi 0, %s274
      %s296 = sphi 0, %s298
      %s299 = sphi 0, %s296
      %s300 = sphi 0, %s299
      %s316 = sphi 0, %s300
      %s322 = sphi 0, %s324
      %s325 = sphi 0, %s322
      %s326 = sphi 0, %s325
      %s342 = sphi 0, %s326
      %s348 = sphi 0, %s350
      %s351 = sphi 0, %s348
      %s352 = sphi 0, %s351
      %s368 = sphi 0, %s352
      %s374 = sphi 0, %s376
      %s377 = sphi 0, %s374
      %s378 = sphi 0, %s377
      %s394 = sphi 0, %s378
      %s400 = sphi 0, %s402
      %s403 = sphi 0, %s400
      %s404 = sphi 0, %s403
      %s420 = sphi 0, %s404
      %s426 = sphi 0, %s428
      %s429 = sphi 0, %s426
      %s430 = sphi 0, %s429
      %s446 = sphi 0, %s430
      %s452 = sphi 0, %s454
      %s455 = sphi 0, %s452
      %s456 = sphi 0, %s455
      %s472 = sphi 0, %s456
      %s478 = sphi 0, %s480
      %s481 = sphi 0, %s478
      %s482 = sphi 0, %s481
      %s498 = sphi 0, %s482
      %s504 = sphi 0, %s506
      %s507 = sphi 0, %s504
      %s508 = sphi 0, %s507
      %s524 = sphi 0, %s508
      %s530 = sphi 0, %s532
      %s533 = sphi 0, %s530
      %s534 = sphi 0, %s533
      %s550 = sphi 0, %s534
      %s556 = sphi 0, %s558
      %s559 = sphi 0, %s556
      %s560 = sphi 0, %s559
      %s576 = sphi 0, %s560
      %s580 = sphi 0, %s580
      %s582 = sphi 0, %s580
      %s583 = sphi 0, %s582
      %s597 = sphi 0, %s583
      %s601 = sphi 0, %s601
      %s603 = sphi 0, %s601
      %s604 = sphi 0, %s603
      %s618 = sphi 0, %s604
      %s624 = sphi 0, %s626
      %s627 = sphi 0, %s624
      %s628 = sphi 0, %s627
      %s644 = sphi 0, %s628
    $region4: #{vit_forward.1} parent=1 // loop_header_branch
      %57 = sbr.rel (%p55) target = $region8
    $region5: #{vit_forward.1} parent=1 // loop_body
      %s59 = ssub.s32 %s54, 1
      %s60 = ssub.s32 %s54, 2
      %s67 = sadd.s32 1, %s62
      %p68 = scmp.ge.s32.totalorder %s67, 2
      %s69 = scalar_select %p68, 0, %s67
      %s70 = sadd.s32 1, %s61
      %s71 = scalar_select %p68, %s70, %s61
      %p72 = scmp.ge.s32.totalorder %s71, 1
      %s73 = scalar_select %p72, 0, %s71
      %s74 = ssub.s32 %s61, %s73
      %p75 = scmp.eq.s32.totalorder %s74, 0
      %s77 = sadd.s32 %s76, 1
      %s78 = scalar_select %p75, %s76, %s77
      %p81 = pneg %p75
      %p82 = scmp.eq.s32.totalorder %s54, 1
      %p83 = por %p81, %p82
      %p84 = scmp.ne.s32.totalorder %s76, %s79
      %p85 = scmp.eq.s32.totalorder %s54, 0
      %p86 = por %p84, %p85
      %p87 = scmp.ne.s32.totalorder %s76, %s79
      %p88 = scmp.eq.s32.totalorder %s59, 1
      %p89 = por %p87, %p88
      %p90 = scmp.ne.s32.totalorder %s79, %s80
      %p91 = scmp.eq.s32.totalorder %s59, 0
      %p92 = por %p90, %p91
      %p93 = scmp.ne.s32.totalorder %s79, %s80
      %p94 = scmp.eq.s32.totalorder %s60, 1
      %p95 = por %p93, %p94
      %p97 = scmp.ne.s32.totalorder %s80, %s96
      %p98 = scmp.eq.s32.totalorder %s60, 0
      %p99 = por %p97, %p98
      %s101 = sadd.s32 %s100, 1
      %p104 = scmp.eq.s32.totalorder %s54, 1
      %p105 = scmp.ne.s32.totalorder %s100, %s102
      %p106 = scmp.eq.s32.totalorder %s54, 0
      %p107 = por %p105, %p106
      %p108 = scmp.ne.s32.totalorder %s100, %s102
      %p109 = scmp.eq.s32.totalorder %s59, 1
      %p110 = por %p108, %p109
      %p111 = scmp.ne.s32.totalorder %s102, %s103
      %p112 = scmp.eq.s32.totalorder %s59, 0
      %p113 = por %p111, %p112
      %p114 = scmp.ne.s32.totalorder %s102, %s103
      %p115 = scmp.eq.s32.totalorder %s60, 1
      %p116 = por %p114, %p115
      %p118 = scmp.ne.s32.totalorder %s103, %s117
      %p119 = scmp.eq.s32.totalorder %s60, 0
      %p120 = por %p118, %p119
      %s122 = sadd.s32 %s121, 1
      %p125 = scmp.eq.s32.totalorder %s54, 1
      %p126 = scmp.ne.s32.totalorder %s121, %s123
      %p127 = scmp.eq.s32.totalorder %s54, 0
      %p128 = por %p126, %p127
      %p129 = scmp.ne.s32.totalorder %s121, %s123
      %p130 = scmp.eq.s32.totalorder %s59, 1
      %p131 = por %p129, %p130
      %p132 = scmp.ne.s32.totalorder %s123, %s124
      %p133 = scmp.eq.s32.totalorder %s59, 0
      %p134 = por %p132, %p133
      %p135 = scmp.ne.s32.totalorder %s123, %s124
      %p136 = scmp.eq.s32.totalorder %s60, 1
      %p137 = por %p135, %p136
      %p139 = scmp.ne.s32.totalorder %s124, %s138
      %p140 = scmp.eq.s32.totalorder %s60, 0
      %p141 = por %p139, %p140
      %s143 = sadd.s32 %s142, 1
      %p146 = scmp.eq.s32.totalorder %s54, 1
      %p147 = scmp.ne.s32.totalorder %s142, %s144
      %p148 = scmp.eq.s32.totalorder %s54, 0
      %p149 = por %p147, %p148
      %p150 = scmp.ne.s32.totalorder %s142, %s144
      %p151 = scmp.eq.s32.totalorder %s59, 1
      %p152 = por %p150, %p151
      %p153 = scmp.ne.s32.totalorder %s144, %s145
      %p154 = scmp.eq.s32.totalorder %s59, 0
      %p155 = por %p153, %p154
      %p156 = scmp.ne.s32.totalorder %s144, %s145
      %p157 = scmp.eq.s32.totalorder %s60, 1
      %p158 = por %p156, %p157
      %p160 = scmp.ne.s32.totalorder %s145, %s159
      %p161 = scmp.eq.s32.totalorder %s60, 0
      %p162 = por %p160, %p161
      %s164 = sadd.s32 %s163, 1
      %p167 = scmp.eq.s32.totalorder %s54, 1
      %p168 = scmp.ne.s32.totalorder %s163, %s165
      %p169 = scmp.eq.s32.totalorder %s54, 0
      %p170 = por %p168, %p169
      %p171 = scmp.ne.s32.totalorder %s163, %s165
      %p172 = scmp.eq.s32.totalorder %s59, 1
      %p173 = por %p171, %p172
      %p174 = scmp.ne.s32.totalorder %s165, %s166
      %p175 = scmp.eq.s32.totalorder %s59, 0
      %p176 = por %p174, %p175
      %p177 = scmp.ne.s32.totalorder %s165, %s166
      %p178 = scmp.eq.s32.totalorder %s60, 1
      %p179 = por %p177, %p178
      %p181 = scmp.ne.s32.totalorder %s166, %s180
      %p182 = scmp.eq.s32.totalorder %s60, 0
      %p183 = por %p181, %p182
      %s185 = sadd.s32 %s184, 1
      %p188 = scmp.eq.s32.totalorder %s54, 1
      %p189 = scmp.ne.s32.totalorder %s184, %s186
      %p190 = scmp.eq.s32.totalorder %s54, 0
      %p191 = por %p189, %p190
      %p192 = scmp.ne.s32.totalorder %s184, %s186
      %p193 = scmp.eq.s32.totalorder %s59, 1
      %p194 = por %p192, %p193
      %p195 = scmp.ne.s32.totalorder %s186, %s187
      %p196 = scmp.eq.s32.totalorder %s59, 0
      %p197 = por %p195, %p196
      %p198 = scmp.ne.s32.totalorder %s186, %s187
      %p199 = scmp.eq.s32.totalorder %s60, 1
      %p200 = por %p198, %p199
      %p202 = scmp.ne.s32.totalorder %s187, %s201
      %p203 = scmp.eq.s32.totalorder %s60, 0
      %p204 = por %p202, %p203
      %s206 = sadd.s32 %s205, 1
      %p209 = scmp.eq.s32.totalorder %s54, 1
      %p210 = scmp.ne.s32.totalorder %s205, %s207
      %p211 = scmp.eq.s32.totalorder %s54, 0
      %p212 = por %p210, %p211
      %p213 = scmp.ne.s32.totalorder %s205, %s207
      %p214 = scmp.eq.s32.totalorder %s59, 1
      %p215 = por %p213, %p214
      %p216 = scmp.ne.s32.totalorder %s207, %s208
      %p217 = scmp.eq.s32.totalorder %s59, 0
      %p218 = por %p216, %p217
      %p219 = scmp.ne.s32.totalorder %s207, %s208
      %p220 = scmp.eq.s32.totalorder %s60, 1
      %p221 = por %p219, %p220
      %p223 = scmp.ne.s32.totalorder %s208, %s222
      %p224 = scmp.eq.s32.totalorder %s60, 0
      %p225 = por %p223, %p224
      %s227 = sadd.s32 %s226, 1
      %p230 = scmp.eq.s32.totalorder %s54, 1
      %p231 = scmp.ne.s32.totalorder %s226, %s228
      %p232 = scmp.eq.s32.totalorder %s54, 0
      %p233 = por %p231, %p232
      %p234 = scmp.ne.s32.totalorder %s226, %s228
      %p235 = scmp.eq.s32.totalorder %s59, 1
      %p236 = por %p234, %p235
      %p237 = scmp.ne.s32.totalorder %s228, %s229
      %p238 = scmp.eq.s32.totalorder %s59, 0
      %p239 = por %p237, %p238
      %p240 = scmp.ne.s32.totalorder %s228, %s229
      %p241 = scmp.eq.s32.totalorder %s60, 1
      %p242 = por %p240, %p241
      %p244 = scmp.ne.s32.totalorder %s229, %s243
      %p245 = scmp.eq.s32.totalorder %s60, 0
      %p246 = por %p244, %p245
      %s248 = sadd.s32 %s247, 1
      %p251 = scmp.eq.s32.totalorder %s54, 1
      %p252 = scmp.ne.s32.totalorder %s247, %s249
      %p253 = scmp.eq.s32.totalorder %s54, 0
      %p254 = por %p252, %p253
      %p255 = scmp.ne.s32.totalorder %s247, %s249
      %p256 = scmp.eq.s32.totalorder %s59, 1
      %p257 = por %p255, %p256
      %p258 = scmp.ne.s32.totalorder %s249, %s250
      %p259 = scmp.eq.s32.totalorder %s59, 0
      %p260 = por %p258, %p259
      %p261 = scmp.ne.s32.totalorder %s249, %s250
      %p262 = scmp.eq.s32.totalorder %s60, 1
      %p263 = por %p261, %p262
      %p265 = scmp.ne.s32.totalorder %s250, %s264
      %p266 = scmp.eq.s32.totalorder %s60, 0
      %p267 = por %p265, %p266
      %s268 = ssub.s32 %s62, %s69
      %p269 = scmp.eq.s32.totalorder %s268, 0
      %s271 = sadd.s32 %s270, 1
      %s272 = scalar_select %p269, %s270, %s271
      %p275 = pneg %p269
      %p276 = scmp.eq.s32.totalorder %s54, 1
      %p277 = por %p275, %p276
      %p278 = scmp.ne.s32.totalorder %s270, %s273
      %p279 = scmp.eq.s32.totalorder %s54, 0
      %p280 = por %p278, %p279
      %p281 = scmp.ne.s32.totalorder %s270, %s273
      %p282 = scmp.eq.s32.totalorder %s59, 1
      %p283 = por %p281, %p282
      %p284 = scmp.ne.s32.totalorder %s273, %s274
      %p285 = scmp.eq.s32.totalorder %s59, 0
      %p286 = por %p284, %p285
      %p287 = scmp.ne.s32.totalorder %s273, %s274
      %p288 = scmp.eq.s32.totalorder %s60, 1
      %p289 = por %p287, %p288
      %p291 = scmp.ne.s32.totalorder %s274, %s290
      %p292 = scmp.eq.s32.totalorder %s60, 0
      %p293 = por %p291, %p292
      %s294 = ssub.s32 %s62, %s69
      %p295 = scmp.eq.s32.totalorder %s294, 0
      %s297 = sadd.s32 %s296, 1
      %s298 = scalar_select %p295, %s296, %s297
      %p301 = pneg %p295
      %p302 = scmp.eq.s32.totalorder %s54, 1
      %p303 = por %p301, %p302
      %p304 = scmp.ne.s32.totalorder %s296, %s299
      %p305 = scmp.eq.s32.totalorder %s54, 0
      %p306 = por %p304, %p305
      %p307 = scmp.ne.s32.totalorder %s296, %s299
      %p308 = scmp.eq.s32.totalorder %s59, 1
      %p309 = por %p307, %p308
      %p310 = scmp.ne.s32.totalorder %s299, %s300
      %p311 = scmp.eq.s32.totalorder %s59, 0
      %p312 = por %p310, %p311
      %p313 = scmp.ne.s32.totalorder %s299, %s300
      %p314 = scmp.eq.s32.totalorder %s60, 1
      %p315 = por %p313, %p314
      %p317 = scmp.ne.s32.totalorder %s300, %s316
      %p318 = scmp.eq.s32.totalorder %s60, 0
      %p319 = por %p317, %p318
      %s320 = ssub.s32 %s62, %s69
      %p321 = scmp.eq.s32.totalorder %s320, 0
      %s323 = sadd.s32 %s322, 1
      %s324 = scalar_select %p321, %s322, %s323
      %p327 = pneg %p321
      %p328 = scmp.eq.s32.totalorder %s54, 1
      %p329 = por %p327, %p328
      %p330 = scmp.ne.s32.totalorder %s322, %s325
      %p331 = scmp.eq.s32.totalorder %s54, 0
      %p332 = por %p330, %p331
      %p333 = scmp.ne.s32.totalorder %s322, %s325
      %p334 = scmp.eq.s32.totalorder %s59, 1
      %p335 = por %p333, %p334
      %p336 = scmp.ne.s32.totalorder %s325, %s326
      %p337 = scmp.eq.s32.totalorder %s59, 0
      %p338 = por %p336, %p337
      %p339 = scmp.ne.s32.totalorder %s325, %s326
      %p340 = scmp.eq.s32.totalorder %s60, 1
      %p341 = por %p339, %p340
      %p343 = scmp.ne.s32.totalorder %s326, %s342
      %p344 = scmp.eq.s32.totalorder %s60, 0
      %p345 = por %p343, %p344
      %s346 = ssub.s32 %s62, %s69
      %p347 = scmp.eq.s32.totalorder %s346, 0
      %s349 = sadd.s32 %s348, 1
      %s350 = scalar_select %p347, %s348, %s349
      %p353 = pneg %p347
      %p354 = scmp.eq.s32.totalorder %s54, 1
      %p355 = por %p353, %p354
      %p356 = scmp.ne.s32.totalorder %s348, %s351
      %p357 = scmp.eq.s32.totalorder %s54, 0
      %p358 = por %p356, %p357
      %p359 = scmp.ne.s32.totalorder %s348, %s351
      %p360 = scmp.eq.s32.totalorder %s59, 1
      %p361 = por %p359, %p360
      %p362 = scmp.ne.s32.totalorder %s351, %s352
      %p363 = scmp.eq.s32.totalorder %s59, 0
      %p364 = por %p362, %p363
      %p365 = scmp.ne.s32.totalorder %s351, %s352
      %p366 = scmp.eq.s32.totalorder %s60, 1
      %p367 = por %p365, %p366
      %p369 = scmp.ne.s32.totalorder %s352, %s368
      %p370 = scmp.eq.s32.totalorder %s60, 0
      %p371 = por %p369, %p370
      %s372 = ssub.s32 %s62, %s69
      %p373 = scmp.eq.s32.totalorder %s372, 0
      %s375 = sadd.s32 %s374, 1
      %s376 = scalar_select %p373, %s374, %s375
      %p379 = pneg %p373
      %p380 = scmp.eq.s32.totalorder %s54, 1
      %p381 = por %p379, %p380
      %p382 = scmp.ne.s32.totalorder %s374, %s377
      %p383 = scmp.eq.s32.totalorder %s54, 0
      %p384 = por %p382, %p383
      %p385 = scmp.ne.s32.totalorder %s374, %s377
      %p386 = scmp.eq.s32.totalorder %s59, 1
      %p387 = por %p385, %p386
      %p388 = scmp.ne.s32.totalorder %s377, %s378
      %p389 = scmp.eq.s32.totalorder %s59, 0
      %p390 = por %p388, %p389
      %p391 = scmp.ne.s32.totalorder %s377, %s378
      %p392 = scmp.eq.s32.totalorder %s60, 1
      %p393 = por %p391, %p392
      %p395 = scmp.ne.s32.totalorder %s378, %s394
      %p396 = scmp.eq.s32.totalorder %s60, 0
      %p397 = por %p395, %p396
      %s398 = ssub.s32 %s62, %s69
      %p399 = scmp.eq.s32.totalorder %s398, 0
      %s401 = sadd.s32 %s400, 1
      %s402 = scalar_select %p399, %s400, %s401
      %p405 = pneg %p399
      %p406 = scmp.eq.s32.totalorder %s54, 1
      %p407 = por %p405, %p406
      %p408 = scmp.ne.s32.totalorder %s400, %s403
      %p409 = scmp.eq.s32.totalorder %s54, 0
      %p410 = por %p408, %p409
      %p411 = scmp.ne.s32.totalorder %s400, %s403
      %p412 = scmp.eq.s32.totalorder %s59, 1
      %p413 = por %p411, %p412
      %p414 = scmp.ne.s32.totalorder %s403, %s404
      %p415 = scmp.eq.s32.totalorder %s59, 0
      %p416 = por %p414, %p415
      %p417 = scmp.ne.s32.totalorder %s403, %s404
      %p418 = scmp.eq.s32.totalorder %s60, 1
      %p419 = por %p417, %p418
      %p421 = scmp.ne.s32.totalorder %s404, %s420
      %p422 = scmp.eq.s32.totalorder %s60, 0
      %p423 = por %p421, %p422
      %s424 = ssub.s32 %s62, %s69
      %p425 = scmp.eq.s32.totalorder %s424, 0
      %s427 = sadd.s32 %s426, 1
      %s428 = scalar_select %p425, %s426, %s427
      %p431 = pneg %p425
      %p432 = scmp.eq.s32.totalorder %s54, 1
      %p433 = por %p431, %p432
      %p434 = scmp.ne.s32.totalorder %s426, %s429
      %p435 = scmp.eq.s32.totalorder %s54, 0
      %p436 = por %p434, %p435
      %p437 = scmp.ne.s32.totalorder %s426, %s429
      %p438 = scmp.eq.s32.totalorder %s59, 1
      %p439 = por %p437, %p438
      %p440 = scmp.ne.s32.totalorder %s429, %s430
      %p441 = scmp.eq.s32.totalorder %s59, 0
      %p442 = por %p440, %p441
      %p443 = scmp.ne.s32.totalorder %s429, %s430
      %p444 = scmp.eq.s32.totalorder %s60, 1
      %p445 = por %p443, %p444
      %p447 = scmp.ne.s32.totalorder %s430, %s446
      %p448 = scmp.eq.s32.totalorder %s60, 0
      %p449 = por %p447, %p448
      %s450 = ssub.s32 %s62, %s69
      %p451 = scmp.eq.s32.totalorder %s450, 0
      %s453 = sadd.s32 %s452, 1
      %s454 = scalar_select %p451, %s452, %s453
      %p457 = pneg %p451
      %p458 = scmp.eq.s32.totalorder %s54, 1
      %p459 = por %p457, %p458
      %p460 = scmp.ne.s32.totalorder %s452, %s455
      %p461 = scmp.eq.s32.totalorder %s54, 0
      %p462 = por %p460, %p461
      %p463 = scmp.ne.s32.totalorder %s452, %s455
      %p464 = scmp.eq.s32.totalorder %s59, 1
      %p465 = por %p463, %p464
      %p466 = scmp.ne.s32.totalorder %s455, %s456
      %p467 = scmp.eq.s32.totalorder %s59, 0
      %p468 = por %p466, %p467
      %p469 = scmp.ne.s32.totalorder %s455, %s456
      %p470 = scmp.eq.s32.totalorder %s60, 1
      %p471 = por %p469, %p470
      %p473 = scmp.ne.s32.totalorder %s456, %s472
      %p474 = scmp.eq.s32.totalorder %s60, 0
      %p475 = por %p473, %p474
      %s476 = ssub.s32 %s62, %s69
      %p477 = scmp.eq.s32.totalorder %s476, 0
      %s479 = sadd.s32 %s478, 1
      %s480 = scalar_select %p477, %s478, %s479
      %p483 = pneg %p477
      %p484 = scmp.eq.s32.totalorder %s54, 1
      %p485 = por %p483, %p484
      %p486 = scmp.ne.s32.totalorder %s478, %s481
      %p487 = scmp.eq.s32.totalorder %s54, 0
      %p488 = por %p486, %p487
      %p489 = scmp.ne.s32.totalorder %s478, %s481
      %p490 = scmp.eq.s32.totalorder %s59, 1
      %p491 = por %p489, %p490
      %p492 = scmp.ne.s32.totalorder %s481, %s482
      %p493 = scmp.eq.s32.totalorder %s59, 0
      %p494 = por %p492, %p493
      %p495 = scmp.ne.s32.totalorder %s481, %s482
      %p496 = scmp.eq.s32.totalorder %s60, 1
      %p497 = por %p495, %p496
      %p499 = scmp.ne.s32.totalorder %s482, %s498
      %p500 = scmp.eq.s32.totalorder %s60, 0
      %p501 = por %p499, %p500
      %s502 = ssub.s32 %s62, %s69
      %p503 = scmp.eq.s32.totalorder %s502, 0
      %s505 = sadd.s32 %s504, 1
      %s506 = scalar_select %p503, %s504, %s505
      %p509 = pneg %p503
      %p510 = scmp.eq.s32.totalorder %s54, 1
      %p511 = por %p509, %p510
      %p512 = scmp.ne.s32.totalorder %s504, %s507
      %p513 = scmp.eq.s32.totalorder %s54, 0
      %p514 = por %p512, %p513
      %p515 = scmp.ne.s32.totalorder %s504, %s507
      %p516 = scmp.eq.s32.totalorder %s59, 1
      %p517 = por %p515, %p516
      %p518 = scmp.ne.s32.totalorder %s507, %s508
      %p519 = scmp.eq.s32.totalorder %s59, 0
      %p520 = por %p518, %p519
      %p521 = scmp.ne.s32.totalorder %s507, %s508
      %p522 = scmp.eq.s32.totalorder %s60, 1
      %p523 = por %p521, %p522
      %p525 = scmp.ne.s32.totalorder %s508, %s524
      %p526 = scmp.eq.s32.totalorder %s60, 0
      %p527 = por %p525, %p526
      %s528 = ssub.s32 %s62, %s69
      %p529 = scmp.eq.s32.totalorder %s528, 0
      %s531 = sadd.s32 %s530, 1
      %s532 = scalar_select %p529, %s530, %s531
      %p535 = pneg %p529
      %p536 = scmp.eq.s32.totalorder %s54, 1
      %p537 = por %p535, %p536
      %p538 = scmp.ne.s32.totalorder %s530, %s533
      %p539 = scmp.eq.s32.totalorder %s54, 0
      %p540 = por %p538, %p539
      %p541 = scmp.ne.s32.totalorder %s530, %s533
      %p542 = scmp.eq.s32.totalorder %s59, 1
      %p543 = por %p541, %p542
      %p544 = scmp.ne.s32.totalorder %s533, %s534
      %p545 = scmp.eq.s32.totalorder %s59, 0
      %p546 = por %p544, %p545
      %p547 = scmp.ne.s32.totalorder %s533, %s534
      %p548 = scmp.eq.s32.totalorder %s60, 1
      %p549 = por %p547, %p548
      %p551 = scmp.ne.s32.totalorder %s534, %s550
      %p552 = scmp.eq.s32.totalorder %s60, 0
      %p553 = por %p551, %p552
      %s554 = ssub.s32 %s62, %s69
      %p555 = scmp.eq.s32.totalorder %s554, 0
      %s557 = sadd.s32 %s556, 1
      %s558 = scalar_select %p555, %s556, %s557
      %p561 = pneg %p555
      %p562 = scmp.eq.s32.totalorder %s54, 1
      %p563 = por %p561, %p562
      %p564 = scmp.ne.s32.totalorder %s556, %s559
      %p565 = scmp.eq.s32.totalorder %s54, 0
      %p566 = por %p564, %p565
      %p567 = scmp.ne.s32.totalorder %s556, %s559
      %p568 = scmp.eq.s32.totalorder %s59, 1
      %p569 = por %p567, %p568
      %p570 = scmp.ne.s32.totalorder %s559, %s560
      %p571 = scmp.eq.s32.totalorder %s59, 0
      %p572 = por %p570, %p571
      %p573 = scmp.ne.s32.totalorder %s559, %s560
      %p574 = scmp.eq.s32.totalorder %s60, 1
      %p575 = por %p573, %p574
      %p577 = scmp.ne.s32.totalorder %s560, %s576
      %p578 = scmp.eq.s32.totalorder %s60, 0
      %p579 = por %p577, %p578
      %s581 = sadd.s32 %s580, 1
      %p584 = scmp.eq.s32.totalorder %s54, 1
      %p585 = scmp.ne.s32.totalorder %s580, %s582
      %p586 = scmp.eq.s32.totalorder %s54, 0
      %p587 = por %p585, %p586
      %p588 = scmp.ne.s32.totalorder %s580, %s582
      %p589 = scmp.eq.s32.totalorder %s59, 1
      %p590 = por %p588, %p589
      %p591 = scmp.ne.s32.totalorder %s582, %s583
      %p592 = scmp.eq.s32.totalorder %s59, 0
      %p593 = por %p591, %p592
      %p594 = scmp.ne.s32.totalorder %s582, %s583
      %p595 = scmp.eq.s32.totalorder %s60, 1
      %p596 = por %p594, %p595
      %p598 = scmp.ne.s32.totalorder %s583, %s597
      %p599 = scmp.eq.s32.totalorder %s60, 0
      %p600 = por %p598, %p599
      %s602 = sadd.s32 %s601, 1
      %p605 = scmp.eq.s32.totalorder %s54, 1
      %p606 = scmp.ne.s32.totalorder %s601, %s603
      %p607 = scmp.eq.s32.totalorder %s54, 0
      %p608 = por %p606, %p607
      %p609 = scmp.ne.s32.totalorder %s601, %s603
      %p610 = scmp.eq.s32.totalorder %s59, 1
      %p611 = por %p609, %p610
      %p612 = scmp.ne.s32.totalorder %s603, %s604
      %p613 = scmp.eq.s32.totalorder %s59, 0
      %p614 = por %p612, %p613
      %p615 = scmp.ne.s32.totalorder %s603, %s604
      %p616 = scmp.eq.s32.totalorder %s60, 1
      %p617 = por %p615, %p616
      %p619 = scmp.ne.s32.totalorder %s604, %s618
      %p620 = scmp.eq.s32.totalorder %s60, 0
      %p621 = por %p619, %p620
      %s622 = ssub.s32 %s61, %s73
      %p623 = scmp.eq.s32.totalorder %s622, 0
      %s625 = sadd.s32 %s624, 1
      %s626 = scalar_select %p623, %s624, %s625
      %p629 = pneg %p623
      %p630 = scmp.eq.s32.totalorder %s54, 1
      %p631 = por %p629, %p630
      %p632 = scmp.ne.s32.totalorder %s624, %s627
      %p633 = scmp.eq.s32.totalorder %s54, 0
      %p634 = por %p632, %p633
      %p635 = scmp.ne.s32.totalorder %s624, %s627
      %p636 = scmp.eq.s32.totalorder %s59, 1
      %p637 = por %p635, %p636
      %p638 = scmp.ne.s32.totalorder %s627, %s628
      %p639 = scmp.eq.s32.totalorder %s59, 0
      %p640 = por %p638, %p639
      %p641 = scmp.ne.s32.totalorder %s627, %s628
      %p642 = scmp.eq.s32.totalorder %s60, 1
      %p643 = por %p641, %p642
      %p645 = scmp.ne.s32.totalorder %s628, %s644
      %p646 = scmp.eq.s32.totalorder %s60, 0
      %p647 = por %p645, %p646
      %p648 = scmp.le.s32.totalorder 1, %s54
      %p649 = scmp.lt.s32.totalorder %s54, 3
      %p650 = pnand %p648, %p649
      %p651 = pneg %p650
      // Predicated region
      $region9: #{vit_forward.1} parent=5 // pred_check
        _
      $region10: #{vit_forward.1} parent=5 // pred_check_branch
        %653 = sbr.rel (%p650) target = $region12
      $region11: #{vit_forward.1} parent=5 // pred_region
        %s654 = ssub.s32 %s54, 1
        // Predicated region
        $region13: #{vit_forward.1} parent=11 // pred_check
          %p655 = pneg %p92
        $region14: #{vit_forward.1} parent=11 // pred_check_branch
          %657 = sbr.rel (%p655) target = $region16
        $region15: #{vit_forward.1} parent=11 // pred_region
          %s658 = smul.u32 2, %s63
          %s660 = ssub.s32 128, 128
          %661 = vsyncadd [#allocation7], %s660
          %s662 = smul.addr %s658, 2
          %s663 = smul.addr %s662, 32
          %s664 = scalar_lea.hbm %s0, %s663
          %s665 = sshll.u32 [#allocation6], 4
          %s666 = int_to_ptr.vmem [resolvable:$true] %s665
          %671 = dma.hbm_to_vmem [thread:$0]  %s664, 128, %s666, [#allocation7], 64, 64, 4
        $region16: #{vit_forward.1} parent=11 // pred_fallthru
          _
        // Predicated region
        $region17: #{vit_forward.1} parent=11 // pred_check
          %p672 = pneg %p113
        $region18: #{vit_forward.1} parent=11 // pred_check_branch
          %674 = sbr.rel (%p672) target = $region20
        $region19: #{vit_forward.1} parent=11 // pred_region
          %s676 = ssub.s32 32, 32
          %677 = vsyncadd [#allocation10], %s676
          %s679 = sshll.u32 [#allocation9], 4
          %s680 = int_to_ptr.vmem [resolvable:$true] %s679
          %682 = dma.hbm_to_vmem [thread:$0]  %s1, 32, %s680, [#allocation10]
        $region20: #{vit_forward.1} parent=11 // pred_fallthru
          _
        // Predicated region
        $region21: #{vit_forward.1} parent=11 // pred_check
          %p683 = pneg %p134
        $region22: #{vit_forward.1} parent=11 // pred_check_branch
          %685 = sbr.rel (%p683) target = $region24
        $region23: #{vit_forward.1} parent=11 // pred_region
          %s687 = ssub.s32 32, 32
          %688 = vsyncadd [#allocation10], %s687
          %s690 = sshll.u32 [#allocation11], 4
          %s691 = int_to_ptr.vmem [resolvable:$true] %s690
          %693 = dma.hbm_to_vmem [thread:$0]  %s2, 32, %s691, [#allocation10]
        $region24: #{vit_forward.1} parent=11 // pred_fallthru
          _
        // Predicated region
        $region25: #{vit_forward.1} parent=11 // pred_check
          %p694 = pneg %p155
        $region26: #{vit_forward.1} parent=11 // pred_check_branch
          %696 = sbr.rel (%p694) target = $region28
        $region27: #{vit_forward.1} parent=11 // pred_region
          %s698 = ssub.s32 1536, 1536
          %699 = vsyncadd [#allocation13], %s698
          %s700 = sshll.u32 [#allocation12], 4
          %s701 = int_to_ptr.vmem [resolvable:$true] %s700
          %706 = dma.hbm_to_vmem [thread:$0]  %s3, 1536, %s701, [#allocation13], 64, 64, 4
        $region28: #{vit_forward.1} parent=11 // pred_fallthru
          _
        // Predicated region
        $region29: #{vit_forward.1} parent=11 // pred_check
          %p707 = pneg %p176
        $region30: #{vit_forward.1} parent=11 // pred_check_branch
          %709 = sbr.rel (%p707) target = $region32
        $region31: #{vit_forward.1} parent=11 // pred_region
          %s711 = ssub.s32 16, 16
          %712 = vsyncadd [#allocation13], %s711
          %s714 = sshll.u32 [#allocation14], 4
          %s715 = int_to_ptr.vmem [resolvable:$true] %s714
          %717 = dma.hbm_to_vmem [thread:$0]  %s4, 16, %s715, [#allocation13]
        $region32: #{vit_forward.1} parent=11 // pred_fallthru
          _
        // Predicated region
        $region33: #{vit_forward.1} parent=11 // pred_check
          %p718 = pneg %p197
        $region34: #{vit_forward.1} parent=11 // pred_check_branch
          %720 = sbr.rel (%p718) target = $region36
        $region35: #{vit_forward.1} parent=11 // pred_region
          %s722 = ssub.s32 16, 16
          %723 = vsyncadd [#allocation16], %s722
          %s725 = sshll.u32 [#allocation15], 4
          %s726 = int_to_ptr.vmem [resolvable:$true] %s725
          %728 = dma.hbm_to_vmem [thread:$0]  %s5, 16, %s726, [#allocation16]
        $region36: #{vit_forward.1} parent=11 // pred_fallthru
          _
        // Predicated region
        $region37: #{vit_forward.1} parent=11 // pred_check
          %p729 = pneg %p218
        $region38: #{vit_forward.1} parent=11 // pred_check_branch
          %731 = sbr.rel (%p729) target = $region40
        $region39: #{vit_forward.1} parent=11 // pred_region
          %s733 = ssub.s32 16, 16
          %734 = vsyncadd [#allocation16], %s733
          %s736 = sshll.u32 [#allocation17], 4
          %s737 = int_to_ptr.vmem [resolvable:$true] %s736
          %739 = dma.hbm_to_vmem [thread:$0]  %s6, 16, %s737, [#allocation16]
        $region40: #{vit_forward.1} parent=11 // pred_fallthru
          _
        // Predicated region
        $region41: #{vit_forward.1} parent=11 // pred_check
          %p740 = pneg %p239
        $region42: #{vit_forward.1} parent=11 // pred_check_branch
          %742 = sbr.rel (%p740) target = $region44
        $region43: #{vit_forward.1} parent=11 // pred_region
          %s744 = ssub.s32 16, 16
          %745 = vsyncadd [#allocation19], %s744
          %s747 = sshll.u32 [#allocation18], 4
          %s748 = int_to_ptr.vmem [resolvable:$true] %s747
          %750 = dma.hbm_to_vmem [thread:$0]  %s7, 16, %s748, [#allocation19]
        $region44: #{vit_forward.1} parent=11 // pred_fallthru
          _
        // Predicated region
        $region45: #{vit_forward.1} parent=11 // pred_check
          %p751 = pneg %p260
        $region46: #{vit_forward.1} parent=11 // pred_check_branch
          %753 = sbr.rel (%p751) target = $region48
        $region47: #{vit_forward.1} parent=11 // pred_region
          %s755 = ssub.s32 128, 128
          %756 = vsyncadd [#allocation19], %s755
          %s758 = sshll.u32 [#allocation20], 4
          %s759 = int_to_ptr.vmem [resolvable:$true] %s758
          %761 = dma.hbm_to_vmem [thread:$0]  %s8, 128, %s759, [#allocation19]
        $region48: #{vit_forward.1} parent=11 // pred_fallthru
          _
        // Predicated region
        $region49: #{vit_forward.1} parent=11 // pred_check
          %p762 = pneg %p593
        $region50: #{vit_forward.1} parent=11 // pred_check_branch
          %764 = sbr.rel (%p762) target = $region52
        $region51: #{vit_forward.1} parent=11 // pred_region
          %s766 = ssub.s32 256, 256
          %767 = vsyncadd [#allocation40], %s766
          %s768 = sshll.u32 [#allocation39], 4
          %s769 = int_to_ptr.vmem [resolvable:$true] %s768
          %774 = dma.hbm_to_vmem [thread:$0]  %s21, 256, %s769, [#allocation40], 64, 64, 4
        $region52: #{vit_forward.1} parent=11 // pred_fallthru
          _
        // Predicated region
        $region53: #{vit_forward.1} parent=11 // pred_check
          %p775 = pneg %p614
        $region54: #{vit_forward.1} parent=11 // pred_check_branch
          %777 = sbr.rel (%p775) target = $region56
        $region55: #{vit_forward.1} parent=11 // pred_region
          %s779 = ssub.s32 16, 16
          %780 = vsyncadd [#allocation40], %s779
          %s782 = sshll.u32 [#allocation41], 4
          %s783 = int_to_ptr.vmem [resolvable:$true] %s782
          %785 = dma.hbm_to_vmem [thread:$0]  %s22, 16, %s783, [#allocation40]
        $region56: #{vit_forward.1} parent=11 // pred_fallthru
          _
      $region12: #{vit_forward.1} parent=5 // pred_fallthru
        _
      %p786 = scmp.lt.s32.totalorder %s54, 2
      // Predicated region
      $region57: #{vit_forward.1} parent=5 // pred_check
        %p787 = pneg %p786
      $region58: #{vit_forward.1} parent=5 // pred_check_branch
        %789 = sbr.rel (%p787) target = $region60
      $region59: #{vit_forward.1} parent=5 // pred_region
        // Predicated region
        $region61: #{vit_forward.1} parent=59 // pred_check
          %p790 = pneg %p280
        $region62: #{vit_forward.1} parent=59 // pred_check_branch
          %792 = sbr.rel (%p790) target = $region64
        $region63: #{vit_forward.1} parent=59 // pred_region
          %s793 = sand.u32 %s54, 1
          %s794 = scalar_lea.sflag [#allocation22], %s793
          %s795 = sand.u32 %s270, 1
          %s796 = smul.addr %s795, 48
          %s797 = scalar_lea.vmem [#allocation21], %s796
          %s799 = ssub.s32 768, 768
          %800 = vsyncadd %s794, %s799
          %s801 = smul.addr %s62, 12
          %s802 = smul.addr %s801, 64
          %s803 = scalar_lea.hbm %s9, %s802
          %s804 = sshll.u32 %s797, 4
          %s805 = int_to_ptr.vmem [resolvable:$true] %s804
          %810 = dma.hbm_to_vmem [thread:$0]  %s803, 768, %s805, %s794, 64, 64, 4
        $region64: #{vit_forward.1} parent=59 // pred_fallthru
          _
        // Predicated region
        $region65: #{vit_forward.1} parent=59 // pred_check
          %p811 = pneg %p306
        $region66: #{vit_forward.1} parent=59 // pred_check_branch
          %813 = sbr.rel (%p811) target = $region68
        $region67: #{vit_forward.1} parent=59 // pred_region
          %s814 = sand.u32 %s54, 1
          %s815 = scalar_lea.sflag [#allocation22], %s814
          %s816 = sand.u32 %s296, 1
          %s817 = smul.addr %s816, 3
          %s818 = scalar_lea.vmem [#allocation23], %s817
          %s820 = ssub.s32 48, 48
          %821 = vsyncadd %s815, %s820
          %s822 = smul.addr %s62, 3
          %s823 = smul.addr %s822, 16
          %s824 = scalar_lea.hbm %s10, %s823
          %s825 = sshll.u32 %s818, 4
          %s826 = int_to_ptr.vmem [resolvable:$true] %s825
          %831 = dma.hbm_to_vmem [thread:$0]  %s824, 48, %s826, %s815, 16, 16, 1
        $region68: #{vit_forward.1} parent=59 // pred_fallthru
          _
        // Predicated region
        $region69: #{vit_forward.1} parent=59 // pred_check
          %p832 = pneg %p332
        $region70: #{vit_forward.1} parent=59 // pred_check_branch
          %834 = sbr.rel (%p832) target = $region72
        $region71: #{vit_forward.1} parent=59 // pred_region
          %s835 = sand.u32 %s54, 1
          %s836 = scalar_lea.sflag [#allocation25], %s835
          %s837 = sand.u32 %s322, 1
          %s838 = smul.addr %s837, 16
          %s839 = scalar_lea.vmem [#allocation24], %s838
          %s841 = ssub.s32 256, 256
          %842 = vsyncadd %s836, %s841
          %s843 = smul.addr %s62, 4
          %s844 = smul.addr %s843, 64
          %s845 = scalar_lea.hbm %s11, %s844
          %s846 = sshll.u32 %s839, 4
          %s847 = int_to_ptr.vmem [resolvable:$true] %s846
          %852 = dma.hbm_to_vmem [thread:$0]  %s845, 256, %s847, %s836, 64, 64, 4
        $region72: #{vit_forward.1} parent=59 // pred_fallthru
          _
        // Predicated region
        $region73: #{vit_forward.1} parent=59 // pred_check
          %p853 = pneg %p358
        $region74: #{vit_forward.1} parent=59 // pred_check_branch
          %855 = sbr.rel (%p853) target = $region76
        $region75: #{vit_forward.1} parent=59 // pred_region
          %s856 = sand.u32 %s54, 1
          %s857 = scalar_lea.sflag [#allocation25], %s856
          %s858 = sand.u32 %s348, 1
          %s859 = scalar_lea.vmem [#allocation26], %s858
          %s861 = ssub.s32 16, 16
          %862 = vsyncadd %s857, %s861
          %s863 = smul.addr %s62, 16
          %s864 = scalar_lea.hbm %s12, %s863
          %s866 = sshll.u32 %s859, 4
          %s867 = int_to_ptr.vmem [resolvable:$true] %s866
          %869 = dma.hbm_to_vmem [thread:$0]  %s864, 16, %s867, %s857
        $region76: #{vit_forward.1} parent=59 // pred_fallthru
          _
        // Predicated region
        $region77: #{vit_forward.1} parent=59 // pred_check
          %p870 = pneg %p384
        $region78: #{vit_forward.1} parent=59 // pred_check_branch
          %872 = sbr.rel (%p870) target = $region80
        $region79: #{vit_forward.1} parent=59 // pred_region
          %s873 = sand.u32 %s54, 1
          %s874 = scalar_lea.sflag [#allocation28], %s873
          %s875 = sand.u32 %s374, 1
          %s876 = scalar_lea.vmem [#allocation27], %s875
          %s878 = ssub.s32 16, 16
          %879 = vsyncadd %s874, %s878
          %s880 = smul.addr %s62, 16
          %s881 = scalar_lea.hbm %s13, %s880
          %s883 = sshll.u32 %s876, 4
          %s884 = int_to_ptr.vmem [resolvable:$true] %s883
          %886 = dma.hbm_to_vmem [thread:$0]  %s881, 16, %s884, %s874
        $region80: #{vit_forward.1} parent=59 // pred_fallthru
          _
        // Predicated region
        $region81: #{vit_forward.1} parent=59 // pred_check
          %p887 = pneg %p410
        $region82: #{vit_forward.1} parent=59 // pred_check_branch
          %889 = sbr.rel (%p887) target = $region84
        $region83: #{vit_forward.1} parent=59 // pred_region
          %s890 = sand.u32 %s54, 1
          %s891 = scalar_lea.sflag [#allocation28], %s890
          %s892 = sand.u32 %s400, 1
          %s893 = scalar_lea.vmem [#allocation29], %s892
          %s895 = ssub.s32 16, 16
          %896 = vsyncadd %s891, %s895
          %s897 = smul.addr %s62, 16
          %s898 = scalar_lea.hbm %s14, %s897
          %s900 = sshll.u32 %s893, 4
          %s901 = int_to_ptr.vmem [resolvable:$true] %s900
          %903 = dma.hbm_to_vmem [thread:$0]  %s898, 16, %s901, %s891
        $region84: #{vit_forward.1} parent=59 // pred_fallthru
          _
        // Predicated region
        $region85: #{vit_forward.1} parent=59 // pred_check
          %p904 = pneg %p436
        $region86: #{vit_forward.1} parent=59 // pred_check_branch
          %906 = sbr.rel (%p904) target = $region88
        $region87: #{vit_forward.1} parent=59 // pred_region
          %s907 = sand.u32 %s54, 1
          %s908 = scalar_lea.sflag [#allocation31], %s907
          %s909 = sand.u32 %s426, 1
          %s910 = smul.addr %s909, 16
          %s911 = scalar_lea.vmem [#allocation30], %s910
          %s913 = ssub.s32 256, 256
          %914 = vsyncadd %s908, %s913
          %s915 = smul.addr %s62, 4
          %s916 = smul.addr %s915, 64
          %s917 = scalar_lea.hbm %s15, %s916
          %s918 = sshll.u32 %s911, 4
          %s919 = int_to_ptr.vmem [resolvable:$true] %s918
          %924 = dma.hbm_to_vmem [thread:$0]  %s917, 256, %s919, %s908, 64, 64, 4
        $region88: #{vit_forward.1} parent=59 // pred_fallthru
          _
        // Predicated region
        $region89: #{vit_forward.1} parent=59 // pred_check
          %p925 = pneg %p462
        $region90: #{vit_forward.1} parent=59 // pred_check_branch
          %927 = sbr.rel (%p925) target = $region92
        $region91: #{vit_forward.1} parent=59 // pred_region
          %s928 = sand.u32 %s54, 1
          %s929 = scalar_lea.sflag [#allocation31], %s928
          %s930 = sand.u32 %s452, 1
          %s931 = scalar_lea.vmem [#allocation32], %s930
          %s933 = ssub.s32 16, 16
          %934 = vsyncadd %s929, %s933
          %s935 = smul.addr %s62, 16
          %s936 = scalar_lea.hbm %s16, %s935
          %s938 = sshll.u32 %s931, 4
          %s939 = int_to_ptr.vmem [resolvable:$true] %s938
          %941 = dma.hbm_to_vmem [thread:$0]  %s936, 16, %s939, %s929
        $region92: #{vit_forward.1} parent=59 // pred_fallthru
          _
        // Predicated region
        $region93: #{vit_forward.1} parent=59 // pred_check
          %p942 = pneg %p488
        $region94: #{vit_forward.1} parent=59 // pred_check_branch
          %944 = sbr.rel (%p942) target = $region96
        $region95: #{vit_forward.1} parent=59 // pred_region
          %s945 = sand.u32 %s54, 1
          %s946 = scalar_lea.sflag [#allocation34], %s945
          %s947 = sand.u32 %s478, 1
          %s948 = smul.addr %s947, 32
          %s949 = scalar_lea.vmem [#allocation33], %s948
          %s951 = ssub.s32 512, 512
          %952 = vsyncadd %s946, %s951
          %s953 = smul.addr %s62, 8
          %s954 = smul.addr %s953, 64
          %s955 = scalar_lea.hbm %s17, %s954
          %s956 = sshll.u32 %s949, 4
          %s957 = int_to_ptr.vmem [resolvable:$true] %s956
          %962 = dma.hbm_to_vmem [thread:$0]  %s955, 512, %s957, %s946, 64, 64, 4
        $region96: #{vit_forward.1} parent=59 // pred_fallthru
          _
        // Predicated region
        $region97: #{vit_forward.1} parent=59 // pred_check
          %p963 = pneg %p514
        $region98: #{vit_forward.1} parent=59 // pred_check_branch
          %965 = sbr.rel (%p963) target = $region100
        $region99: #{vit_forward.1} parent=59 // pred_region
          %s966 = sand.u32 %s54, 1
          %s967 = scalar_lea.sflag [#allocation34], %s966
          %s968 = sand.u32 %s504, 1
          %s969 = scalar_lea.vmem [#allocation35], %s968
          %s971 = ssub.s32 16, 16
          %972 = vsyncadd %s967, %s971
          %s973 = smul.addr %s62, 16
          %s974 = scalar_lea.hbm %s18, %s973
          %s976 = sshll.u32 %s969, 4
          %s977 = int_to_ptr.vmem [resolvable:$true] %s976
          %979 = dma.hbm_to_vmem [thread:$0]  %s974, 16, %s977, %s967
        $region100: #{vit_forward.1} parent=59 // pred_fallthru
          _
        // Predicated region
        $region101: #{vit_forward.1} parent=59 // pred_check
          %p980 = pneg %p540
        $region102: #{vit_forward.1} parent=59 // pred_check_branch
          %982 = sbr.rel (%p980) target = $region104
        $region103: #{vit_forward.1} parent=59 // pred_region
          %s983 = sand.u32 %s54, 1
          %s984 = scalar_lea.sflag [#allocation37], %s983
          %s985 = sand.u32 %s530, 1
          %s986 = scalar_lea.vmem [#allocation36], %s985
          %s988 = ssub.s32 16, 16
          %989 = vsyncadd %s984, %s988
          %s990 = smul.addr %s62, 16
          %s991 = scalar_lea.hbm %s19, %s990
          %s993 = sshll.u32 %s986, 4
          %s994 = int_to_ptr.vmem [resolvable:$true] %s993
          %996 = dma.hbm_to_vmem [thread:$0]  %s991, 16, %s994, %s984
        $region104: #{vit_forward.1} parent=59 // pred_fallthru
          _
        // Predicated region
        $region105: #{vit_forward.1} parent=59 // pred_check
          %p997 = pneg %p566
        $region106: #{vit_forward.1} parent=59 // pred_check_branch
          %999 = sbr.rel (%p997) target = $region108
        $region107: #{vit_forward.1} parent=59 // pred_region
          %s1000 = sand.u32 %s54, 1
          %s1001 = scalar_lea.sflag [#allocation37], %s1000
          %s1002 = sand.u32 %s556, 1
          %s1003 = scalar_lea.vmem [#allocation38], %s1002
          %s1005 = ssub.s32 16, 16
          %1006 = vsyncadd %s1001, %s1005
          %s1007 = smul.addr %s62, 16
          %s1008 = scalar_lea.hbm %s20, %s1007
          %s1010 = sshll.u32 %s1003, 4
          %s1011 = int_to_ptr.vmem [resolvable:$true] %s1010
          %1013 = dma.hbm_to_vmem [thread:$0]  %s1008, 16, %s1011, %s1001
        $region108: #{vit_forward.1} parent=59 // pred_fallthru
          _
      $region60: #{vit_forward.1} parent=5 // pred_fallthru
        _
      %p1014 = scmp.le.s32.totalorder 1, %s54
      %p1015 = scmp.lt.s32.totalorder %s54, 3
      %p1016 = pnand %p1014, %p1015
      %p1017 = pneg %p1016
      // Predicated region
      $region109: #{vit_forward.1} parent=5 // pred_check
        _
      $region110: #{vit_forward.1} parent=5 // pred_check_branch
        %1019 = sbr.rel (%p1016) target = $region112
      $region111: #{vit_forward.1} parent=5 // pred_region
        %s1020 = ssub.s32 %s54, 1
        // Predicated region
        $region113: #{vit_forward.1} parent=111 // pred_check
          %p1021 = pneg %p92
        $region114: #{vit_forward.1} parent=111 // pred_check_branch
          %1023 = sbr.rel (%p1021) target = $region116
        $region115: #{vit_forward.1} parent=111 // pred_region
          %1024 = dma.done [#allocation7], 128
        $region116: #{vit_forward.1} parent=111 // pred_fallthru
          _
        // Predicated region
        $region117: #{vit_forward.1} parent=111 // pred_check
          %p1025 = pneg %p113
        $region118: #{vit_forward.1} parent=111 // pred_check_branch
          %1027 = sbr.rel (%p1025) target = $region120
        $region119: #{vit_forward.1} parent=111 // pred_region
          %1028 = dma.done [#allocation10], 32
        $region120: #{vit_forward.1} parent=111 // pred_fallthru
          _
        // Predicated region
        $region121: #{vit_forward.1} parent=111 // pred_check
          %p1029 = pneg %p134
        $region122: #{vit_forward.1} parent=111 // pred_check_branch
          %1031 = sbr.rel (%p1029) target = $region124
        $region123: #{vit_forward.1} parent=111 // pred_region
          %1032 = dma.done [#allocation10], 32
        $region124: #{vit_forward.1} parent=111 // pred_fallthru
          _
        // Predicated region
        $region125: #{vit_forward.1} parent=111 // pred_check
          %p1033 = pneg %p155
        $region126: #{vit_forward.1} parent=111 // pred_check_branch
          %1035 = sbr.rel (%p1033) target = $region128
        $region127: #{vit_forward.1} parent=111 // pred_region
          %1036 = dma.done [#allocation13], 1536
        $region128: #{vit_forward.1} parent=111 // pred_fallthru
          _
        // Predicated region
        $region129: #{vit_forward.1} parent=111 // pred_check
          %p1037 = pneg %p176
        $region130: #{vit_forward.1} parent=111 // pred_check_branch
          %1039 = sbr.rel (%p1037) target = $region132
        $region131: #{vit_forward.1} parent=111 // pred_region
          %1040 = dma.done [#allocation13], 16
        $region132: #{vit_forward.1} parent=111 // pred_fallthru
          _
        // Predicated region
        $region133: #{vit_forward.1} parent=111 // pred_check
          %p1041 = pneg %p197
        $region134: #{vit_forward.1} parent=111 // pred_check_branch
          %1043 = sbr.rel (%p1041) target = $region136
        $region135: #{vit_forward.1} parent=111 // pred_region
          %1044 = dma.done [#allocation16], 16
        $region136: #{vit_forward.1} parent=111 // pred_fallthru
          _
        // Predicated region
        $region137: #{vit_forward.1} parent=111 // pred_check
          %p1045 = pneg %p218
        $region138: #{vit_forward.1} parent=111 // pred_check_branch
          %1047 = sbr.rel (%p1045) target = $region140
        $region139: #{vit_forward.1} parent=111 // pred_region
          %1048 = dma.done [#allocation16], 16
        $region140: #{vit_forward.1} parent=111 // pred_fallthru
          _
        // Predicated region
        $region141: #{vit_forward.1} parent=111 // pred_check
          %p1049 = pneg %p239
        $region142: #{vit_forward.1} parent=111 // pred_check_branch
          %1051 = sbr.rel (%p1049) target = $region144
        $region143: #{vit_forward.1} parent=111 // pred_region
          %1052 = dma.done [#allocation19], 16
        $region144: #{vit_forward.1} parent=111 // pred_fallthru
          _
        // Predicated region
        $region145: #{vit_forward.1} parent=111 // pred_check
          %p1053 = pneg %p260
        $region146: #{vit_forward.1} parent=111 // pred_check_branch
          %1055 = sbr.rel (%p1053) target = $region148
        $region147: #{vit_forward.1} parent=111 // pred_region
          %1056 = dma.done [#allocation19], 128
        $region148: #{vit_forward.1} parent=111 // pred_fallthru
          _
        %s1057 = sand.u32 %s59, 1
        %s1058 = scalar_lea.sflag [#allocation22], %s1057
        %s1059 = sand.u32 %s273, 1
        %s1060 = smul.addr %s1059, 48
        %s1061 = scalar_lea.vmem [#allocation21], %s1060
        // Predicated region
        $region149: #{vit_forward.1} parent=111 // pred_check
          %p1062 = pneg %p286
        $region150: #{vit_forward.1} parent=111 // pred_check_branch
          %1064 = sbr.rel (%p1062) target = $region152
        $region151: #{vit_forward.1} parent=111 // pred_region
          %1065 = dma.done %s1058, 768
        $region152: #{vit_forward.1} parent=111 // pred_fallthru
          _
        %s1066 = sand.u32 %s59, 1
        %s1067 = scalar_lea.sflag [#allocation22], %s1066
        %s1068 = sand.u32 %s299, 1
        %s1069 = smul.addr %s1068, 3
        %s1070 = scalar_lea.vmem [#allocation23], %s1069
        // Predicated region
        $region153: #{vit_forward.1} parent=111 // pred_check
          %p1071 = pneg %p312
        $region154: #{vit_forward.1} parent=111 // pred_check_branch
          %1073 = sbr.rel (%p1071) target = $region156
        $region155: #{vit_forward.1} parent=111 // pred_region
          %1074 = dma.done %s1067, 48
        $region156: #{vit_forward.1} parent=111 // pred_fallthru
          _
        %s1075 = sand.u32 %s59, 1
        %s1076 = scalar_lea.sflag [#allocation25], %s1075
        %s1077 = sand.u32 %s325, 1
        %s1078 = smul.addr %s1077, 16
        %s1079 = scalar_lea.vmem [#allocation24], %s1078
        // Predicated region
        $region157: #{vit_forward.1} parent=111 // pred_check
          %p1080 = pneg %p338
        $region158: #{vit_forward.1} parent=111 // pred_check_branch
          %1082 = sbr.rel (%p1080) target = $region160
        $region159: #{vit_forward.1} parent=111 // pred_region
          %1083 = dma.done %s1076, 256
        $region160: #{vit_forward.1} parent=111 // pred_fallthru
          _
        %s1084 = sand.u32 %s59, 1
        %s1085 = scalar_lea.sflag [#allocation25], %s1084
        %s1086 = sand.u32 %s351, 1
        %s1087 = scalar_lea.vmem [#allocation26], %s1086
        // Predicated region
        $region161: #{vit_forward.1} parent=111 // pred_check
          %p1088 = pneg %p364
        $region162: #{vit_forward.1} parent=111 // pred_check_branch
          %1090 = sbr.rel (%p1088) target = $region164
        $region163: #{vit_forward.1} parent=111 // pred_region
          %1091 = dma.done %s1085, 16
        $region164: #{vit_forward.1} parent=111 // pred_fallthru
          _
        %s1092 = sand.u32 %s59, 1
        %s1093 = scalar_lea.sflag [#allocation28], %s1092
        %s1094 = sand.u32 %s377, 1
        %s1095 = scalar_lea.vmem [#allocation27], %s1094
        // Predicated region
        $region165: #{vit_forward.1} parent=111 // pred_check
          %p1096 = pneg %p390
        $region166: #{vit_forward.1} parent=111 // pred_check_branch
          %1098 = sbr.rel (%p1096) target = $region168
        $region167: #{vit_forward.1} parent=111 // pred_region
          %1099 = dma.done %s1093, 16
        $region168: #{vit_forward.1} parent=111 // pred_fallthru
          _
        %s1100 = sand.u32 %s59, 1
        %s1101 = scalar_lea.sflag [#allocation28], %s1100
        %s1102 = sand.u32 %s403, 1
        %s1103 = scalar_lea.vmem [#allocation29], %s1102
        // Predicated region
        $region169: #{vit_forward.1} parent=111 // pred_check
          %p1104 = pneg %p416
        $region170: #{vit_forward.1} parent=111 // pred_check_branch
          %1106 = sbr.rel (%p1104) target = $region172
        $region171: #{vit_forward.1} parent=111 // pred_region
          %1107 = dma.done %s1101, 16
        $region172: #{vit_forward.1} parent=111 // pred_fallthru
          _
        %s1108 = sand.u32 %s59, 1
        %s1109 = scalar_lea.sflag [#allocation31], %s1108
        %s1110 = sand.u32 %s429, 1
        %s1111 = smul.addr %s1110, 16
        %s1112 = scalar_lea.vmem [#allocation30], %s1111
        // Predicated region
        $region173: #{vit_forward.1} parent=111 // pred_check
          %p1113 = pneg %p442
        $region174: #{vit_forward.1} parent=111 // pred_check_branch
          %1115 = sbr.rel (%p1113) target = $region176
        $region175: #{vit_forward.1} parent=111 // pred_region
          %1116 = dma.done %s1109, 256
        $region176: #{vit_forward.1} parent=111 // pred_fallthru
          _
        %s1117 = sand.u32 %s59, 1
        %s1118 = scalar_lea.sflag [#allocation31], %s1117
        %s1119 = sand.u32 %s455, 1
        %s1120 = scalar_lea.vmem [#allocation32], %s1119
        // Predicated region
        $region177: #{vit_forward.1} parent=111 // pred_check
          %p1121 = pneg %p468
        $region178: #{vit_forward.1} parent=111 // pred_check_branch
          %1123 = sbr.rel (%p1121) target = $region180
        $region179: #{vit_forward.1} parent=111 // pred_region
          %1124 = dma.done %s1118, 16
        $region180: #{vit_forward.1} parent=111 // pred_fallthru
          _
        %s1125 = sand.u32 %s59, 1
        %s1126 = scalar_lea.sflag [#allocation34], %s1125
        %s1127 = sand.u32 %s481, 1
        %s1128 = smul.addr %s1127, 32
        %s1129 = scalar_lea.vmem [#allocation33], %s1128
        // Predicated region
        $region181: #{vit_forward.1} parent=111 // pred_check
          %p1130 = pneg %p494
        $region182: #{vit_forward.1} parent=111 // pred_check_branch
          %1132 = sbr.rel (%p1130) target = $region184
        $region183: #{vit_forward.1} parent=111 // pred_region
          %1133 = dma.done %s1126, 512
        $region184: #{vit_forward.1} parent=111 // pred_fallthru
          _
        %s1134 = sand.u32 %s59, 1
        %s1135 = scalar_lea.sflag [#allocation34], %s1134
        %s1136 = sand.u32 %s507, 1
        %s1137 = scalar_lea.vmem [#allocation35], %s1136
        // Predicated region
        $region185: #{vit_forward.1} parent=111 // pred_check
          %p1138 = pneg %p520
        $region186: #{vit_forward.1} parent=111 // pred_check_branch
          %1140 = sbr.rel (%p1138) target = $region188
        $region187: #{vit_forward.1} parent=111 // pred_region
          %1141 = dma.done %s1135, 16
        $region188: #{vit_forward.1} parent=111 // pred_fallthru
          _
        %s1142 = sand.u32 %s59, 1
        %s1143 = scalar_lea.sflag [#allocation37], %s1142
        %s1144 = sand.u32 %s533, 1
        %s1145 = scalar_lea.vmem [#allocation36], %s1144
        // Predicated region
        $region189: #{vit_forward.1} parent=111 // pred_check
          %p1146 = pneg %p546
        $region190: #{vit_forward.1} parent=111 // pred_check_branch
          %1148 = sbr.rel (%p1146) target = $region192
        $region191: #{vit_forward.1} parent=111 // pred_region
          %1149 = dma.done %s1143, 16
        $region192: #{vit_forward.1} parent=111 // pred_fallthru
          _
        %s1150 = sand.u32 %s59, 1
        %s1151 = scalar_lea.sflag [#allocation37], %s1150
        %s1152 = sand.u32 %s559, 1
        %s1153 = scalar_lea.vmem [#allocation38], %s1152
        // Predicated region
        $region193: #{vit_forward.1} parent=111 // pred_check
          %p1154 = pneg %p572
        $region194: #{vit_forward.1} parent=111 // pred_check_branch
          %1156 = sbr.rel (%p1154) target = $region196
        $region195: #{vit_forward.1} parent=111 // pred_region
          %1157 = dma.done %s1151, 16
        $region196: #{vit_forward.1} parent=111 // pred_fallthru
          _
        // Predicated region
        $region197: #{vit_forward.1} parent=111 // pred_check
          %p1158 = pneg %p593
        $region198: #{vit_forward.1} parent=111 // pred_check_branch
          %1160 = sbr.rel (%p1158) target = $region200
        $region199: #{vit_forward.1} parent=111 // pred_region
          %1161 = dma.done [#allocation40], 256
        $region200: #{vit_forward.1} parent=111 // pred_fallthru
          _
        // Predicated region
        $region201: #{vit_forward.1} parent=111 // pred_check
          %p1162 = pneg %p614
        $region202: #{vit_forward.1} parent=111 // pred_check_branch
          %1164 = sbr.rel (%p1162) target = $region204
        $region203: #{vit_forward.1} parent=111 // pred_region
          %1165 = dma.done [#allocation40], 16
        $region204: #{vit_forward.1} parent=111 // pred_fallthru
          _
        %p1166 = pneg %p92
        %p1167 = pneg %p89
        %p1168 = pneg %p113
        %p1169 = pneg %p110
        %p1170 = pneg %p134
        %p1171 = pneg %p131
        %p1172 = pneg %p155
        %p1173 = pneg %p152
        %p1174 = pneg %p176
        %p1175 = pneg %p173
        %p1176 = pneg %p197
        %p1177 = pneg %p194
        %p1178 = pneg %p218
        %p1179 = pneg %p215
        %p1180 = pneg %p239
        %p1181 = pneg %p236
        %p1182 = pneg %p260
        %p1183 = pneg %p257
        %s1184 = sand.u32 %s59, 1
        %s1185 = scalar_lea.sflag [#allocation22], %s1184
        %s1186 = sand.u32 %s273, 1
        %s1187 = smul.addr %s1186, 48
        %s1188 = scalar_lea.vmem [#allocation21], %s1187
        %p1189 = pneg %p286
        %p1190 = pneg %p283
        %s1191 = sand.u32 %s59, 1
        %s1192 = scalar_lea.sflag [#allocation22], %s1191
        %s1193 = sand.u32 %s299, 1
        %s1194 = smul.addr %s1193, 3
        %s1195 = scalar_lea.vmem [#allocation23], %s1194
        %p1196 = pneg %p312
        %p1197 = pneg %p309
        %s1198 = sand.u32 %s59, 1
        %s1199 = scalar_lea.sflag [#allocation25], %s1198
        %s1200 = sand.u32 %s325, 1
        %s1201 = smul.addr %s1200, 16
        %s1202 = scalar_lea.vmem [#allocation24], %s1201
        %p1203 = pneg %p338
        %p1204 = pneg %p335
        %s1205 = sand.u32 %s59, 1
        %s1206 = scalar_lea.sflag [#allocation25], %s1205
        %s1207 = sand.u32 %s351, 1
        %s1208 = scalar_lea.vmem [#allocation26], %s1207
        %p1209 = pneg %p364
        %p1210 = pneg %p361
        %s1211 = sand.u32 %s59, 1
        %s1212 = scalar_lea.sflag [#allocation28], %s1211
        %s1213 = sand.u32 %s377, 1
        %s1214 = scalar_lea.vmem [#allocation27], %s1213
        %p1215 = pneg %p390
        %p1216 = pneg %p387
        %s1217 = sand.u32 %s59, 1
        %s1218 = scalar_lea.sflag [#allocation28], %s1217
        %s1219 = sand.u32 %s403, 1
        %s1220 = scalar_lea.vmem [#allocation29], %s1219
        %p1221 = pneg %p416
        %p1222 = pneg %p413
        %s1223 = sand.u32 %s59, 1
        %s1224 = scalar_lea.sflag [#allocation31], %s1223
        %s1225 = sand.u32 %s429, 1
        %s1226 = smul.addr %s1225, 16
        %s1227 = scalar_lea.vmem [#allocation30], %s1226
        %p1228 = pneg %p442
        %p1229 = pneg %p439
        %s1230 = sand.u32 %s59, 1
        %s1231 = scalar_lea.sflag [#allocation31], %s1230
        %s1232 = sand.u32 %s455, 1
        %s1233 = scalar_lea.vmem [#allocation32], %s1232
        %p1234 = pneg %p468
        %p1235 = pneg %p465
        %s1236 = sand.u32 %s59, 1
        %s1237 = scalar_lea.sflag [#allocation34], %s1236
        %s1238 = sand.u32 %s481, 1
        %s1239 = smul.addr %s1238, 32
        %s1240 = scalar_lea.vmem [#allocation33], %s1239
        %p1241 = pneg %p494
        %p1242 = pneg %p491
        %s1243 = sand.u32 %s59, 1
        %s1244 = scalar_lea.sflag [#allocation34], %s1243
        %s1245 = sand.u32 %s507, 1
        %s1246 = scalar_lea.vmem [#allocation35], %s1245
        %p1247 = pneg %p520
        %p1248 = pneg %p517
        %s1249 = sand.u32 %s59, 1
        %s1250 = scalar_lea.sflag [#allocation37], %s1249
        %s1251 = sand.u32 %s533, 1
        %s1252 = scalar_lea.vmem [#allocation36], %s1251
        %p1253 = pneg %p546
        %p1254 = pneg %p543
        %s1255 = sand.u32 %s59, 1
        %s1256 = scalar_lea.sflag [#allocation37], %s1255
        %s1257 = sand.u32 %s559, 1
        %s1258 = scalar_lea.vmem [#allocation38], %s1257
        %p1259 = pneg %p572
        %p1260 = pneg %p569
        %p1261 = pneg %p593
        %p1262 = pneg %p590
        %p1263 = pneg %p614
        %p1264 = pneg %p611
        %p1265 = pneg %p640
        %p1266 = pneg %p637
        %s1267 = smul.u32 2, %s63
        %s1268 = smul.u32 2, %s63
        %p1270 = scmp.eq.s32.totalorder %s64, 0
        // Predicated region
        $region205: #{vit_forward.1} parent=111 // pred_check
          %p1271 = pneg %p1270
        $region206: #{vit_forward.1} parent=111 // pred_check_branch
          %1273 = sbr.rel (%p1271) target = $region208
        $region207: #{vit_forward.1} parent=111 // pred_region
          %v1274 = vld [vmem:[#allocation18] sm:$0x1]
          %v1276 = vlaneseq
          %v1277 = vshrl.u32 %v1276, 7
          %v1278 = vsub.s32 0, %v1277
          %v1279 = vrot.slane %v1274, %v1278
          %v1281 = vld [vmem:[#allocation20 + $0x4] sm:$0xf]
          %v1282 = vadd.f32 %v1279, %v1281
          %v1283 = vpack.c.bf16 %v1282, %v1282
          loop: start=0, step=1, limit=2
          $region209: #{vit_forward.1} parent=207 // loop_pre_header
            _
          $region210: #{vit_forward.1} parent=207 // loop_header
            %s1285 = sphi 0, %s1289
            %p1286 = scmp.ge.s32.totalorder %s1285, 2
          $region211: #{vit_forward.1} parent=207 // loop_header_branch
            %1288 = sbr.rel (%p1286) target = $region215
          $region212: #{vit_forward.1} parent=207 // loop_body
            %s1290 = smul.u32 %s1285, 2
            %s1291 = smul.addr %s1290, 2
            %s1292 = scalar_lea.vmem [#allocation6], %s1291
            %v1293 = vld [vmem:[%s1292] sm:$0xf]
            %v1294 = vunpack.c.l.bf16 %v1293
            %v1295 = vld [vmem:[#allocation9] sm:$0x3]
            %v1296 = vld [vmem:[#allocation11] sm:$0x3]
            %v1298 = vcombine.high %v1294, %v1294
            %vm1300 = vcmask 1043456
            %v1301 = vsel %vm1300, %v1294, 0.0
            %vm1302 = vcmask 519168
            %v1303 = vsel %vm1302, %v1298, 0.0
            %v1304 = vadd.f32 %v1301, %v1303
            %1305 = vadd.xlane.f32.xlu0 %v1304
            %v1306 = vpop.xlane.xlu0 %1305
            %v1307 = vrcp.pop 192.0
            %v1308 = vmul.f32 %v1306, %v1307
            %v1311 = vunpack.c.l.s4 839922192
            %v1312 = vunpack.c.0.s8 %v1311
            %v1313 = vlaneseq
            %v1314 = vshrl.u32 %v1313, 7
            %v1315 = vsub.s32 %v1312, %v1314
            %v1316 = vrot.slane %v1308, %v1315
            %v1318 = vsub.f32 %v1294, %v1316
            %v1319 = vmul.f32 %v1318, %v1318
            %v1321 = vcombine.high %v1319, %v1319
            %v1323 = vsel %vm1300, %v1319, 0.0
            %v1324 = vsel %vm1302, %v1321, 0.0
            %v1325 = vadd.f32 %v1323, %v1324
            %1326 = vadd.xlane.f32.xlu0 %v1325
            %v1327 = vpop.xlane.xlu0 %1326
            %v1328 = vmul.f32 %v1327, %v1307
            %v1329 = vadd.f32 %v1328, 1e-05
            %v1330 = vrsqrt.pop %v1329
            %v1333 = vunpack.c.l.s4 839922192
            %v1334 = vunpack.c.0.s8 %v1333
            %v1335 = vlaneseq
            %v1336 = vshrl.u32 %v1335, 7
            %v1337 = vsub.s32 %v1334, %v1336
            %v1338 = vrot.slane %v1330, %v1337
            %v1340 = vmul.f32 %v1318, %v1338
            %v1342 = vlaneseq
            %v1343 = vshrl.u32 %v1342, 7
            %v1344 = vsub.s32 0, %v1343
            %v1345 = vrot.slane %v1295, %v1344
            %v1346 = vlaneseq
            %v1347 = vshrl.u32 %v1346, 7
            %v1348 = vsub.s32 1, %v1347
            %v1349 = vrot.slane %v1295, %v1348
            %v1350 = vcombine.low %v1345, %v1349
            %v1352 = vmul.f32 %v1340, %v1350
            %v1354 = vlaneseq
            %v1355 = vshrl.u32 %v1354, 7
            %v1356 = vsub.s32 0, %v1355
            %v1357 = vrot.slane %v1296, %v1356
            %v1358 = vlaneseq
            %v1359 = vshrl.u32 %v1358, 7
            %v1360 = vsub.s32 1, %v1359
            %v1361 = vrot.slane %v1296, %v1360
            %v1362 = vcombine.low %v1357, %v1361
            %v1364 = vadd.f32 %v1352, %v1362
            %v1365 = vld [vmem:[#allocation12] sm:$0xf]
            %v1366 = vld [vmem:[#allocation12 + $0x4] sm:$0xf]
            %v1367 = vld [vmem:[#allocation12 + $0x8] sm:$0xf]
            %v1368 = vld [vmem:[#allocation12 + $0xc] sm:$0xf]
            %v1369 = vld [vmem:[#allocation12 + $0x10] sm:$0xf]
            %v1370 = vld [vmem:[#allocation12 + $0x14] sm:$0xf]
            %v1371 = vld [vmem:[#allocation12 + $0x18] sm:$0xf]
            %v1372 = vld [vmem:[#allocation12 + $0x1c] sm:$0xf]
            %v1373 = vld [vmem:[#allocation12 + $0x20] sm:$0xf]
            %v1374 = vld [vmem:[#allocation12 + $0x24] sm:$0xf]
            %v1375 = vld [vmem:[#allocation12 + $0x28] sm:$0xf]
            %v1376 = vld [vmem:[#allocation12 + $0x2c] sm:$0xf]
            %v1377 = vld [vmem:[#allocation12 + $0x30] sm:$0xf]
            %v1378 = vld [vmem:[#allocation12 + $0x34] sm:$0xf]
            %v1379 = vld [vmem:[#allocation12 + $0x38] sm:$0xf]
            %v1380 = vld [vmem:[#allocation12 + $0x3c] sm:$0xf]
            %v1381 = vld [vmem:[#allocation12 + $0x40] sm:$0xf]
            %v1382 = vld [vmem:[#allocation12 + $0x44] sm:$0xf]
            %v1383 = vld [vmem:[#allocation12 + $0x48] sm:$0xf]
            %v1384 = vld [vmem:[#allocation12 + $0x4c] sm:$0xf]
            %v1385 = vld [vmem:[#allocation12 + $0x50] sm:$0xf]
            %v1386 = vld [vmem:[#allocation12 + $0x54] sm:$0xf]
            %v1387 = vld [vmem:[#allocation12 + $0x58] sm:$0xf]
            %v1388 = vld [vmem:[#allocation12 + $0x5c] sm:$0xf]
            %v1390 = vcombine.high %v1364, %v1364
            %v1392 = vpack.c.bf16 %v1364, %v1364
            %v1393 = vpack.c.bf16 %v1390, %v1390
            %v1394 = vld [vmem:[#allocation14] sm:$0x1]
            %v1396 = vlaneseq
            %v1397 = vshrl.u32 %v1396, 7
            %v1398 = vsub.s32 0, %v1397
            %v1399 = vrot.slane %v1394, %v1398
            %v1425 = vunpack.c.l.b16 %v1365
            %v1426 = vunpack.c.l.b16 %v1366
            %v1427 = vunpack.c.l.b16 %v1367
            %v1428 = vunpack.c.l.b16 %v1368
            %v1429 = vunpack.c.l.b16 %v1369
            %v1430 = vunpack.c.l.b16 %v1370
            %v1431 = vunpack.c.l.b16 %v1371
            %v1432 = vunpack.c.l.b16 %v1372
            %v1433 = vunpack.c.l.b16 %v1373
            %v1434 = vunpack.c.l.b16 %v1374
            %v1435 = vunpack.c.l.b16 %v1375
            %v1436 = vunpack.c.l.b16 %v1376
            %v1437 = vunpack.c.l.b16 %v1377
            %v1438 = vunpack.c.l.b16 %v1378
            %v1439 = vunpack.c.l.b16 %v1379
            %v1440 = vunpack.c.l.b16 %v1380
            %v1441 = vunpack.c.l.b16 %v1381
            %v1442 = vunpack.c.l.b16 %v1382
            %v1443 = vunpack.c.l.b16 %v1383
            %v1444 = vunpack.c.l.b16 %v1384
            %v1445 = vunpack.c.l.b16 %v1385
            %v1446 = vunpack.c.l.b16 %v1386
            %v1447 = vunpack.c.l.b16 %v1387
            %v1448 = vunpack.c.l.b16 %v1388
            %v1449 = vpack.c.b16 %v1426, %v1425
            %v1450 = vpack.c.b16 %v1428, %v1427
            %v1451 = vpack.c.b16 %v1430, %v1429
            %v1452 = vpack.c.b16 %v1432, %v1431
            %v1453 = vpack.c.b16 %v1434, %v1433
            %v1454 = vpack.c.b16 %v1436, %v1435
            %v1455 = vpack.c.b16 %v1438, %v1437
            %v1456 = vpack.c.b16 %v1440, %v1439
            %v1457 = vpack.c.b16 %v1442, %v1441
            %v1458 = vpack.c.b16 %v1444, %v1443
            %v1459 = vpack.c.b16 %v1446, %v1445
            %v1460 = vpack.c.b16 %v1448, %v1447
            %vm1473 = vcmask 523264
            %v1475 = vsel %vm1473, %v1393, 0
            %1477 = vmatprep.subr.bf16.mxu0 0
            %1478 = vmatpush1.bf16.msra.mxu0 %v1449
            %1479 = vmatprep.subr.bf16.mxu0 0
            %1480 = vmatpush1.bf16.msra.mxu0 %v1450
            %1481 = vmatprep.subr.bf16.mxu0 0
            %1482 = vmatpush1.bf16.msra.mxu0 %v1451
            %1483 = vmatprep.subr.bf16.mxu0 0
            %1484 = vmatpush1.bf16.msra.mxu0 %v1452
            %1485 = vmatprep.subr.bf16.mxu0 0
            %1486 = vmatpush1.bf16.msra.mxu0 %v1453
            %1487 = vmatprep.subr.bf16.mxu0 0
            %1488 = vmatpush1.bf16.msra.mxu0 %v1454
            %1489 = vmatprep.subr.bf16.mxu0 0
            %1490 = vmatpush1.bf16.msra.mxu0 %v1455
            %1491 = vmatprep.subr.bf16.mxu0 0
            %1492 = vmatpush1.bf16.msra.mxu0 %v1456
            %1493 = vmatprep.subr.bf16.mxu0 0
            %1494 = vmatpush1.bf16.msra.mxu0 %v1457
            %1495 = vmatprep.subr.bf16.mxu0 0
            %1496 = vmatpush1.bf16.msra.mxu0 %v1458
            %1497 = vmatprep.subr.bf16.mxu0 0
            %1498 = vmatpush1.bf16.msra.mxu0 %v1459
            %1499 = vmatprep.subr.bf16.mxu0 0
            %1500 = vmatpush1.bf16.msra.mxu0 %v1460
            %1501 = vmatprep.subr.bf16.mxu0 0
            %1502 = vmatpush1.bf16.msra.mxu0 0
            %1503 = vmatprep.subr.bf16.mxu0 0
            %1504 = vmatpush1.bf16.msra.mxu0 0
            %1505 = vmatprep.subr.bf16.mxu0 0
            %1506 = vmatpush1.bf16.msra.mxu0 0
            %1507 = vmatprep.subr.bf16.mxu0 0
            %1508 = vmatpush1.bf16.msra.mxu0 0
            %1509 = vmatprep.mubr.bf16.mxu0 %v1475
            %1510 = vmatmul.mubr.bf16.gmra.mrb[0].mxu0 %v1392
            %v1511 = vpop.f32.mrb[0].mxu0
            %v1512 = vadd.f32 %v1399, %v1511
            %v1513 = vpop.f32.mrb[0].mxu0
            %v1514 = vpop.f32.mrb[0].mxu0
            %v1515 = vpop.f32.mrb[0].mxu0
            %1516 = vdwg.mxu0
            %v1517 = vld [vmem:[#allocation15] sm:$0x1]
            %v1518 = vld [vmem:[#allocation17] sm:$0x1]
            %vm1519 = vcmask 257024
            %v1520 = vsel %vm1519, %v1512, 0.0
            %1521 = vadd.xlane.f32.xlu0 %v1520
            %v1522 = vpop.xlane.xlu0 %1521
            %v1523 = vrcp.pop 32.0
            %v1524 = vmul.f32 %v1522, %v1523
            %v1525 = vsub.f32 %v1512, %v1524
            %v1526 = vmul.f32 %v1525, %v1525
            %v1527 = vsel %vm1519, %v1526, 0.0
            %1528 = vadd.xlane.f32.xlu0 %v1527
            %v1529 = vpop.xlane.xlu0 %1528
            %v1530 = vmul.f32 %v1529, %v1523
            %v1531 = vadd.f32 %v1530, 1e-05
            %v1532 = vrsqrt.pop %v1531
            %v1533 = vmul.f32 %v1525, %v1532
            %v1535 = vlaneseq
            %v1536 = vshrl.u32 %v1535, 7
            %v1537 = vsub.s32 0, %v1536
            %v1538 = vrot.slane %v1517, %v1537
            %v1540 = vmul.f32 %v1533, %v1538
            %v1542 = vlaneseq
            %v1543 = vshrl.u32 %v1542, 7
            %v1544 = vsub.s32 0, %v1543
            %v1545 = vrot.slane %v1518, %v1544
            %v1547 = vadd.f32 %v1540, %v1545
            %v1548 = vld [vmem:[#allocation20] sm:$0xf]
            %v1549 = vadd.f32 %v1547, %v1548
            %v1550 = vpack.c.bf16 %v1549, %v1549
            %s1551 = smul.addr %s1285, 4
            %s1552 = scalar_lea.vmem [#allocation2], %s1551
            %vm1553 = vcmask 254976
            %1554 = vst.msk [vmem:[%s1552] sm:$0x3] %vm1553, %v1550
            %v1556 = vunpack.c.l.b16 %v1283
            %v1557 = vpack.c.b16 %v1556, %v1556
            %v1558 = vrot.slane %v1557, 6
            %vm1560 = vcmask 257026
            %1561 = vst.msk [vmem:[%s1552] sm:$0xc] %vm1560, %v1558
          $region213: #{vit_forward.1} parent=207 // loop_footer
            %s1289 = sadd.s32 1, %s1285
          $region214: #{vit_forward.1} parent=207 // loop_footer_branch
            %1284 = sbr.rel target = $region210
          $region215: #{vit_forward.1} parent=207 // loop_exit
            _
        $region208: #{vit_forward.1} parent=111 // pred_fallthru
          _
        loop: start=0, step=1, limit=2
        $region216: #{vit_forward.1} parent=111 // loop_pre_header
          _
        $region217: #{vit_forward.1} parent=111 // loop_header
          %s1563 = sphi 0, %s1567
          %p1564 = scmp.ge.s32.totalorder %s1563, 2
        $region218: #{vit_forward.1} parent=111 // loop_header_branch
          %1566 = sbr.rel (%p1564) target = $region222
        $region219: #{vit_forward.1} parent=111 // loop_body
          %s1568 = smul.addr %s1563, 4
          %s1569 = scalar_lea.vmem [#allocation2], %s1568
          %v1570 = vld [vmem:[%s1569] sm:$0xf]
          %v1571 = vunpack.c.l.bf16 %v1570
          %v1572 = vld [vmem:[%s1061] sm:$0xf]
          %v1573 = vld [vmem:[%s1061 + $0x4] sm:$0xf]
          %v1574 = vld [vmem:[%s1061 + $0x8] sm:$0xf]
          %v1575 = vld [vmem:[%s1061 + $0xc] sm:$0xf]
          %v1576 = vld [vmem:[%s1070] sm:$0x1]
          %v1578 = vlaneseq
          %v1579 = vshrl.u32 %v1578, 7
          %v1580 = vsub.s32 0, %v1579
          %v1581 = vrot.slane %v1576, %v1580
          %v1587 = vunpack.c.l.b16 %v1572
          %v1588 = vunpack.c.l.b16 %v1573
          %v1589 = vunpack.c.l.b16 %v1574
          %v1590 = vunpack.c.l.b16 %v1575
          %v1591 = vpack.c.b16 %v1588, %v1587
          %v1592 = vpack.c.b16 %v1590, %v1589
          %vm1595 = vcmask 261120
          %v1597 = vsel %vm1595, %v1570, 0
          %1599 = vmatprep.subr.bf16.mxu0 0
          %1600 = vmatpush1.bf16.msra.mxu0 %v1591
          %1601 = vmatprep.subr.bf16.mxu0 0
          %1602 = vmatpush1.bf16.msra.mxu0 %v1592
          %1603 = vmatprep.subr.bf16.mxu0 0
          %1604 = vmatpush1.bf16.msra.mxu0 0
          %1605 = vmatprep.subr.bf16.mxu0 0
          %1606 = vmatpush1.bf16.msra.mxu0 0
          %1607 = vmatprep.subr.bf16.mxu0 0
          %1608 = vmatpush1.bf16.msra.mxu0 0
          %1609 = vmatprep.subr.bf16.mxu0 0
          %1610 = vmatpush1.bf16.msra.mxu0 0
          %1611 = vmatprep.subr.bf16.mxu0 0
          %1612 = vmatpush1.bf16.msra.mxu0 0
          %1613 = vmatprep.subr.bf16.mxu0 0
          %1614 = vmatpush1.bf16.msra.mxu0 0
          %1615 = vmatprep.subr.bf16.mxu0 0
          %1616 = vmatpush1.bf16.msra.mxu0 0
          %1617 = vmatprep.subr.bf16.mxu0 0
          %1618 = vmatpush1.bf16.msra.mxu0 0
          %1619 = vmatprep.subr.bf16.mxu0 0
          %1620 = vmatpush1.bf16.msra.mxu0 0
          %1621 = vmatprep.subr.bf16.mxu0 0
          %1622 = vmatpush1.bf16.msra.mxu0 0
          %1623 = vmatprep.subr.bf16.mxu0 0
          %1624 = vmatpush1.bf16.msra.mxu0 0
          %1625 = vmatprep.subr.bf16.mxu0 0
          %1626 = vmatpush1.bf16.msra.mxu0 0
          %1627 = vmatprep.subr.bf16.mxu0 0
          %1628 = vmatpush1.bf16.msra.mxu0 0
          %1629 = vmatprep.subr.bf16.mxu0 0
          %1630 = vmatpush1.bf16.msra.mxu0 0
          %1631 = vmatprep.mubr.bf16.mxu0 0
          %1632 = vmatmul.mubr.bf16.gmra.mrb[0].mxu0 %v1597
          %v1633 = vpop.f32.mrb[0].mxu0
          %v1634 = vadd.f32 %v1581, %v1633
          %v1635 = vpop.f32.mrb[0].mxu0
          %v1636 = vpop.f32.mrb[0].mxu0
          %v1637 = vpop.f32.mrb[0].mxu0
          %1638 = vdwg.mxu0
          %v1639 = vmul.f32 %v1634, 0.35355338
          %s1640 = scalar_lea.vmem %s1061, 16 [#allocation21]
          %v1641 = vld [vmem:[%s1640] sm:$0xf]
          %v1642 = vld [vmem:[%s1640 + $0x4] sm:$0xf]
          %v1643 = vld [vmem:[%s1640 + $0x8] sm:$0xf]
          %v1644 = vld [vmem:[%s1640 + $0xc] sm:$0xf]
          %s1645 = scalar_lea.vmem %s1070, 1 [#allocation23]
          %v1646 = vld [vmem:[%s1645] sm:$0x1]
          %v1648 = vlaneseq
          %v1649 = vshrl.u32 %v1648, 7
          %v1650 = vsub.s32 0, %v1649
          %v1651 = vrot.slane %v1646, %v1650
          %v1657 = vunpack.c.l.b16 %v1641
          %v1658 = vunpack.c.l.b16 %v1642
          %v1659 = vunpack.c.l.b16 %v1643
          %v1660 = vunpack.c.l.b16 %v1644
          %v1661 = vpack.c.b16 %v1658, %v1657
          %v1662 = vpack.c.b16 %v1660, %v1659
          %1665 = vmatprep.subr.bf16.mxu0 0
          %1666 = vmatpush1.bf16.msra.mxu0 %v1661
          %1667 = vmatprep.subr.bf16.mxu0 0
          %1668 = vmatpush1.bf16.msra.mxu0 %v1662
          %1669 = vmatprep.subr.bf16.mxu0 0
          %1670 = vmatpush1.bf16.msra.mxu0 0
          %1671 = vmatprep.subr.bf16.mxu0 0
          %1672 = vmatpush1.bf16.msra.mxu0 0
          %1673 = vmatprep.subr.bf16.mxu0 0
          %1674 = vmatpush1.bf16.msra.mxu0 0
          %1675 = vmatprep.subr.bf16.mxu0 0
          %1676 = vmatpush1.bf16.msra.mxu0 0
          %1677 = vmatprep.subr.bf16.mxu0 0
          %1678 = vmatpush1.bf16.msra.mxu0 0
          %1679 = vmatprep.subr.bf16.mxu0 0
          %1680 = vmatpush1.bf16.msra.mxu0 0
          %1681 = vmatprep.subr.bf16.mxu0 0
          %1682 = vmatpush1.bf16.msra.mxu0 0
          %1683 = vmatprep.subr.bf16.mxu0 0
          %1684 = vmatpush1.bf16.msra.mxu0 0
          %1685 = vmatprep.subr.bf16.mxu0 0
          %1686 = vmatpush1.bf16.msra.mxu0 0
          %1687 = vmatprep.subr.bf16.mxu0 0
          %1688 = vmatpush1.bf16.msra.mxu0 0
          %1689 = vmatprep.subr.bf16.mxu0 0
          %1690 = vmatpush1.bf16.msra.mxu0 0
          %1691 = vmatprep.subr.bf16.mxu0 0
          %1692 = vmatpush1.bf16.msra.mxu0 0
          %1693 = vmatprep.subr.bf16.mxu0 0
          %1694 = vmatpush1.bf16.msra.mxu0 0
          %1695 = vmatprep.subr.bf16.mxu0 0
          %1696 = vmatpush1.bf16.msra.mxu0 0
          %1697 = vmatprep.mubr.bf16.mxu0 0
          %1698 = vmatmul.mubr.bf16.gmra.mrb[0].mxu0 %v1597
          %v1699 = vpop.f32.mrb[0].mxu0
          %v1700 = vadd.f32 %v1651, %v1699
          %v1701 = vpop.f32.mrb[0].mxu0
          %v1702 = vpop.f32.mrb[0].mxu0
          %v1703 = vpop.f32.mrb[0].mxu0
          %1704 = vdwg.mxu0
          %s1705 = scalar_lea.vmem %s1061, 32 [#allocation21]
          %v1706 = vld [vmem:[%s1705] sm:$0xf]
          %v1707 = vld [vmem:[%s1705 + $0x4] sm:$0xf]
          %v1708 = vld [vmem:[%s1705 + $0x8] sm:$0xf]
          %v1709 = vld [vmem:[%s1705 + $0xc] sm:$0xf]
          %s1710 = scalar_lea.vmem %s1070, 2 [#allocation23]
          %v1711 = vld [vmem:[%s1710] sm:$0x1]
          %v1713 = vlaneseq
          %v1714 = vshrl.u32 %v1713, 7
          %v1715 = vsub.s32 0, %v1714
          %v1716 = vrot.slane %v1711, %v1715
          %v1722 = vunpack.c.l.b16 %v1706
          %v1723 = vunpack.c.l.b16 %v1707
          %v1724 = vunpack.c.l.b16 %v1708
          %v1725 = vunpack.c.l.b16 %v1709
          %v1726 = vpack.c.b16 %v1723, %v1722
          %v1727 = vpack.c.b16 %v1725, %v1724
          %1730 = vmatprep.subr.bf16.mxu0 0
          %1731 = vmatpush1.bf16.msra.mxu0 %v1726
          %1732 = vmatprep.subr.bf16.mxu0 0
          %1733 = vmatpush1.bf16.msra.mxu0 %v1727
          %1734 = vmatprep.subr.bf16.mxu0 0
          %1735 = vmatpush1.bf16.msra.mxu0 0
          %1736 = vmatprep.subr.bf16.mxu0 0
          %1737 = vmatpush1.bf16.msra.mxu0 0
          %1738 = vmatprep.subr.bf16.mxu0 0
          %1739 = vmatpush1.bf16.msra.mxu0 0
          %1740 = vmatprep.subr.bf16.mxu0 0
          %1741 = vmatpush1.bf16.msra.mxu0 0
          %1742 = vmatprep.subr.bf16.mxu0 0
          %1743 = vmatpush1.bf16.msra.mxu0 0
          %1744 = vmatprep.subr.bf16.mxu0 0
          %1745 = vmatpush1.bf16.msra.mxu0 0
          %1746 = vmatprep.subr.bf16.mxu0 0
          %1747 = vmatpush1.bf16.msra.mxu0 0
          %1748 = vmatprep.subr.bf16.mxu0 0
          %1749 = vmatpush1.bf16.msra.mxu0 0
          %1750 = vmatprep.subr.bf16.mxu0 0
          %1751 = vmatpush1.bf16.msra.mxu0 0
          %1752 = vmatprep.subr.bf16.mxu0 0
          %1753 = vmatpush1.bf16.msra.mxu0 0
          %1754 = vmatprep.subr.bf16.mxu0 0
          %1755 = vmatpush1.bf16.msra.mxu0 0
          %1756 = vmatprep.subr.bf16.mxu0 0
          %1757 = vmatpush1.bf16.msra.mxu0 0
          %1758 = vmatprep.subr.bf16.mxu0 0
          %1759 = vmatpush1.bf16.msra.mxu0 0
          %1760 = vmatprep.subr.bf16.mxu0 0
          %1761 = vmatpush1.bf16.msra.mxu0 0
          %1762 = vmatprep.mubr.bf16.mxu0 0
          %1763 = vmatmul.mubr.bf16.gmra.mrb[0].mxu0 %v1597
          %v1764 = vpop.f32.mrb[0].mxu0
          %v1765 = vadd.f32 %v1716, %v1764
          %v1766 = vpop.f32.mrb[0].mxu0
          %v1767 = vpop.f32.mrb[0].mxu0
          %v1768 = vpop.f32.mrb[0].mxu0
          %1769 = vdwg.mxu0
          %v1770 = vpack.c.bf16 %v1639, %v1639
          %vm1771 = vcmask 60416
          %1772 = vst.msk [vmem:[#allocation3] sm:$0xf] %vm1771, %v1770
          %v1773 = vpack.c.bf16 %v1700, %v1700
          %1774 = vst.msk [vmem:[#allocation4] sm:$0xf] %vm1771, %v1773
          %v1775 = vpack.c.bf16 %v1765, %v1765
          %1776 = vst.msk [vmem:[#allocation5] sm:$0xf] %vm1771, %v1775
          %v1778 = vunpack.c.l.b16 %v1770
          %v1779 = vpack.c.b16 %v1778, %v1778
          %1780 = vrot.lane.b32.xlu0 %v1779, 120
          %v1781 = vpop.permute.xlu0 %1780
          %s1783 = scalar_lea.vmem [#allocation3], 4
          %1784 = vst.msk [vmem:[%s1783] sm:$0xf] %vm1771, %v1781
          %v1786 = vunpack.c.l.b16 %v1773
          %v1787 = vpack.c.b16 %v1786, %v1786
          %1788 = vrot.lane.b32.xlu0 %v1787, 120
          %v1789 = vpop.permute.xlu0 %1788
          %s1791 = scalar_lea.vmem [#allocation4], 4
          %1792 = vst.msk [vmem:[%s1791] sm:$0xf] %vm1771, %v1789
          %v1794 = vunpack.c.l.b16 %v1775
          %v1795 = vpack.c.b16 %v1794, %v1794
          %1796 = vrot.lane.b32.xlu0 %v1795, 120
          %v1797 = vpop.permute.xlu0 %1796
          %s1799 = scalar_lea.vmem [#allocation5], 4
          %1800 = vst.msk [vmem:[%s1799] sm:$0xf] %vm1771, %v1797
          %1801 = vrot.lane.b32.xlu0 %v1779, 112
          %v1802 = vpop.permute.xlu0 %1801
          %s1804 = scalar_lea.vmem [#allocation3], 8
          %1805 = vst.msk [vmem:[%s1804] sm:$0xf] %vm1771, %v1802
          %1806 = vrot.lane.b32.xlu0 %v1787, 112
          %v1807 = vpop.permute.xlu0 %1806
          %s1809 = scalar_lea.vmem [#allocation4], 8
          %1810 = vst.msk [vmem:[%s1809] sm:$0xf] %vm1771, %v1807
          %1811 = vrot.lane.b32.xlu0 %v1795, 112
          %v1812 = vpop.permute.xlu0 %1811
          %s1814 = scalar_lea.vmem [#allocation5], 8
          %1815 = vst.msk [vmem:[%s1814] sm:$0xf] %vm1771, %v1812
          %1816 = vrot.lane.b32.xlu0 %v1779, 104
          %v1817 = vpop.permute.xlu0 %1816
          %s1819 = scalar_lea.vmem [#allocation3], 12
          %1820 = vst.msk [vmem:[%s1819] sm:$0xf] %vm1771, %v1817
          %1821 = vrot.lane.b32.xlu0 %v1787, 104
          %v1822 = vpop.permute.xlu0 %1821
          %s1824 = scalar_lea.vmem [#allocation4], 12
          %1825 = vst.msk [vmem:[%s1824] sm:$0xf] %vm1771, %v1822
          %1826 = vrot.lane.b32.xlu0 %v1795, 104
          %v1827 = vpop.permute.xlu0 %1826
          %s1829 = scalar_lea.vmem [#allocation5], 12
          %1830 = vst.msk [vmem:[%s1829] sm:$0xf] %vm1771, %v1827
          %v1831 = vld [vmem:[#allocation3] sm:$0xf]
          %v1832 = vld [vmem:[#allocation3 + $0x4] sm:$0xf]
          %v1833 = vld [vmem:[#allocation3 + $0x8] sm:$0xf]
          %v1834 = vld [vmem:[#allocation3 + $0xc] sm:$0xf]
          %v1835 = vld [vmem:[#allocation4] sm:$0xf]
          %v1836 = vld [vmem:[#allocation4 + $0x4] sm:$0xf]
          %v1837 = vld [vmem:[#allocation4 + $0x8] sm:$0xf]
          %v1838 = vld [vmem:[#allocation4 + $0xc] sm:$0xf]
          %vm1839 = vcmask 64512
          %v1841 = vsel %vm1839, %v1831, 0
          %v1844 = vsel %vm1839, %v1835, 0
          %1846 = vmatprep.subr.bf16.mxu0 0
          %1847 = vmatpush1.bf16.xpose.msra.mxu0 %v1844
          %1848 = vmatprep.subr.bf16.mxu0 0
          %1849 = vmatpush1.bf16.xpose.msra.mxu0 0
          %1850 = vmatprep.subr.bf16.mxu0 0
          %1851 = vmatpush1.bf16.xpose.msra.mxu0 0
          %1852 = vmatprep.subr.bf16.mxu0 0
          %1853 = vmatpush1.bf16.xpose.msra.mxu0 0
          %1854 = vmatprep.subr.bf16.mxu0 0
          %1855 = vmatpush1.bf16.xpose.msra.mxu0 0
          %1856 = vmatprep.subr.bf16.mxu0 0
          %1857 = vmatpush1.bf16.xpose.msra.mxu0 0
          %1858 = vmatprep.subr.bf16.mxu0 0
          %1859 = vmatpush1.bf16.xpose.msra.mxu0 0
          %1860 = vmatprep.subr.bf16.mxu0 0
          %1861 = vmatpush1.bf16.xpose.msra.mxu0 0
          %1862 = vmatprep.subr.bf16.mxu0 0
          %1863 = vmatpush1.bf16.xpose.msra.mxu0 0
          %1864 = vmatprep.subr.bf16.mxu0 0
          %1865 = vmatpush1.bf16.xpose.msra.mxu0 0
          %1866 = vmatprep.subr.bf16.mxu0 0
          %1867 = vmatpush1.bf16.xpose.msra.mxu0 0
          %1868 = vmatprep.subr.bf16.mxu0 0
          %1869 = vmatpush1.bf16.xpose.msra.mxu0 0
          %1870 = vmatprep.subr.bf16.mxu0 0
          %1871 = vmatpush1.bf16.xpose.msra.mxu0 0
          %1872 = vmatprep.subr.bf16.mxu0 0
          %1873 = vmatpush1.bf16.xpose.msra.mxu0 0
          %1874 = vmatprep.subr.bf16.mxu0 0
          %1875 = vmatpush1.bf16.xpose.msra.mxu0 0
          %1876 = vmatprep.subr.bf16.mxu0 0
          %1877 = vmatpush1.bf16.xpose.msra.mxu0 0
          %1878 = vmatprep.mubr.bf16.mxu0 0
          %1879 = vmatmul.mubr.bf16.gmra.mrb[0].mxu0 %v1841
          %v1880 = vpop.f32.mrb[0].mxu0
          %v1881 = vadd.f32 0.0, %v1880
          %v1882 = vpop.f32.mrb[0].mxu0
          %v1883 = vpop.f32.mrb[0].mxu0
          %v1884 = vpop.f32.mrb[0].mxu0
          %1885 = vdwg.mxu0
          %v1887 = vsel %vm1839, %v1832, 0
          %v1890 = vsel %vm1839, %v1836, 0
          %1892 = vmatprep.subr.bf16.mxu0 0
          %1893 = vmatpush1.bf16.xpose.msra.mxu0 %v1890
          %1894 = vmatprep.subr.bf16.mxu0 0
          %1895 = vmatpush1.bf16.xpose.msra.mxu0 0
          %1896 = vmatprep.subr.bf16.mxu0 0
          %1897 = vmatpush1.bf16.xpose.msra.mxu0 0
          %1898 = vmatprep.subr.bf16.mxu0 0
          %1899 = vmatpush1.bf16.xpose.msra.mxu0 0
          %1900 = vmatprep.subr.bf16.mxu0 0
          %1901 = vmatpush1.bf16.xpose.msra.mxu0 0
          %1902 = vmatprep.subr.bf16.mxu0 0
          %1903 = vmatpush1.bf16.xpose.msra.mxu0 0
          %1904 = vmatprep.subr.bf16.mxu0 0
          %1905 = vmatpush1.bf16.xpose.msra.mxu0 0
          %1906 = vmatprep.subr.bf16.mxu0 0
          %1907 = vmatpush1.bf16.xpose.msra.mxu0 0
          %1908 = vmatprep.subr.bf16.mxu0 0
          %1909 = vmatpush1.bf16.xpose.msra.mxu0 0
          %1910 = vmatprep.subr.bf16.mxu0 0
          %1911 = vmatpush1.bf16.xpose.msra.mxu0 0
          %1912 = vmatprep.subr.bf16.mxu0 0
          %1913 = vmatpush1.bf16.xpose.msra.mxu0 0
          %1914 = vmatprep.subr.bf16.mxu0 0
          %1915 = vmatpush1.bf16.xpose.msra.mxu0 0
          %1916 = vmatprep.subr.bf16.mxu0 0
          %1917 = vmatpush1.bf16.xpose.msra.mxu0 0
          %1918 = vmatprep.subr.bf16.mxu0 0
          %1919 = vmatpush1.bf16.xpose.msra.mxu0 0
          %1920 = vmatprep.subr.bf16.mxu0 0
          %1921 = vmatpush1.bf16.xpose.msra.mxu0 0
          %1922 = vmatprep.subr.bf16.mxu0 0
          %1923 = vmatpush1.bf16.xpose.msra.mxu0 0
          %1924 = vmatprep.mubr.bf16.mxu0 0
          %1925 = vmatmul.mubr.bf16.gmra.mrb[0].mxu0 %v1887
          %v1926 = vpop.f32.mrb[0].mxu0
          %v1927 = vadd.f32 0.0, %v1926
          %v1928 = vpop.f32.mrb[0].mxu0
          %v1929 = vpop.f32.mrb[0].mxu0
          %v1930 = vpop.f32.mrb[0].mxu0
          %1931 = vdwg.mxu0
          %v1933 = vsel %vm1839, %v1833, 0
          %v1936 = vsel %vm1839, %v1837, 0
          %1938 = vmatprep.subr.bf16.mxu0 0
          %1939 = vmatpush1.bf16.xpose.msra.mxu0 %v1936
          %1940 = vmatprep.subr.bf16.mxu0 0
          %1941 = vmatpush1.bf16.xpose.msra.mxu0 0
          %1942 = vmatprep.subr.bf16.mxu0 0
          %1943 = vmatpush1.bf16.xpose.msra.mxu0 0
          %1944 = vmatprep.subr.bf16.mxu0 0
          %1945 = vmatpush1.bf16.xpose.msra.mxu0 0
          %1946 = vmatprep.subr.bf16.mxu0 0
          %1947 = vmatpush1.bf16.xpose.msra.mxu0 0
          %1948 = vmatprep.subr.bf16.mxu0 0
          %1949 = vmatpush1.bf16.xpose.msra.mxu0 0
          %1950 = vmatprep.subr.bf16.mxu0 0
          %1951 = vmatpush1.bf16.xpose.msra.mxu0 0
          %1952 = vmatprep.subr.bf16.mxu0 0
          %1953 = vmatpush1.bf16.xpose.msra.mxu0 0
          %1954 = vmatprep.subr.bf16.mxu0 0
          %1955 = vmatpush1.bf16.xpose.msra.mxu0 0
          %1956 = vmatprep.subr.bf16.mxu0 0
          %1957 = vmatpush1.bf16.xpose.msra.mxu0 0
          %1958 = vmatprep.subr.bf16.mxu0 0
          %1959 = vmatpush1.bf16.xpose.msra.mxu0 0
          %1960 = vmatprep.subr.bf16.mxu0 0
          %1961 = vmatpush1.bf16.xpose.msra.mxu0 0
          %1962 = vmatprep.subr.bf16.mxu0 0
          %1963 = vmatpush1.bf16.xpose.msra.mxu0 0
          %1964 = vmatprep.subr.bf16.mxu0 0
          %1965 = vmatpush1.bf16.xpose.msra.mxu0 0
          %1966 = vmatprep.subr.bf16.mxu0 0
          %1967 = vmatpush1.bf16.xpose.msra.mxu0 0
          %1968 = vmatprep.subr.bf16.mxu0 0
          %1969 = vmatpush1.bf16.xpose.msra.mxu0 0
          %1970 = vmatprep.mubr.bf16.mxu0 0
          %1971 = vmatmul.mubr.bf16.gmra.mrb[0].mxu0 %v1933
          %v1972 = vpop.f32.mrb[0].mxu0
          %v1973 = vadd.f32 0.0, %v1972
          %v1974 = vpop.f32.mrb[0].mxu0
          %v1975 = vpop.f32.mrb[0].mxu0
          %v1976 = vpop.f32.mrb[0].mxu0
          %1977 = vdwg.mxu0
          %v1979 = vsel %vm1839, %v1834, 0
          %v1982 = vsel %vm1839, %v1838, 0
          %1984 = vmatprep.subr.bf16.mxu0 0
          %1985 = vmatpush1.bf16.xpose.msra.mxu0 %v1982
          %1986 = vmatprep.subr.bf16.mxu0 0
          %1987 = vmatpush1.bf16.xpose.msra.mxu0 0
          %1988 = vmatprep.subr.bf16.mxu0 0
          %1989 = vmatpush1.bf16.xpose.msra.mxu0 0
          %1990 = vmatprep.subr.bf16.mxu0 0
          %1991 = vmatpush1.bf16.xpose.msra.mxu0 0
          %1992 = vmatprep.subr.bf16.mxu0 0
          %1993 = vmatpush1.bf16.xpose.msra.mxu0 0
          %1994 = vmatprep.subr.bf16.mxu0 0
          %1995 = vmatpush1.bf16.xpose.msra.mxu0 0
          %1996 = vmatprep.subr.bf16.mxu0 0
          %1997 = vmatpush1.bf16.xpose.msra.mxu0 0
          %1998 = vmatprep.subr.bf16.mxu0 0
          %1999 = vmatpush1.bf16.xpose.msra.mxu0 0
          %2000 = vmatprep.subr.bf16.mxu0 0
          %2001 = vmatpush1.bf16.xpose.msra.mxu0 0
          %2002 = vmatprep.subr.bf16.mxu0 0
          %2003 = vmatpush1.bf16.xpose.msra.mxu0 0
          %2004 = vmatprep.subr.bf16.mxu0 0
          %2005 = vmatpush1.bf16.xpose.msra.mxu0 0
          %2006 = vmatprep.subr.bf16.mxu0 0
          %2007 = vmatpush1.bf16.xpose.msra.mxu0 0
          %2008 = vmatprep.subr.bf16.mxu0 0
          %2009 = vmatpush1.bf16.xpose.msra.mxu0 0
          %2010 = vmatprep.subr.bf16.mxu0 0
          %2011 = vmatpush1.bf16.xpose.msra.mxu0 0
          %2012 = vmatprep.subr.bf16.mxu0 0
          %2013 = vmatpush1.bf16.xpose.msra.mxu0 0
          %2014 = vmatprep.subr.bf16.mxu0 0
          %2015 = vmatpush1.bf16.xpose.msra.mxu0 0
          %2016 = vmatprep.mubr.bf16.mxu0 0
          %2017 = vmatmul.mubr.bf16.gmra.mrb[0].mxu0 %v1979
          %v2018 = vpop.f32.mrb[0].mxu0
          %v2019 = vadd.f32 0.0, %v2018
          %v2020 = vpop.f32.mrb[0].mxu0
          %v2021 = vpop.f32.mrb[0].mxu0
          %v2022 = vpop.f32.mrb[0].mxu0
          %2023 = vdwg.mxu0
          %v2024 = vlaneseq
          %v2025 = vand.u32 %v2024, 127
          %vm2026 = vcmp.ge.s32.totalorder %v2025, 5
          %v2027 = vsel %vm2026, -1e+30, %v1881
          %v2028 = vsel %vm2026, -1e+30, %v1927
          %v2029 = vsel %vm2026, -1e+30, %v1973
          %v2030 = vsel %vm2026, -1e+30, %v2019
          %v2031 = vsel %vm1839, %v2027, -inf
          %2032 = vmax.xlane.f32.xlu0 %v2031
          %v2033 = vpop.xlane.xlu0 %2032
          %v2034 = vsel %vm1839, %v2028, -inf
          %2035 = vmax.xlane.f32.xlu0 %v2034
          %v2036 = vpop.xlane.xlu0 %2035
          %v2037 = vsel %vm1839, %v2029, -inf
          %2038 = vmax.xlane.f32.xlu0 %v2037
          %v2039 = vpop.xlane.xlu0 %2038
          %v2040 = vsel %vm1839, %v2030, -inf
          %2041 = vmax.xlane.f32.xlu0 %v2040
          %v2042 = vpop.xlane.xlu0 %2041
          %v2043 = vsub.f32 %v2027, %v2033
          %v2044 = vsub.f32 %v2028, %v2036
          %v2045 = vsub.f32 %v2029, %v2039
          %v2046 = vsub.f32 %v2030, %v2042
          %v2047 = vmul.f32 %v2043, 1.442695
          %v2048 = vpow.pop %v2047
          %v2049 = vmul.f32 %v2044, 1.442695
          %v2050 = vpow.pop %v2049
          %v2051 = vmul.f32 %v2045, 1.442695
          %v2052 = vpow.pop %v2051
          %v2053 = vmul.f32 %v2046, 1.442695
          %v2054 = vpow.pop %v2053
          %v2055 = vsel %vm1839, %v2048, 0.0
          %2056 = vadd.xlane.f32.xlu0 %v2055
          %v2057 = vpop.xlane.xlu0 %2056
          %v2058 = vsel %vm1839, %v2050, 0.0
          %2059 = vadd.xlane.f32.xlu0 %v2058
          %v2060 = vpop.xlane.xlu0 %2059
          %v2061 = vsel %vm1839, %v2052, 0.0
          %2062 = vadd.xlane.f32.xlu0 %v2061
          %v2063 = vpop.xlane.xlu0 %2062
          %v2064 = vsel %vm1839, %v2054, 0.0
          %2065 = vadd.xlane.f32.xlu0 %v2064
          %v2066 = vpop.xlane.xlu0 %2065
          %v2067 = vrcp.pop %v2057
          %v2068 = vmul.f32 %v2048, %v2067
          %v2069 = vrcp.pop %v2060
          %v2070 = vmul.f32 %v2050, %v2069
          %v2071 = vrcp.pop %v2063
          %v2072 = vmul.f32 %v2052, %v2071
          %v2073 = vrcp.pop %v2066
          %v2074 = vmul.f32 %v2054, %v2073
          %v2075 = vpack.c.bf16 %v2068, %v2068
          %v2076 = vpack.c.bf16 %v2070, %v2070
          %v2077 = vpack.c.bf16 %v2072, %v2072
          %v2078 = vpack.c.bf16 %v2074, %v2074
          %v2079 = vld [vmem:[#allocation5] sm:$0xf]
          %v2080 = vld [vmem:[#allocation5 + $0x4] sm:$0xf]
          %v2081 = vld [vmem:[#allocation5 + $0x8] sm:$0xf]
          %v2082 = vld [vmem:[#allocation5 + $0xc] sm:$0xf]
          %v2084 = vsel %vm1839, %v2075, 0
          %vm2086 = vcmask 1043456
          %v2088 = vsel %vm2086, %v2079, 0
          %2090 = vmatprep.subr.bf16.mxu0 0
          %2091 = vmatpush1.bf16.msra.mxu0 %v2088
          %2092 = vmatprep.subr.bf16.mxu0 0
          %2093 = vmatpush1.bf16.msra.mxu0 0
          %2094 = vmatprep.subr.bf16.mxu0 0
          %2095 = vmatpush1.bf16.msra.mxu0 0
          %2096 = vmatprep.subr.bf16.mxu0 0
          %2097 = vmatpush1.bf16.msra.mxu0 0
          %2098 = vmatprep.subr.bf16.mxu0 0
          %2099 = vmatpush1.bf16.msra.mxu0 0
          %2100 = vmatprep.subr.bf16.mxu0 0
          %2101 = vmatpush1.bf16.msra.mxu0 0
          %2102 = vmatprep.subr.bf16.mxu0 0
          %2103 = vmatpush1.bf16.msra.mxu0 0
          %2104 = vmatprep.subr.bf16.mxu0 0
          %2105 = vmatpush1.bf16.msra.mxu0 0
          %2106 = vmatprep.subr.bf16.mxu0 0
          %2107 = vmatpush1.bf16.msra.mxu0 0
          %2108 = vmatprep.subr.bf16.mxu0 0
          %2109 = vmatpush1.bf16.msra.mxu0 0
          %2110 = vmatprep.subr.bf16.mxu0 0
          %2111 = vmatpush1.bf16.msra.mxu0 0
          %2112 = vmatprep.subr.bf16.mxu0 0
          %2113 = vmatpush1.bf16.msra.mxu0 0
          %2114 = vmatprep.subr.bf16.mxu0 0
          %2115 = vmatpush1.bf16.msra.mxu0 0
          %2116 = vmatprep.subr.bf16.mxu0 0
          %2117 = vmatpush1.bf16.msra.mxu0 0
          %2118 = vmatprep.subr.bf16.mxu0 0
          %2119 = vmatpush1.bf16.msra.mxu0 0
          %2120 = vmatprep.subr.bf16.mxu0 0
          %2121 = vmatpush1.bf16.msra.mxu0 0
          %2122 = vmatprep.mubr.bf16.mxu0 0
          %2123 = vmatmul.mubr.bf16.gmra.mrb[0].mxu0 %v2084
          %v2124 = vpop.f32.mrb[0].mxu0
          %v2125 = vadd.f32 0.0, %v2124
          %v2126 = vpop.f32.mrb[0].mxu0
          %v2127 = vpop.f32.mrb[0].mxu0
          %v2128 = vpop.f32.mrb[0].mxu0
          %2129 = vdwg.mxu0
          %v2131 = vsel %vm1839, %v2076, 0
          %v2134 = vsel %vm2086, %v2080, 0
          %2136 = vmatprep.subr.bf16.mxu0 0
          %2137 = vmatpush1.bf16.msra.mxu0 %v2134
          %2138 = vmatprep.subr.bf16.mxu0 0
          %2139 = vmatpush1.bf16.msra.mxu0 0
          %2140 = vmatprep.subr.bf16.mxu0 0
          %2141 = vmatpush1.bf16.msra.mxu0 0
          %2142 = vmatprep.subr.bf16.mxu0 0
          %2143 = vmatpush1.bf16.msra.mxu0 0
          %2144 = vmatprep.subr.bf16.mxu0 0
          %2145 = vmatpush1.bf16.msra.mxu0 0
          %2146 = vmatprep.subr.bf16.mxu0 0
          %2147 = vmatpush1.bf16.msra.mxu0 0
          %2148 = vmatprep.subr.bf16.mxu0 0
          %2149 = vmatpush1.bf16.msra.mxu0 0
          %2150 = vmatprep.subr.bf16.mxu0 0
          %2151 = vmatpush1.bf16.msra.mxu0 0
          %2152 = vmatprep.subr.bf16.mxu0 0
          %2153 = vmatpush1.bf16.msra.mxu0 0
          %2154 = vmatprep.subr.bf16.mxu0 0
          %2155 = vmatpush1.bf16.msra.mxu0 0
          %2156 = vmatprep.subr.bf16.mxu0 0
          %2157 = vmatpush1.bf16.msra.mxu0 0
          %2158 = vmatprep.subr.bf16.mxu0 0
          %2159 = vmatpush1.bf16.msra.mxu0 0
          %2160 = vmatprep.subr.bf16.mxu0 0
          %2161 = vmatpush1.bf16.msra.mxu0 0
          %2162 = vmatprep.subr.bf16.mxu0 0
          %2163 = vmatpush1.bf16.msra.mxu0 0
          %2164 = vmatprep.subr.bf16.mxu0 0
          %2165 = vmatpush1.bf16.msra.mxu0 0
          %2166 = vmatprep.subr.bf16.mxu0 0
          %2167 = vmatpush1.bf16.msra.mxu0 0
          %2168 = vmatprep.mubr.bf16.mxu0 0
          %2169 = vmatmul.mubr.bf16.gmra.mrb[0].mxu0 %v2131
          %v2170 = vpop.f32.mrb[0].mxu0
          %v2171 = vadd.f32 0.0, %v2170
          %v2172 = vpop.f32.mrb[0].mxu0
          %v2173 = vpop.f32.mrb[0].mxu0
          %v2174 = vpop.f32.mrb[0].mxu0
          %2175 = vdwg.mxu0
          %v2177 = vsel %vm1839, %v2077, 0
          %v2180 = vsel %vm2086, %v2081, 0
          %2182 = vmatprep.subr.bf16.mxu0 0
          %2183 = vmatpush1.bf16.msra.mxu0 %v2180
          %2184 = vmatprep.subr.bf16.mxu0 0
          %2185 = vmatpush1.bf16.msra.mxu0 0
          %2186 = vmatprep.subr.bf16.mxu0 0
          %2187 = vmatpush1.bf16.msra.mxu0 0
          %2188 = vmatprep.subr.bf16.mxu0 0
          %2189 = vmatpush1.bf16.msra.mxu0 0
          %2190 = vmatprep.subr.bf16.mxu0 0
          %2191 = vmatpush1.bf16.msra.mxu0 0
          %2192 = vmatprep.subr.bf16.mxu0 0
          %2193 = vmatpush1.bf16.msra.mxu0 0
          %2194 = vmatprep.subr.bf16.mxu0 0
          %2195 = vmatpush1.bf16.msra.mxu0 0
          %2196 = vmatprep.subr.bf16.mxu0 0
          %2197 = vmatpush1.bf16.msra.mxu0 0
          %2198 = vmatprep.subr.bf16.mxu0 0
          %2199 = vmatpush1.bf16.msra.mxu0 0
          %2200 = vmatprep.subr.bf16.mxu0 0
          %2201 = vmatpush1.bf16.msra.mxu0 0
          %2202 = vmatprep.subr.bf16.mxu0 0
          %2203 = vmatpush1.bf16.msra.mxu0 0
          %2204 = vmatprep.subr.bf16.mxu0 0
          %2205 = vmatpush1.bf16.msra.mxu0 0
          %2206 = vmatprep.subr.bf16.mxu0 0
          %2207 = vmatpush1.bf16.msra.mxu0 0
          %2208 = vmatprep.subr.bf16.mxu0 0
          %2209 = vmatpush1.bf16.msra.mxu0 0
          %2210 = vmatprep.subr.bf16.mxu0 0
          %2211 = vmatpush1.bf16.msra.mxu0 0
          %2212 = vmatprep.subr.bf16.mxu0 0
          %2213 = vmatpush1.bf16.msra.mxu0 0
          %2214 = vmatprep.mubr.bf16.mxu0 0
          %2215 = vmatmul.mubr.bf16.gmra.mrb[0].mxu0 %v2177
          %v2216 = vpop.f32.mrb[0].mxu0
          %v2217 = vadd.f32 0.0, %v2216
          %v2218 = vpop.f32.mrb[0].mxu0
          %v2219 = vpop.f32.mrb[0].mxu0
          %v2220 = vpop.f32.mrb[0].mxu0
          %2221 = vdwg.mxu0
          %v2223 = vsel %vm1839, %v2078, 0
          %v2226 = vsel %vm2086, %v2082, 0
          %2228 = vmatprep.subr.bf16.mxu0 0
          %2229 = vmatpush1.bf16.msra.mxu0 %v2226
          %2230 = vmatprep.subr.bf16.mxu0 0
          %2231 = vmatpush1.bf16.msra.mxu0 0
          %2232 = vmatprep.subr.bf16.mxu0 0
          %2233 = vmatpush1.bf16.msra.mxu0 0
          %2234 = vmatprep.subr.bf16.mxu0 0
          %2235 = vmatpush1.bf16.msra.mxu0 0
          %2236 = vmatprep.subr.bf16.mxu0 0
          %2237 = vmatpush1.bf16.msra.mxu0 0
          %2238 = vmatprep.subr.bf16.mxu0 0
          %2239 = vmatpush1.bf16.msra.mxu0 0
          %2240 = vmatprep.subr.bf16.mxu0 0
          %2241 = vmatpush1.bf16.msra.mxu0 0
          %2242 = vmatprep.subr.bf16.mxu0 0
          %2243 = vmatpush1.bf16.msra.mxu0 0
          %2244 = vmatprep.subr.bf16.mxu0 0
          %2245 = vmatpush1.bf16.msra.mxu0 0
          %2246 = vmatprep.subr.bf16.mxu0 0
          %2247 = vmatpush1.bf16.msra.mxu0 0
          %2248 = vmatprep.subr.bf16.mxu0 0
          %2249 = vmatpush1.bf16.msra.mxu0 0
          %2250 = vmatprep.subr.bf16.mxu0 0
          %2251 = vmatpush1.bf16.msra.mxu0 0
          %2252 = vmatprep.subr.bf16.mxu0 0
          %2253 = vmatpush1.bf16.msra.mxu0 0
          %2254 = vmatprep.subr.bf16.mxu0 0
          %2255 = vmatpush1.bf16.msra.mxu0 0
          %2256 = vmatprep.subr.bf16.mxu0 0
          %2257 = vmatpush1.bf16.msra.mxu0 0
          %2258 = vmatprep.subr.bf16.mxu0 0
          %2259 = vmatpush1.bf16.msra.mxu0 0
          %2260 = vmatprep.mubr.bf16.mxu0 0
          %2261 = vmatmul.mubr.bf16.gmra.mrb[0].mxu0 %v2223
          %v2262 = vpop.f32.mrb[0].mxu0
          %v2263 = vadd.f32 0.0, %v2262
          %v2264 = vpop.f32.mrb[0].mxu0
          %v2265 = vpop.f32.mrb[0].mxu0
          %v2266 = vpop.f32.mrb[0].mxu0
          %2267 = vdwg.mxu0
          %v2268 = vpack.c.bf16 %v2125, %v2125
          %v2269 = vpack.c.bf16 %v2171, %v2171
          %v2270 = vpack.c.bf16 %v2217, %v2217
          %v2271 = vpack.c.bf16 %v2263, %v2263
          %v2272 = vld [vmem:[%s1079] sm:$0xf]
          %v2273 = vld [vmem:[%s1079 + $0x4] sm:$0xf]
          %v2274 = vld [vmem:[%s1079 + $0x8] sm:$0xf]
          %v2275 = vld [vmem:[%s1079 + $0xc] sm:$0xf]
          %v2277 = vsel %vm1839, %v2268, 0
          %v2280 = vsel %vm2086, %v2272, 0
          %2282 = vmatprep.subr.bf16.mxu0 0
          %2283 = vmatpush1.bf16.msra.mxu0 %v2280
          %2284 = vmatprep.subr.bf16.mxu0 0
          %2285 = vmatpush1.bf16.msra.mxu0 0
          %2286 = vmatprep.subr.bf16.mxu0 0
          %2287 = vmatpush1.bf16.msra.mxu0 0
          %2288 = vmatprep.subr.bf16.mxu0 0
          %2289 = vmatpush1.bf16.msra.mxu0 0
          %2290 = vmatprep.subr.bf16.mxu0 0
          %2291 = vmatpush1.bf16.msra.mxu0 0
          %2292 = vmatprep.subr.bf16.mxu0 0
          %2293 = vmatpush1.bf16.msra.mxu0 0
          %2294 = vmatprep.subr.bf16.mxu0 0
          %2295 = vmatpush1.bf16.msra.mxu0 0
          %2296 = vmatprep.subr.bf16.mxu0 0
          %2297 = vmatpush1.bf16.msra.mxu0 0
          %2298 = vmatprep.subr.bf16.mxu0 0
          %2299 = vmatpush1.bf16.msra.mxu0 0
          %2300 = vmatprep.subr.bf16.mxu0 0
          %2301 = vmatpush1.bf16.msra.mxu0 0
          %2302 = vmatprep.subr.bf16.mxu0 0
          %2303 = vmatpush1.bf16.msra.mxu0 0
          %2304 = vmatprep.subr.bf16.mxu0 0
          %2305 = vmatpush1.bf16.msra.mxu0 0
          %2306 = vmatprep.subr.bf16.mxu0 0
          %2307 = vmatpush1.bf16.msra.mxu0 0
          %2308 = vmatprep.subr.bf16.mxu0 0
          %2309 = vmatpush1.bf16.msra.mxu0 0
          %2310 = vmatprep.subr.bf16.mxu0 0
          %2311 = vmatpush1.bf16.msra.mxu0 0
          %2312 = vmatprep.subr.bf16.mxu0 0
          %2313 = vmatpush1.bf16.msra.mxu0 0
          %2314 = vmatprep.mubr.bf16.mxu0 0
          %2315 = vmatmul.mubr.bf16.gmra.mrb[0].mxu0 %v2277
          %v2316 = vpop.f32.mrb[0].mxu0
          %v2317 = vadd.f32 0.0, %v2316
          %v2318 = vpop.f32.mrb[0].mxu0
          %v2319 = vpop.f32.mrb[0].mxu0
          %v2320 = vpop.f32.mrb[0].mxu0
          %2321 = vdwg.mxu0
          %v2323 = vsel %vm1839, %v2269, 0
          %v2326 = vsel %vm2086, %v2273, 0
          %2328 = vmatprep.subr.bf16.mxu0 0
          %2329 = vmatpush1.bf16.msra.mxu0 %v2326
          %2330 = vmatprep.subr.bf16.mxu0 0
          %2331 = vmatpush1.bf16.msra.mxu0 0
          %2332 = vmatprep.subr.bf16.mxu0 0
          %2333 = vmatpush1.bf16.msra.mxu0 0
          %2334 = vmatprep.subr.bf16.mxu0 0
          %2335 = vmatpush1.bf16.msra.mxu0 0
          %2336 = vmatprep.subr.bf16.mxu0 0
          %2337 = vmatpush1.bf16.msra.mxu0 0
          %2338 = vmatprep.subr.bf16.mxu0 0
          %2339 = vmatpush1.bf16.msra.mxu0 0
          %2340 = vmatprep.subr.bf16.mxu0 0
          %2341 = vmatpush1.bf16.msra.mxu0 0
          %2342 = vmatprep.subr.bf16.mxu0 0
          %2343 = vmatpush1.bf16.msra.mxu0 0
          %2344 = vmatprep.subr.bf16.mxu0 0
          %2345 = vmatpush1.bf16.msra.mxu0 0
          %2346 = vmatprep.subr.bf16.mxu0 0
          %2347 = vmatpush1.bf16.msra.mxu0 0
          %2348 = vmatprep.subr.bf16.mxu0 0
          %2349 = vmatpush1.bf16.msra.mxu0 0
          %2350 = vmatprep.subr.bf16.mxu0 0
          %2351 = vmatpush1.bf16.msra.mxu0 0
          %2352 = vmatprep.subr.bf16.mxu0 0
          %2353 = vmatpush1.bf16.msra.mxu0 0
          %2354 = vmatprep.subr.bf16.mxu0 0
          %2355 = vmatpush1.bf16.msra.mxu0 0
          %2356 = vmatprep.subr.bf16.mxu0 0
          %2357 = vmatpush1.bf16.msra.mxu0 0
          %2358 = vmatprep.subr.bf16.mxu0 0
          %2359 = vmatpush1.bf16.msra.mxu0 0
          %2360 = vmatprep.mubr.bf16.mxu0 0
          %2361 = vmatmul.mubr.bf16.gmra.mrb[0].mxu0 %v2323
          %v2362 = vpop.f32.mrb[0].mxu0
          %v2363 = vadd.f32 0.0, %v2362
          %v2364 = vpop.f32.mrb[0].mxu0
          %v2365 = vpop.f32.mrb[0].mxu0
          %v2366 = vpop.f32.mrb[0].mxu0
          %2367 = vdwg.mxu0
          %v2369 = vsel %vm1839, %v2270, 0
          %v2372 = vsel %vm2086, %v2274, 0
          %2374 = vmatprep.subr.bf16.mxu0 0
          %2375 = vmatpush1.bf16.msra.mxu0 %v2372
          %2376 = vmatprep.subr.bf16.mxu0 0
          %2377 = vmatpush1.bf16.msra.mxu0 0
          %2378 = vmatprep.subr.bf16.mxu0 0
          %2379 = vmatpush1.bf16.msra.mxu0 0
          %2380 = vmatprep.subr.bf16.mxu0 0
          %2381 = vmatpush1.bf16.msra.mxu0 0
          %2382 = vmatprep.subr.bf16.mxu0 0
          %2383 = vmatpush1.bf16.msra.mxu0 0
          %2384 = vmatprep.subr.bf16.mxu0 0
          %2385 = vmatpush1.bf16.msra.mxu0 0
          %2386 = vmatprep.subr.bf16.mxu0 0
          %2387 = vmatpush1.bf16.msra.mxu0 0
          %2388 = vmatprep.subr.bf16.mxu0 0
          %2389 = vmatpush1.bf16.msra.mxu0 0
          %2390 = vmatprep.subr.bf16.mxu0 0
          %2391 = vmatpush1.bf16.msra.mxu0 0
          %2392 = vmatprep.subr.bf16.mxu0 0
          %2393 = vmatpush1.bf16.msra.mxu0 0
          %2394 = vmatprep.subr.bf16.mxu0 0
          %2395 = vmatpush1.bf16.msra.mxu0 0
          %2396 = vmatprep.subr.bf16.mxu0 0
          %2397 = vmatpush1.bf16.msra.mxu0 0
          %2398 = vmatprep.subr.bf16.mxu0 0
          %2399 = vmatpush1.bf16.msra.mxu0 0
          %2400 = vmatprep.subr.bf16.mxu0 0
          %2401 = vmatpush1.bf16.msra.mxu0 0
          %2402 = vmatprep.subr.bf16.mxu0 0
          %2403 = vmatpush1.bf16.msra.mxu0 0
          %2404 = vmatprep.subr.bf16.mxu0 0
          %2405 = vmatpush1.bf16.msra.mxu0 0
          %2406 = vmatprep.mubr.bf16.mxu0 0
          %2407 = vmatmul.mubr.bf16.gmra.mrb[0].mxu0 %v2369
          %v2408 = vpop.f32.mrb[0].mxu0
          %v2409 = vadd.f32 0.0, %v2408
          %v2410 = vpop.f32.mrb[0].mxu0
          %v2411 = vpop.f32.mrb[0].mxu0
          %v2412 = vpop.f32.mrb[0].mxu0
          %2413 = vdwg.mxu0
          %v2415 = vsel %vm1839, %v2271, 0
          %v2418 = vsel %vm2086, %v2275, 0
          %2420 = vmatprep.subr.bf16.mxu0 0
          %2421 = vmatpush1.bf16.msra.mxu0 %v2418
          %2422 = vmatprep.subr.bf16.mxu0 0
          %2423 = vmatpush1.bf16.msra.mxu0 0
          %2424 = vmatprep.subr.bf16.mxu0 0
          %2425 = vmatpush1.bf16.msra.mxu0 0
          %2426 = vmatprep.subr.bf16.mxu0 0
          %2427 = vmatpush1.bf16.msra.mxu0 0
          %2428 = vmatprep.subr.bf16.mxu0 0
          %2429 = vmatpush1.bf16.msra.mxu0 0
          %2430 = vmatprep.subr.bf16.mxu0 0
          %2431 = vmatpush1.bf16.msra.mxu0 0
          %2432 = vmatprep.subr.bf16.mxu0 0
          %2433 = vmatpush1.bf16.msra.mxu0 0
          %2434 = vmatprep.subr.bf16.mxu0 0
          %2435 = vmatpush1.bf16.msra.mxu0 0
          %2436 = vmatprep.subr.bf16.mxu0 0
          %2437 = vmatpush1.bf16.msra.mxu0 0
          %2438 = vmatprep.subr.bf16.mxu0 0
          %2439 = vmatpush1.bf16.msra.mxu0 0
          %2440 = vmatprep.subr.bf16.mxu0 0
          %2441 = vmatpush1.bf16.msra.mxu0 0
          %2442 = vmatprep.subr.bf16.mxu0 0
          %2443 = vmatpush1.bf16.msra.mxu0 0
          %2444 = vmatprep.subr.bf16.mxu0 0
          %2445 = vmatpush1.bf16.msra.mxu0 0
          %2446 = vmatprep.subr.bf16.mxu0 0
          %2447 = vmatpush1.bf16.msra.mxu0 0
          %2448 = vmatprep.subr.bf16.mxu0 0
          %2449 = vmatpush1.bf16.msra.mxu0 0
          %2450 = vmatprep.subr.bf16.mxu0 0
          %2451 = vmatpush1.bf16.msra.mxu0 0
          %2452 = vmatprep.mubr.bf16.mxu0 0
          %2453 = vmatmul.mubr.bf16.gmra.mrb[0].mxu0 %v2415
          %v2454 = vpop.f32.mrb[0].mxu0
          %v2455 = vadd.f32 0.0, %v2454
          %v2456 = vpop.f32.mrb[0].mxu0
          %v2457 = vpop.f32.mrb[0].mxu0
          %v2458 = vpop.f32.mrb[0].mxu0
          %2459 = vdwg.mxu0
          %v2460 = vsel %vm1595, %v2317, 0.0
          %v2461 = vsel %vm1595, %v2363, 0.0
          %v2462 = vadd.f32 %v2460, %v2461
          %v2463 = vsel %vm1595, %v2409, 0.0
          %v2464 = vadd.f32 %v2462, %v2463
          %v2465 = vsel %vm1595, %v2455, 0.0
          %v2466 = vadd.f32 %v2464, %v2465
          %v2467 = vld [vmem:[%s1087] sm:$0x1]
          %v2469 = vlaneseq
          %v2470 = vshrl.u32 %v2469, 7
          %v2471 = vsub.s32 0, %v2470
          %v2472 = vrot.slane %v2467, %v2471
          %v2474 = vadd.f32 %v2466, %v2472
          %v2475 = vadd.f32 %v1571, %v2474
          %v2476 = vld [vmem:[%s1095] sm:$0x1]
          %v2477 = vld [vmem:[%s1103] sm:$0x1]
          %v2478 = vsel %vm1595, %v2475, 0.0
          %2479 = vadd.xlane.f32.xlu0 %v2478
          %v2480 = vpop.xlane.xlu0 %2479
          %v2481 = vrcp.pop 32.0
          %v2482 = vmul.f32 %v2480, %v2481
          %v2483 = vsub.f32 %v2475, %v2482
          %v2484 = vmul.f32 %v2483, %v2483
          %v2485 = vsel %vm1595, %v2484, 0.0
          %2486 = vadd.xlane.f32.xlu0 %v2485
          %v2487 = vpop.xlane.xlu0 %2486
          %v2488 = vmul.f32 %v2487, %v2481
          %v2489 = vadd.f32 %v2488, 1e-05
          %v2490 = vrsqrt.pop %v2489
          %v2491 = vmul.f32 %v2483, %v2490
          %v2493 = vlaneseq
          %v2494 = vshrl.u32 %v2493, 7
          %v2495 = vsub.s32 0, %v2494
          %v2496 = vrot.slane %v2476, %v2495
          %v2498 = vmul.f32 %v2491, %v2496
          %v2500 = vlaneseq
          %v2501 = vshrl.u32 %v2500, 7
          %v2502 = vsub.s32 0, %v2501
          %v2503 = vrot.slane %v2477, %v2502
          %v2505 = vadd.f32 %v2498, %v2503
          %v2506 = vld [vmem:[%s1112] sm:$0xf]
          %v2507 = vld [vmem:[%s1112 + $0x4] sm:$0xf]
          %v2508 = vld [vmem:[%s1112 + $0x8] sm:$0xf]
          %v2509 = vld [vmem:[%s1112 + $0xc] sm:$0xf]
          %v2510 = vpack.c.bf16 %v2505, %v2505
          %v2511 = vld [vmem:[%s1120] sm:$0x1]
          %v2513 = vlaneseq
          %v2514 = vshrl.u32 %v2513, 7
          %v2515 = vsub.s32 0, %v2514
          %v2516 = vrot.slane %v2511, %v2515
          %v2522 = vunpack.c.l.b16 %v2506
          %v2523 = vunpack.c.l.b16 %v2507
          %v2524 = vunpack.c.l.b16 %v2508
          %v2525 = vunpack.c.l.b16 %v2509
          %v2526 = vpack.c.b16 %v2523, %v2522
          %v2527 = vpack.c.b16 %v2525, %v2524
          %v2531 = vsel %vm1595, %v2510, 0
          %2533 = vmatprep.subr.bf16.mxu0 0
          %2534 = vmatpush1.bf16.msra.mxu0 %v2526
          %2535 = vmatprep.subr.bf16.mxu0 0
          %2536 = vmatpush1.bf16.msra.mxu0 %v2527
          %2537 = vmatprep.subr.bf16.mxu0 0
          %2538 = vmatpush1.bf16.msra.mxu0 0
          %2539 = vmatprep.subr.bf16.mxu0 0
          %2540 = vmatpush1.bf16.msra.mxu0 0
          %2541 = vmatprep.subr.bf16.mxu0 0
          %2542 = vmatpush1.bf16.msra.mxu0 0
          %2543 = vmatprep.subr.bf16.mxu0 0
          %2544 = vmatpush1.bf16.msra.mxu0 0
          %2545 = vmatprep.subr.bf16.mxu0 0
          %2546 = vmatpush1.bf16.msra.mxu0 0
          %2547 = vmatprep.subr.bf16.mxu0 0
          %2548 = vmatpush1.bf16.msra.mxu0 0
          %2549 = vmatprep.subr.bf16.mxu0 0
          %2550 = vmatpush1.bf16.msra.mxu0 0
          %2551 = vmatprep.subr.bf16.mxu0 0
          %2552 = vmatpush1.bf16.msra.mxu0 0
          %2553 = vmatprep.subr.bf16.mxu0 0
          %2554 = vmatpush1.bf16.msra.mxu0 0
          %2555 = vmatprep.subr.bf16.mxu0 0
          %2556 = vmatpush1.bf16.msra.mxu0 0
          %2557 = vmatprep.subr.bf16.mxu0 0
          %2558 = vmatpush1.bf16.msra.mxu0 0
          %2559 = vmatprep.subr.bf16.mxu0 0
          %2560 = vmatpush1.bf16.msra.mxu0 0
          %2561 = vmatprep.subr.bf16.mxu0 0
          %2562 = vmatpush1.bf16.msra.mxu0 0
          %2563 = vmatprep.subr.bf16.mxu0 0
          %2564 = vmatpush1.bf16.msra.mxu0 0
          %2565 = vmatprep.mubr.bf16.mxu0 0
          %2566 = vmatmul.mubr.bf16.gmra.mrb[0].mxu0 %v2531
          %v2567 = vpop.f32.mrb[0].mxu0
          %v2568 = vadd.f32 %v2516, %v2567
          %v2569 = vpop.f32.mrb[0].mxu0
          %v2570 = vpop.f32.mrb[0].mxu0
          %v2571 = vpop.f32.mrb[0].mxu0
          %2572 = vdwg.mxu0
          %v2573 = vmax.f32 %v2568, 0.0
          %v2574 = vld [vmem:[%s1129] sm:$0xf]
          %v2575 = vld [vmem:[%s1129 + $0x4] sm:$0xf]
          %v2576 = vld [vmem:[%s1129 + $0x8] sm:$0xf]
          %v2577 = vld [vmem:[%s1129 + $0xc] sm:$0xf]
          %v2578 = vld [vmem:[%s1129 + $0x10] sm:$0xf]
          %v2579 = vld [vmem:[%s1129 + $0x14] sm:$0xf]
          %v2580 = vld [vmem:[%s1129 + $0x18] sm:$0xf]
          %v2581 = vld [vmem:[%s1129 + $0x1c] sm:$0xf]
          %v2582 = vpack.c.bf16 %v2573, %v2573
          %v2583 = vld [vmem:[%s1137] sm:$0x1]
          %v2585 = vlaneseq
          %v2586 = vshrl.u32 %v2585, 7
          %v2587 = vsub.s32 0, %v2586
          %v2588 = vrot.slane %v2583, %v2587
          %v2598 = vunpack.c.l.b16 %v2574
          %v2599 = vunpack.c.l.b16 %v2575
          %v2600 = vunpack.c.l.b16 %v2576
          %v2601 = vunpack.c.l.b16 %v2577
          %v2602 = vunpack.c.l.b16 %v2578
          %v2603 = vunpack.c.l.b16 %v2579
          %v2604 = vunpack.c.l.b16 %v2580
          %v2605 = vunpack.c.l.b16 %v2581
          %v2606 = vpack.c.b16 %v2599, %v2598
          %v2607 = vpack.c.b16 %v2601, %v2600
          %v2608 = vpack.c.b16 %v2603, %v2602
          %v2609 = vpack.c.b16 %v2605, %v2604
          %vm2614 = vcmask 523264
          %v2616 = vsel %vm2614, %v2582, 0
          %2618 = vmatprep.subr.bf16.mxu0 0
          %2619 = vmatpush1.bf16.msra.mxu0 %v2606
          %2620 = vmatprep.subr.bf16.mxu0 0
          %2621 = vmatpush1.bf16.msra.mxu0 %v2607
          %2622 = vmatprep.subr.bf16.mxu0 0
          %2623 = vmatpush1.bf16.msra.mxu0 %v2608
          %2624 = vmatprep.subr.bf16.mxu0 0
          %2625 = vmatpush1.bf16.msra.mxu0 %v2609
          %2626 = vmatprep.subr.bf16.mxu0 0
          %2627 = vmatpush1.bf16.msra.mxu0 0
          %2628 = vmatprep.subr.bf16.mxu0 0
          %2629 = vmatpush1.bf16.msra.mxu0 0
          %2630 = vmatprep.subr.bf16.mxu0 0
          %2631 = vmatpush1.bf16.msra.mxu0 0
          %2632 = vmatprep.subr.bf16.mxu0 0
          %2633 = vmatpush1.bf16.msra.mxu0 0
          %2634 = vmatprep.subr.bf16.mxu0 0
          %2635 = vmatpush1.bf16.msra.mxu0 0
          %2636 = vmatprep.subr.bf16.mxu0 0
          %2637 = vmatpush1.bf16.msra.mxu0 0
          %2638 = vmatprep.subr.bf16.mxu0 0
          %2639 = vmatpush1.bf16.msra.mxu0 0
          %2640 = vmatprep.subr.bf16.mxu0 0
          %2641 = vmatpush1.bf16.msra.mxu0 0
          %2642 = vmatprep.subr.bf16.mxu0 0
          %2643 = vmatpush1.bf16.msra.mxu0 0
          %2644 = vmatprep.subr.bf16.mxu0 0
          %2645 = vmatpush1.bf16.msra.mxu0 0
          %2646 = vmatprep.subr.bf16.mxu0 0
          %2647 = vmatpush1.bf16.msra.mxu0 0
          %2648 = vmatprep.subr.bf16.mxu0 0
          %2649 = vmatpush1.bf16.msra.mxu0 0
          %2650 = vmatprep.mubr.bf16.mxu0 0
          %2651 = vmatmul.mubr.bf16.gmra.mrb[0].mxu0 %v2616
          %v2652 = vpop.f32.mrb[0].mxu0
          %v2653 = vadd.f32 %v2588, %v2652
          %v2654 = vpop.f32.mrb[0].mxu0
          %v2655 = vpop.f32.mrb[0].mxu0
          %v2656 = vpop.f32.mrb[0].mxu0
          %2657 = vdwg.mxu0
          %v2658 = vadd.f32 %v2505, %v2653
          %v2659 = vld [vmem:[%s1145] sm:$0x1]
          %v2660 = vld [vmem:[%s1153] sm:$0x1]
          %v2661 = vsel %vm1595, %v2658, 0.0
          %2662 = vadd.xlane.f32.xlu0 %v2661
          %v2663 = vpop.xlane.xlu0 %2662
          %v2664 = vmul.f32 %v2663, %v2481
          %v2665 = vsub.f32 %v2658, %v2664
          %v2666 = vmul.f32 %v2665, %v2665
          %v2667 = vsel %vm1595, %v2666, 0.0
          %2668 = vadd.xlane.f32.xlu0 %v2667
          %v2669 = vpop.xlane.xlu0 %2668
          %v2670 = vmul.f32 %v2669, %v2481
          %v2671 = vadd.f32 %v2670, 1e-05
          %v2672 = vrsqrt.pop %v2671
          %v2673 = vmul.f32 %v2665, %v2672
          %v2675 = vlaneseq
          %v2676 = vshrl.u32 %v2675, 7
          %v2677 = vsub.s32 0, %v2676
          %v2678 = vrot.slane %v2659, %v2677
          %v2680 = vmul.f32 %v2673, %v2678
          %v2682 = vlaneseq
          %v2683 = vshrl.u32 %v2682, 7
          %v2684 = vsub.s32 0, %v2683
          %v2685 = vrot.slane %v2660, %v2684
          %v2687 = vadd.f32 %v2680, %v2685
          %v2688 = vpack.c.bf16 %v2687, %v2687
          %vm2689 = vcmask 257024
          %2690 = vst.msk [vmem:[%s1569] sm:$0xf] %vm2689, %v2688
          %p2691 = scmp.eq.s32.totalorder %s64, 1
          // Predicated region
          $region223: #{vit_forward.1} parent=219 // pred_check
            %p2692 = pneg %p2691
          $region224: #{vit_forward.1} parent=219 // pred_check_branch
            %2694 = sbr.rel (%p2692) target = $region226
          $region225: #{vit_forward.1} parent=219 // pred_region
            %v2695 = vld [vmem:[#allocation39] sm:$0xf]
            %v2696 = vld [vmem:[#allocation39 + $0x4] sm:$0xf]
            %v2697 = vld [vmem:[#allocation39 + $0x8] sm:$0xf]
            %v2698 = vld [vmem:[#allocation39 + $0xc] sm:$0xf]
            %v2699 = vld [vmem:[#allocation41] sm:$0x1]
            %v2701 = vlaneseq
            %v2702 = vshrl.u32 %v2701, 7
            %v2703 = vsub.s32 0, %v2702
            %v2704 = vrot.slane %v2699, %v2703
            %v2710 = vunpack.c.l.b16 %v2695
            %v2711 = vunpack.c.l.b16 %v2696
            %v2712 = vunpack.c.l.b16 %v2697
            %v2713 = vunpack.c.l.b16 %v2698
            %v2714 = vpack.c.b16 %v2711, %v2710
            %v2715 = vpack.c.b16 %v2713, %v2712
            %v2719 = vsel %vm1595, %v2688, 0
            %2721 = vmatprep.subr.bf16.mxu0 0
            %2722 = vmatpush1.bf16.msra.mxu0 %v2714
            %2723 = vmatprep.subr.bf16.mxu0 0
            %2724 = vmatpush1.bf16.msra.mxu0 %v2715
            %2725 = vmatprep.subr.bf16.mxu0 0
            %2726 = vmatpush1.bf16.msra.mxu0 0
            %2727 = vmatprep.subr.bf16.mxu0 0
            %2728 = vmatpush1.bf16.msra.mxu0 0
            %2729 = vmatprep.subr.bf16.mxu0 0
            %2730 = vmatpush1.bf16.msra.mxu0 0
            %2731 = vmatprep.subr.bf16.mxu0 0
            %2732 = vmatpush1.bf16.msra.mxu0 0
            %2733 = vmatprep.subr.bf16.mxu0 0
            %2734 = vmatpush1.bf16.msra.mxu0 0
            %2735 = vmatprep.subr.bf16.mxu0 0
            %2736 = vmatpush1.bf16.msra.mxu0 0
            %2737 = vmatprep.subr.bf16.mxu0 0
            %2738 = vmatpush1.bf16.msra.mxu0 0
            %2739 = vmatprep.subr.bf16.mxu0 0
            %2740 = vmatpush1.bf16.msra.mxu0 0
            %2741 = vmatprep.subr.bf16.mxu0 0
            %2742 = vmatpush1.bf16.msra.mxu0 0
            %2743 = vmatprep.subr.bf16.mxu0 0
            %2744 = vmatpush1.bf16.msra.mxu0 0
            %2745 = vmatprep.subr.bf16.mxu0 0
            %2746 = vmatpush1.bf16.msra.mxu0 0
            %2747 = vmatprep.subr.bf16.mxu0 0
            %2748 = vmatpush1.bf16.msra.mxu0 0
            %2749 = vmatprep.subr.bf16.mxu0 0
            %2750 = vmatpush1.bf16.msra.mxu0 0
            %2751 = vmatprep.subr.bf16.mxu0 0
            %2752 = vmatpush1.bf16.msra.mxu0 0
            %2753 = vmatprep.mubr.bf16.mxu0 0
            %2754 = vmatmul.mubr.bf16.gmra.mrb[0].mxu0 %v2719
            %v2755 = vpop.f32.mrb[0].mxu0
            %v2756 = vadd.f32 %v2704, %v2755
            %v2757 = vpop.f32.mrb[0].mxu0
            %v2758 = vpop.f32.mrb[0].mxu0
            %v2759 = vpop.f32.mrb[0].mxu0
            %2760 = vdwg.mxu0
            %v2761 = vsub.f32 0.0, %v2756
            %v2762 = vmul.f32 %v2761, 1.442695
            %v2763 = vpow.pop %v2762
            %v2764 = vadd.f32 %v2763, 1.0
            %v2765 = vrcp.pop %v2764
            %v2766 = vmul.f32 1.0, %v2765
            %s2767 = smul.u32 %s1563, 8
            %s2768 = scalar_lea.vmem [#allocation42], %s2767
            %2769 = vst [vmem:[%s2768] sm:$0xff] %v2766
          $region226: #{vit_forward.1} parent=219 // pred_fallthru
            _
        $region220: #{vit_forward.1} parent=111 // loop_footer
          %s1567 = sadd.s32 1, %s1563
        $region221: #{vit_forward.1} parent=111 // loop_footer_branch
          %1562 = sbr.rel target = $region217
        $region222: #{vit_forward.1} parent=111 // loop_exit
          _
        // Predicated region
        $region227: #{vit_forward.1} parent=111 // pred_check
          %p2770 = pneg %p637
        $region228: #{vit_forward.1} parent=111 // pred_check_branch
          %2772 = sbr.rel (%p2770) target = $region230
        $region229: #{vit_forward.1} parent=111 // pred_region
          %s2773 = smul.u32 2, %s63
          %s2775 = ssub.s32 256, 256
          %2776 = vsyncadd [#allocation8], %s2775
          %s2777 = smul.addr %s2773, 128
          %s2778 = scalar_lea.hbm %s23, %s2777
          %s2779 = sshll.u32 [#allocation42], 4
          %s2780 = int_to_ptr.vmem [resolvable:$true] %s2779
          %2785 = dma.vmem_to_hbm [thread:$0]  %s2780, 256, %s2778, [#allocation8], 128, 128, 8
        $region230: #{vit_forward.1} parent=111 // pred_fallthru
          _
        // Predicated region
        $region231: #{vit_forward.1} parent=111 // pred_check
          %p2786 = pneg %p637
        $region232: #{vit_forward.1} parent=111 // pred_check_branch
          %2788 = sbr.rel (%p2786) target = $region234
        $region233: #{vit_forward.1} parent=111 // pred_region
          %2789 = dma.done [#allocation8], 256
        $region234: #{vit_forward.1} parent=111 // pred_fallthru
          _
      $region112: #{vit_forward.1} parent=5 // pred_fallthru
        _
      %p2790 = scmp.le.s32.totalorder 2, %s54
      // Predicated region
      $region235: #{vit_forward.1} parent=5 // pred_check
        %p2791 = pneg %p2790
      $region236: #{vit_forward.1} parent=5 // pred_check_branch
        %2793 = sbr.rel (%p2791) target = $region238
      $region237: #{vit_forward.1} parent=5 // pred_region
        %s2794 = ssub.s32 %s54, 2
      $region238: #{vit_forward.1} parent=5 // pred_fallthru
        _
    $region6: #{vit_forward.1} parent=1 // loop_footer
      %s58 = sadd.s32 1, %s54
    $region7: #{vit_forward.1} parent=1 // loop_footer_branch
      %53 = sbr.rel target = $region3
    $region8: #{vit_forward.1} parent=1 // loop_exit
      _
    %2795 = vsyncpa [#allocation7], 1
    %s2796 = scalar_lea.sflag [#allocation7], 1
    %2797 = vsyncpa %s2796, 1
    %2798 = vsyncpa [#allocation10], 1
    %2799 = vsyncpa [#allocation13], 1
    %2800 = vsyncpa [#allocation16], 1
    %2801 = vsyncpa [#allocation19], 1
    %2802 = vsyncpa [#allocation22], 1
    %s2803 = scalar_lea.sflag [#allocation22], 1
    %2804 = vsyncpa %s2803, 1
    %2805 = vsyncpa [#allocation25], 1
    %s2806 = scalar_lea.sflag [#allocation25], 1
    %2807 = vsyncpa %s2806, 1
    %2808 = vsyncpa [#allocation28], 1
    %s2809 = scalar_lea.sflag [#allocation28], 1
    %2810 = vsyncpa %s2809, 1
    %2811 = vsyncpa [#allocation31], 1
    %s2812 = scalar_lea.sflag [#allocation31], 1
    %2813 = vsyncpa %s2812, 1
    %2814 = vsyncpa [#allocation34], 1
    %s2815 = scalar_lea.sflag [#allocation34], 1
    %2816 = vsyncpa %s2815, 1
    %2817 = vsyncpa [#allocation37], 1
    %s2818 = scalar_lea.sflag [#allocation37], 1
    %2819 = vsyncpa %s2818, 1
    %2820 = vsyncpa [#allocation40], 1
    %2821 = vsyncpa [#allocation8], 1
    %s2822 = scalar_lea.sflag [#allocation8], 1
    %2823 = vsyncpa %s2822, 1

</llo_original>
